<compile_context>
chip_gen: v5e
topology: v5e:2x2
jax: 0.10.0
libtpu: 0.0.40
codegen_flags: <defaults>
</compile_context>

<pallas_src>
import functools
import math

import jax
import jax.numpy as jnp
from jax.experimental import pallas as pl
from jax.experimental.pallas import tpu as pltpu


MXU_DTYPE = jnp.bfloat16   # MXU operand dtype; accumulation stays f32.
OUT_LANES = 128            # lane-dense padded output width (col 0 is the result)


def _relu(x):
    return jnp.maximum(x, 0.0)


def _dot(a, b):
    # bf16 MXU matmul with f32 accumulation (operands cast at the matmul only).
    return jnp.dot(a.astype(MXU_DTYPE), b.astype(MXU_DTYPE),
                   preferred_element_type=jnp.float32)


def _mpnn_layer(h, adjT, deg, eproj, w_h, bm, wu2, bu, apply_relu, H):
    """One MPNN layer with algebraically-restructured message aggregation.

      m_sum[j] = sum_i adj[i,j] * (h[i]@wm1 + h[j]@wm2 + e[i,j]@wm3 + bm)
               = (adj^T @ (h@wm1))[j] + deg[j]*(h[j]@wm2 + bm) + e_agg[j]@wm3
      h_out[j] = h[j]@wu1 + m_sum[j]@wu2 + bu

    w_h = [wm1 | wm2 | wu1]  (shared-LHS fusion, [H, 3H]);
    eproj = e_agg @ wm3 (precomputed once, shared across layers).
    """
    p = _dot(h, w_h)                                   # [N, 3H]
    p1, p2, pu = p[:, :H], p[:, H:2 * H], p[:, 2 * H:]
    m = _dot(adjT, p1) + deg * (p2 + bm) + eproj       # [N, H]
    out = pu + _dot(m, wu2) + bu
    return _relu(out) if apply_relu else out


def fused_forward_kernel(
        # per-batch data (one batch element per grid step)
        h_ref, adjt_ref, eagg_ref, fp_ref, bseq_ref, reac_ref, prop_ref,
        # MPNN weights (pre-fused)
        wh1_ref, bm1_ref, wu21_ref, bu1_ref,
        wh2_ref, bm2_ref, wu22_ref, bu2_ref,
        we_ref,
        # head weights
        wfp_ref, bfp_ref, wcx1_ref, wcx2_ref, bcx_ref,
        wbs_ref, bbs_ref, wcb1_ref, wcb2_ref, bcb_ref,
        bng_ref, bnb_ref, bnm_ref, bnv_ref, wp_ref, bp_ref,
        wca1_ref, wca2_ref, wca3_ref, bca_ref,
        wmlp_ref, bmlp_ref, whead_ref, bhead_ref,
        out_ref, *, hid_dim, n_layer, eps):
    H = hid_dim

    h = h_ref[0]          # [N, H]
    adjT = adjt_ref[0]    # [N, N]  (adj transposed in the wrapper)
    eagg = eagg_ref[0]    # [N, H]  (sum_i adj[i,j] * e[i,j,:], hoisted)
    fp = fp_ref[0]        # [1, F]
    bseq = bseq_ref[0]    # [L, F]
    reac = reac_ref[0]    # [L-1, H]
    prop = prop_ref[0]    # [1, 6]

    # --- layer-invariant graph precompute (computed once, reused twice) ---
    deg = jnp.sum(adjT, axis=1, keepdims=True)         # [N, 1], deg[j] = sum_i adj[i,j]
    eproj = _dot(eagg, we_ref[...])                    # [N, 2H], shared-LHS fused wm3's

    # --- two MPNN layers, h stays resident ---
    h1 = _mpnn_layer(h, adjT, deg, eproj[:, :H],
                     wh1_ref[...], bm1_ref[...], wu21_ref[...], bu1_ref[...],
                     apply_relu=True, H=H)             # x_graph_1 + F.relu
    h2 = _mpnn_layer(h1, adjT, deg, eproj[:, H:],
                     wh2_ref[...], bm2_ref[...], wu22_ref[...], bu2_ref[...],
                     apply_relu=False, H=H)            # x_graph_2

    # --- graph readout + fingerprint branch ---
    xg = jnp.sum(h2, axis=0, keepdims=True)            # [1, H]
    xfp = _relu(_dot(fp, wfp_ref[...]) + bfp_ref[...])
    xg = _relu(_dot(xg, wcx1_ref[...]) + _dot(xfp, wcx2_ref[...]) + bcx_ref[...])

    # --- building-block / reaction branch ---
    bs = jnp.sum(_relu(_dot(bseq, wbs_ref[...]) + bbs_ref[...]),
                 axis=0, keepdims=True)                # [1, H]
    rs = jnp.sum(_relu(reac), axis=0, keepdims=True)   # [1, H]
    blk = _relu(_dot(bs, wcb1_ref[...]) + _dot(rs, wcb2_ref[...]) + bcb_ref[...])

    # --- property branch (BatchNorm1d, inference/running-stats mode) ---
    # TODO(synk): training-mode batch statistics of BatchNorm1d not reproduced.
    p = (prop - bnm_ref[...]) * jax.lax.rsqrt(bnv_ref[...] + eps) * bng_ref[...] + bnb_ref[...]
    p = _relu(_dot(p, wp_ref[...]) + bp_ref[...])      # second F.relu in the ref is a no-op

    # --- cat_all + MLP + head ---
    xa = _relu(_dot(xg, wca1_ref[...]) + _dot(blk, wca2_ref[...])
               + _dot(p, wca3_ref[...]) + bca_ref[...])
    for i in range(n_layer):                           # static unroll
        xa = _relu(_dot(xa, wmlp_ref[i]) + bmlp_ref[i])

    # Head: [H,1] matmul done on the VPU (multiply + lane reduce); write a
    # lane-dense 128-wide slab (sliced to column 0 in the wrapper).
    y = jnp.sum(xa * whead_ref[...], axis=-1, keepdims=True) + bhead_ref[...]   # [1, 1]
    out_ref[0] = jnp.broadcast_to(y, (1, OUT_LANES)).astype(out_ref.dtype)


def fused_forward(data, weights, n_layer, hid_dim):
    B = data[0].shape[0]

    def dspec(a):
        nd = a.ndim
        return pl.BlockSpec((1,) + a.shape[1:],
                            lambda b, _nd=nd: (b,) + (0,) * (_nd - 1))

    def wspec(a):
        nd = a.ndim
        return pl.BlockSpec(a.shape, lambda b, _nd=nd: (0,) * _nd)

    kernel = functools.partial(fused_forward_kernel, hid_dim=hid_dim,
                               n_layer=n_layer, eps=1e-5)
    y = pl.pallas_call(
        kernel,
        out_shape=jax.ShapeDtypeStruct((B, 1, OUT_LANES), jnp.float32),
        grid=(B,),
        in_specs=[dspec(a) for a in data] + [wspec(w) for w in weights],
        out_specs=pl.BlockSpec((1, 1, OUT_LANES), lambda b: (b, 0, 0)),
        compiler_params=pltpu.CompilerParams(
            dimension_semantics=("parallel",)),   # batch shards across v7x's 2 TCs
    )(*data, *weights)
    return y[:, 0, 0]


# ----------------------------------------------------------------------------
# Full forward (embedding gathers + layer-invariant edge reduction stay in
# plain JAX as glue; everything else runs in the single fused Pallas kernel).
# ----------------------------------------------------------------------------
def my_model_forward(params, n_layer, x_h, x_adj, x_e, x_fp, block_seq, reac_seq, prop):
    H = params["emb_h"].shape[1]
    h = params["emb_h"][x_h]                       # [B, N, H]
    e = params["emb_e"][x_e]                       # [B, N, N, H]
    reac_emb = params["emb_reac"][reac_seq]        # [B, L-1, H]

    # Layer-invariant adjacency-weighted edge sum, hoisted out of the kernel:
    # identical for both MPNN layers, so the [B,N,N,H] tensor never hits VMEM.
    e_agg = jnp.einsum("bij,bijh->bjh", x_adj, e)  # [B, N, H]
    adj_t = jnp.swapaxes(x_adj, 1, 2)              # adj^T, computed once outside

    data = (h, adj_t, e_agg,
            x_fp[:, None, :],                      # [B, 1, F]
            block_seq, reac_emb,
            prop[:, None, :])                      # [B, 1, 6]
    return fused_forward(data, params["gnn"] + params["head"], n_layer, H)


# ----------------------------------------------------------------------------
# Deterministic parameter initialization (torch-like Linear init), with the
# weight fusions the kernel expects baked in.
# ----------------------------------------------------------------------------
def init_params(key, input_dim, hid_dim, n_layer):
    keys = iter(jax.random.split(key, 64))

    def nk():
        return next(keys)

    def linear(fan_in, fan_out):
        bound = 1.0 / math.sqrt(fan_in)
        w = jax.random.uniform(nk(), (fan_in, fan_out), jnp.float32, -bound, bound)
        b = jax.random.uniform(nk(), (1, fan_out), jnp.float32, -bound, bound)
        return w, b

    H = hid_dim
    emb_h = jax.random.normal(nk(), (130, H), jnp.float32)
    emb_e = jax.random.normal(nk(), (4, H), jnp.float32)
    emb_reac = jax.random.normal(nk(), (5, H), jnp.float32)

    def mpnn():
        wm, bm = linear(3 * H, H)        # make_message, transposed: [3H, H]
        wu, bu = linear(2 * H, H)        # node_update, transposed: [2H, H]
        w_h = jnp.concatenate([wm[:H], wm[H:2 * H], wu[:H]], axis=1)   # [H, 3H]
        return w_h, wm[2 * H:], bm, wu[H:], bu

    wh1, wm3_1, bm1, wu21, bu1 = mpnn()
    wh2, wm3_2, bm2, wu22, bu2 = mpnn()
    w_e = jnp.concatenate([wm3_1, wm3_2], axis=1)                      # [H, 2H]
    gnn = (wh1, bm1, wu21, bu1, wh2, bm2, wu22, bu2, w_e)

    w_fp, b_fp = linear(input_dim, H)
    w_cx, b_cx = linear(2 * H, H)
    w_bs, b_bs = linear(input_dim, H)
    w_cb, b_cb = linear(2 * H, H)
    bn_g = jnp.ones((1, 6), jnp.float32)
    bn_b = jnp.zeros((1, 6), jnp.float32)
    bn_m = jnp.zeros((1, 6), jnp.float32)
    bn_v = jnp.ones((1, 6), jnp.float32)
    w_p, b_p = linear(6, H)
    w_ca, b_ca = linear(3 * H, H)
    w_mlp, b_mlp = [], []
    for _ in range(n_layer):
        w, b = linear(H, H)
        w_mlp.append(w)
        b_mlp.append(b)
    w_mlp = jnp.stack(w_mlp)             # [n_layer, H, H]
    b_mlp = jnp.stack(b_mlp)             # [n_layer, 1, H]
    w_head, b_head = linear(H, 1)
    w_head_row = w_head.T                # [1, H] — consumed by the VPU head reduce

    head = (w_fp, b_fp, w_cx[:H], w_cx[H:], b_cx,
            w_bs, b_bs, w_cb[:H], w_cb[H:], b_cb,
            bn_g, bn_b, bn_m, bn_v, w_p, b_p,
            w_ca[:H], w_ca[H:2 * H], w_ca[2 * H:], b_ca,
            w_mlp, b_mlp, w_head_row, b_head)
    return dict(emb_h=emb_h, emb_e=emb_e, emb_reac=emb_reac, gnn=gnn, head=head)


if __name__ == "__main__":
    B, N, H, F_DIM, L, NLAYER = 2, 8, 32, 32, 8, 2
    key = jax.random.PRNGKey(0)
    kp, k1, k2, k3, k4, k5, k6, k7 = jax.random.split(key, 8)

    params = init_params(kp, F_DIM, H, NLAYER)

    x_h = jax.random.randint(k1, (B, N), 0, 130)                              # node types
    x_adj = (jax.random.uniform(k2, (B, N, N)) < 0.5).astype(jnp.float32)     # adjacency
    x_e = jax.random.randint(k3, (B, N, N), 0, 4)                             # edge types
    x_fp = (jax.random.uniform(k4, (B, F_DIM)) < 0.5).astype(jnp.float32)     # fingerprint
    block_seq = (jax.random.uniform(k5, (B, L, F_DIM)) < 0.5).astype(jnp.float32)
    reac_seq = jax.random.randint(k6, (B, L - 1), 0, 5)
    prop = jax.random.normal(k7, (B, 6), jnp.float32)

    y = my_model_forward(params, NLAYER, x_h, x_adj, x_e, x_fp, block_seq, reac_seq, prop)
    y = jax.block_until_ready(y)
    assert y.shape == (B,) and y.dtype == jnp.float32
    print("KERNEL_OK")
</pallas_src>

<mosaic_0001>
module attributes {stable_mosaic.version = 11 : i64} {
  func.func @fused_forward_kernel(%arg0: i32, %arg1: memref<1x8x32xf32, #tpu.memory_space<vmem>>, %arg2: memref<1x8x8xf32, #tpu.memory_space<vmem>>, %arg3: memref<1x8x32xf32, #tpu.memory_space<vmem>>, %arg4: memref<1x1x32xf32, #tpu.memory_space<vmem>>, %arg5: memref<1x8x32xf32, #tpu.memory_space<vmem>>, %arg6: memref<1x7x32xf32, #tpu.memory_space<vmem>>, %arg7: memref<1x1x6xf32, #tpu.memory_space<vmem>>, %arg8: memref<32x96xf32, #tpu.memory_space<vmem>>, %arg9: memref<1x32xf32, #tpu.memory_space<vmem>>, %arg10: memref<32x32xf32, #tpu.memory_space<vmem>>, %arg11: memref<1x32xf32, #tpu.memory_space<vmem>>, %arg12: memref<32x96xf32, #tpu.memory_space<vmem>>, %arg13: memref<1x32xf32, #tpu.memory_space<vmem>>, %arg14: memref<32x32xf32, #tpu.memory_space<vmem>>, %arg15: memref<1x32xf32, #tpu.memory_space<vmem>>, %arg16: memref<32x64xf32, #tpu.memory_space<vmem>>, %arg17: memref<32x32xf32, #tpu.memory_space<vmem>>, %arg18: memref<1x32xf32, #tpu.memory_space<vmem>>, %arg19: memref<32x32xf32, #tpu.memory_space<vmem>>, %arg20: memref<32x32xf32, #tpu.memory_space<vmem>>, %arg21: memref<1x32xf32, #tpu.memory_space<vmem>>, %arg22: memref<32x32xf32, #tpu.memory_space<vmem>>, %arg23: memref<1x32xf32, #tpu.memory_space<vmem>>, %arg24: memref<32x32xf32, #tpu.memory_space<vmem>>, %arg25: memref<32x32xf32, #tpu.memory_space<vmem>>, %arg26: memref<1x32xf32, #tpu.memory_space<vmem>>, %arg27: memref<1x6xf32, #tpu.memory_space<vmem>>, %arg28: memref<1x6xf32, #tpu.memory_space<vmem>>, %arg29: memref<1x6xf32, #tpu.memory_space<vmem>>, %arg30: memref<1x6xf32, #tpu.memory_space<vmem>>, %arg31: memref<6x32xf32, #tpu.memory_space<vmem>>, %arg32: memref<1x32xf32, #tpu.memory_space<vmem>>, %arg33: memref<32x32xf32, #tpu.memory_space<vmem>>, %arg34: memref<32x32xf32, #tpu.memory_space<vmem>>, %arg35: memref<32x32xf32, #tpu.memory_space<vmem>>, %arg36: memref<1x32xf32, #tpu.memory_space<vmem>>, %arg37: memref<2x32x32xf32, #tpu.memory_space<vmem>>, %arg38: memref<2x1x32xf32, #tpu.memory_space<vmem>>, %arg39: memref<1x32xf32, #tpu.memory_space<vmem>>, %arg40: memref<1x1xf32, #tpu.memory_space<vmem>>, %arg41: memref<1x1x128xf32, #tpu.memory_space<vmem>>) attributes {dimension_semantics = [#tpu.dimension_semantics<parallel>], iteration_bounds = array<i64: 2>, scalar_prefetch = 0 : i64, scratch_operands = 0 : i64, tpu.core_type = #tpu.core_type<tc>, window_params = [{transform_indices = @transform_0, window_bounds = array<i64: 1, 8, 32>}, {transform_indices = @transform_1, window_bounds = array<i64: 1, 8, 8>}, {transform_indices = @transform_2, window_bounds = array<i64: 1, 8, 32>}, {transform_indices = @transform_3, window_bounds = array<i64: 1, 1, 32>}, {transform_indices = @transform_4, window_bounds = array<i64: 1, 8, 32>}, {transform_indices = @transform_5, window_bounds = array<i64: 1, 7, 32>}, {transform_indices = @transform_6, window_bounds = array<i64: 1, 1, 6>}, {pipeline_mode = #tpu.pipeline_mode<synchronous>, transform_indices = @transform_7, window_bounds = array<i64: 32, 96>}, {pipeline_mode = #tpu.pipeline_mode<synchronous>, transform_indices = @transform_8, window_bounds = array<i64: 1, 32>}, {pipeline_mode = #tpu.pipeline_mode<synchronous>, transform_indices = @transform_9, window_bounds = array<i64: 32, 32>}, {pipeline_mode = #tpu.pipeline_mode<synchronous>, transform_indices = @transform_10, window_bounds = array<i64: 1, 32>}, {pipeline_mode = #tpu.pipeline_mode<synchronous>, transform_indices = @transform_11, window_bounds = array<i64: 32, 96>}, {pipeline_mode = #tpu.pipeline_mode<synchronous>, transform_indices = @transform_12, window_bounds = array<i64: 1, 32>}, {pipeline_mode = #tpu.pipeline_mode<synchronous>, transform_indices = @transform_13, window_bounds = array<i64: 32, 32>}, {pipeline_mode = #tpu.pipeline_mode<synchronous>, transform_indices = @transform_14, window_bounds = array<i64: 1, 32>}, {pipeline_mode = #tpu.pipeline_mode<synchronous>, transform_indices = @transform_15, window_bounds = array<i64: 32, 64>}, {pipeline_mode = #tpu.pipeline_mode<synchronous>, transform_indices = @transform_16, window_bounds = array<i64: 32, 32>}, {pipeline_mode = #tpu.pipeline_mode<synchronous>, transform_indices = @transform_17, window_bounds = array<i64: 1, 32>}, {pipeline_mode = #tpu.pipeline_mode<synchronous>, transform_indices = @transform_18, window_bounds = array<i64: 32, 32>}, {pipeline_mode = #tpu.pipeline_mode<synchronous>, transform_indices = @transform_19, window_bounds = array<i64: 32, 32>}, {pipeline_mode = #tpu.pipeline_mode<synchronous>, transform_indices = @transform_20, window_bounds = array<i64: 1, 32>}, {pipeline_mode = #tpu.pipeline_mode<synchronous>, transform_indices = @transform_21, window_bounds = array<i64: 32, 32>}, {pipeline_mode = #tpu.pipeline_mode<synchronous>, transform_indices = @transform_22, window_bounds = array<i64: 1, 32>}, {pipeline_mode = #tpu.pipeline_mode<synchronous>, transform_indices = @transform_23, window_bounds = array<i64: 32, 32>}, {pipeline_mode = #tpu.pipeline_mode<synchronous>, transform_indices = @transform_24, window_bounds = array<i64: 32, 32>}, {pipeline_mode = #tpu.pipeline_mode<synchronous>, transform_indices = @transform_25, window_bounds = array<i64: 1, 32>}, {pipeline_mode = #tpu.pipeline_mode<synchronous>, transform_indices = @transform_26, window_bounds = array<i64: 1, 6>}, {pipeline_mode = #tpu.pipeline_mode<synchronous>, transform_indices = @transform_27, window_bounds = array<i64: 1, 6>}, {pipeline_mode = #tpu.pipeline_mode<synchronous>, transform_indices = @transform_28, window_bounds = array<i64: 1, 6>}, {pipeline_mode = #tpu.pipeline_mode<synchronous>, transform_indices = @transform_29, window_bounds = array<i64: 1, 6>}, {pipeline_mode = #tpu.pipeline_mode<synchronous>, transform_indices = @transform_30, window_bounds = array<i64: 6, 32>}, {pipeline_mode = #tpu.pipeline_mode<synchronous>, transform_indices = @transform_31, window_bounds = array<i64: 1, 32>}, {pipeline_mode = #tpu.pipeline_mode<synchronous>, transform_indices = @transform_32, window_bounds = array<i64: 32, 32>}, {pipeline_mode = #tpu.pipeline_mode<synchronous>, transform_indices = @transform_33, window_bounds = array<i64: 32, 32>}, {pipeline_mode = #tpu.pipeline_mode<synchronous>, transform_indices = @transform_34, window_bounds = array<i64: 32, 32>}, {pipeline_mode = #tpu.pipeline_mode<synchronous>, transform_indices = @transform_35, window_bounds = array<i64: 1, 32>}, {pipeline_mode = #tpu.pipeline_mode<synchronous>, transform_indices = @transform_36, window_bounds = array<i64: 2, 32, 32>}, {pipeline_mode = #tpu.pipeline_mode<synchronous>, transform_indices = @transform_37, window_bounds = array<i64: 2, 1, 32>}, {pipeline_mode = #tpu.pipeline_mode<synchronous>, transform_indices = @transform_38, window_bounds = array<i64: 1, 32>}, {pipeline_mode = #tpu.pipeline_mode<synchronous>, transform_indices = @transform_39, window_bounds = array<i64: 1, 1>}, {transform_indices = @transform_40, window_bounds = array<i64: 1, 1, 128>}]} {
    %c0 = arith.constant 0 : index
    %c0_0 = arith.constant 0 : index
    %c0_1 = arith.constant 0 : index
    %0 = vector.load %arg1[%c0, %c0_0, %c0_1] : memref<1x8x32xf32, #tpu.memory_space<vmem>>, vector<1x8x32xf32>
    %1 = vector.shape_cast %0 : vector<1x8x32xf32> to vector<8x32xf32>
    %c0_2 = arith.constant 0 : index
    %c0_3 = arith.constant 0 : index
    %c0_4 = arith.constant 0 : index
    %2 = vector.load %arg2[%c0_2, %c0_3, %c0_4] : memref<1x8x8xf32, #tpu.memory_space<vmem>>, vector<1x8x8xf32>
    %3 = vector.shape_cast %2 : vector<1x8x8xf32> to vector<8x8xf32>
    %c0_5 = arith.constant 0 : index
    %c0_6 = arith.constant 0 : index
    %c0_7 = arith.constant 0 : index
    %4 = vector.load %arg3[%c0_5, %c0_6, %c0_7] : memref<1x8x32xf32, #tpu.memory_space<vmem>>, vector<1x8x32xf32>
    %5 = vector.shape_cast %4 : vector<1x8x32xf32> to vector<8x32xf32>
    %c0_8 = arith.constant 0 : index
    %c0_9 = arith.constant 0 : index
    %c0_10 = arith.constant 0 : index
    %6 = vector.load %arg4[%c0_8, %c0_9, %c0_10] : memref<1x1x32xf32, #tpu.memory_space<vmem>>, vector<1x1x32xf32>
    %7 = vector.shape_cast %6 : vector<1x1x32xf32> to vector<1x32xf32>
    %c0_11 = arith.constant 0 : index
    %c0_12 = arith.constant 0 : index
    %c0_13 = arith.constant 0 : index
    %8 = vector.load %arg5[%c0_11, %c0_12, %c0_13] : memref<1x8x32xf32, #tpu.memory_space<vmem>>, vector<1x8x32xf32>
    %9 = vector.shape_cast %8 : vector<1x8x32xf32> to vector<8x32xf32>
    %c0_14 = arith.constant 0 : index
    %c0_15 = arith.constant 0 : index
    %c0_16 = arith.constant 0 : index
    %10 = vector.load %arg6[%c0_14, %c0_15, %c0_16] : memref<1x7x32xf32, #tpu.memory_space<vmem>>, vector<1x7x32xf32>
    %11 = vector.shape_cast %10 : vector<1x7x32xf32> to vector<7x32xf32>
    %c0_17 = arith.constant 0 : index
    %c0_18 = arith.constant 0 : index
    %c0_19 = arith.constant 0 : index
    %12 = vector.load %arg7[%c0_17, %c0_18, %c0_19] : memref<1x1x6xf32, #tpu.memory_space<vmem>>, vector<1x1x6xf32>
    %13 = vector.shape_cast %12 : vector<1x1x6xf32> to vector<1x6xf32>
    %cst = arith.constant dense<0.000000e+00> : vector<8xf32>
    %14 = vector.multi_reduction <add>, %3, %cst [1] : vector<8x8xf32> to vector<8xf32>
    %15 = vector.shape_cast %14 : vector<8xf32> to vector<8x1xf32>
    %c0_20 = arith.constant 0 : index
    %c0_21 = arith.constant 0 : index
    %16 = vector.load %arg16[%c0_20, %c0_21] : memref<32x64xf32, #tpu.memory_space<vmem>>, vector<32x64xf32>
    %17 = arith.truncf %5 : vector<8x32xf32> to vector<8x32xbf16>
    %18 = arith.truncf %16 : vector<32x64xf32> to vector<32x64xbf16>
    %cst_22 = arith.constant dense<0.000000e+00> : vector<8x64xf32>
    %19 = tpu.matmul %17, %18, %cst_22 {dimension_numbers = #tpu.dot_dimension_numbers<[1], [0], [0], [1], [0, 0, 1, 1], [], []>} : vector<8x32xbf16>, vector<32x64xbf16>, vector<8x64xf32> -> vector<8x64xf32>
    %20 = vector.extract_strided_slice %19 {offsets = [0, 0], sizes = [8, 32], strides = [1, 1]} : vector<8x64xf32> to vector<8x32xf32>
    %c0_23 = arith.constant 0 : index
    %c0_24 = arith.constant 0 : index
    %21 = vector.load %arg8[%c0_23, %c0_24] : memref<32x96xf32, #tpu.memory_space<vmem>>, vector<32x96xf32>
    %c0_25 = arith.constant 0 : index
    %c0_26 = arith.constant 0 : index
    %22 = vector.load %arg9[%c0_25, %c0_26] : memref<1x32xf32, #tpu.memory_space<vmem>>, vector<1x32xf32>
    %c0_27 = arith.constant 0 : index
    %c0_28 = arith.constant 0 : index
    %23 = vector.load %arg10[%c0_27, %c0_28] : memref<32x32xf32, #tpu.memory_space<vmem>>, vector<32x32xf32>
    %c0_29 = arith.constant 0 : index
    %c0_30 = arith.constant 0 : index
    %24 = vector.load %arg11[%c0_29, %c0_30] : memref<1x32xf32, #tpu.memory_space<vmem>>, vector<1x32xf32>
    %25 = arith.truncf %1 : vector<8x32xf32> to vector<8x32xbf16>
    %26 = arith.truncf %21 : vector<32x96xf32> to vector<32x96xbf16>
    %cst_31 = arith.constant dense<0.000000e+00> : vector<8x96xf32>
    %27 = tpu.matmul %25, %26, %cst_31 {dimension_numbers = #tpu.dot_dimension_numbers<[1], [0], [0], [1], [0, 0, 1, 1], [], []>} : vector<8x32xbf16>, vector<32x96xbf16>, vector<8x96xf32> -> vector<8x96xf32>
    %28 = vector.extract_strided_slice %27 {offsets = [0, 0], sizes = [8, 32], strides = [1, 1]} : vector<8x96xf32> to vector<8x32xf32>
    %29 = vector.extract_strided_slice %27 {offsets = [0, 32], sizes = [8, 32], strides = [1, 1]} : vector<8x96xf32> to vector<8x32xf32>
    %30 = vector.extract_strided_slice %27 {offsets = [0, 64], sizes = [8, 32], strides = [1, 1]} : vector<8x96xf32> to vector<8x32xf32>
    %31 = arith.truncf %3 : vector<8x8xf32> to vector<8x8xbf16>
    %32 = arith.truncf %28 : vector<8x32xf32> to vector<8x32xbf16>
    %cst_32 = arith.constant dense<0.000000e+00> : vector<8x32xf32>
    %33 = tpu.matmul %31, %32, %cst_32 {dimension_numbers = #tpu.dot_dimension_numbers<[1], [0], [0], [1], [0, 0, 1, 1], [], []>} : vector<8x8xbf16>, vector<8x32xbf16>, vector<8x32xf32> -> vector<8x32xf32>
    %34 = vector.broadcast %22 : vector<1x32xf32> to vector<8x32xf32>
    %35 = arith.addf %29, %34 : vector<8x32xf32>
    %36 = vector.broadcast %15 : vector<8x1xf32> to vector<8x32xf32>
    %37 = arith.mulf %36, %35 : vector<8x32xf32>
    %38 = arith.addf %33, %37 : vector<8x32xf32>
    %39 = arith.addf %38, %20 : vector<8x32xf32>
    %40 = arith.truncf %39 : vector<8x32xf32> to vector<8x32xbf16>
    %41 = arith.truncf %23 : vector<32x32xf32> to vector<32x32xbf16>
    %cst_33 = arith.constant dense<0.000000e+00> : vector<8x32xf32>
    %42 = tpu.matmul %40, %41, %cst_33 {dimension_numbers = #tpu.dot_dimension_numbers<[1], [0], [0], [1], [0, 0, 1, 1], [], []>} : vector<8x32xbf16>, vector<32x32xbf16>, vector<8x32xf32> -> vector<8x32xf32>
    %43 = arith.addf %30, %42 : vector<8x32xf32>
    %44 = vector.broadcast %24 : vector<1x32xf32> to vector<8x32xf32>
    %45 = arith.addf %43, %44 : vector<8x32xf32>
    %cst_34 = arith.constant 0.000000e+00 : f32
    %46 = vector.broadcast %cst_34 : f32 to vector<8x32xf32>
    %47 = arith.maximumf %45, %46 : vector<8x32xf32>
    %48 = vector.extract_strided_slice %19 {offsets = [0, 32], sizes = [8, 32], strides = [1, 1]} : vector<8x64xf32> to vector<8x32xf32>
    %c0_35 = arith.constant 0 : index
    %c0_36 = arith.constant 0 : index
    %49 = vector.load %arg12[%c0_35, %c0_36] : memref<32x96xf32, #tpu.memory_space<vmem>>, vector<32x96xf32>
    %c0_37 = arith.constant 0 : index
    %c0_38 = arith.constant 0 : index
    %50 = vector.load %arg13[%c0_37, %c0_38] : memref<1x32xf32, #tpu.memory_space<vmem>>, vector<1x32xf32>
    %c0_39 = arith.constant 0 : index
    %c0_40 = arith.constant 0 : index
    %51 = vector.load %arg14[%c0_39, %c0_40] : memref<32x32xf32, #tpu.memory_space<vmem>>, vector<32x32xf32>
    %c0_41 = arith.constant 0 : index
    %c0_42 = arith.constant 0 : index
    %52 = vector.load %arg15[%c0_41, %c0_42] : memref<1x32xf32, #tpu.memory_space<vmem>>, vector<1x32xf32>
    %53 = arith.truncf %47 : vector<8x32xf32> to vector<8x32xbf16>
    %54 = arith.truncf %49 : vector<32x96xf32> to vector<32x96xbf16>
    %cst_43 = arith.constant dense<0.000000e+00> : vector<8x96xf32>
    %55 = tpu.matmul %53, %54, %cst_43 {dimension_numbers = #tpu.dot_dimension_numbers<[1], [0], [0], [1], [0, 0, 1, 1], [], []>} : vector<8x32xbf16>, vector<32x96xbf16>, vector<8x96xf32> -> vector<8x96xf32>
    %56 = vector.extract_strided_slice %55 {offsets = [0, 0], sizes = [8, 32], strides = [1, 1]} : vector<8x96xf32> to vector<8x32xf32>
    %57 = vector.extract_strided_slice %55 {offsets = [0, 32], sizes = [8, 32], strides = [1, 1]} : vector<8x96xf32> to vector<8x32xf32>
    %58 = vector.extract_strided_slice %55 {offsets = [0, 64], sizes = [8, 32], strides = [1, 1]} : vector<8x96xf32> to vector<8x32xf32>
    %59 = arith.truncf %3 : vector<8x8xf32> to vector<8x8xbf16>
    %60 = arith.truncf %56 : vector<8x32xf32> to vector<8x32xbf16>
    %cst_44 = arith.constant dense<0.000000e+00> : vector<8x32xf32>
    %61 = tpu.matmul %59, %60, %cst_44 {dimension_numbers = #tpu.dot_dimension_numbers<[1], [0], [0], [1], [0, 0, 1, 1], [], []>} : vector<8x8xbf16>, vector<8x32xbf16>, vector<8x32xf32> -> vector<8x32xf32>
    %62 = vector.broadcast %50 : vector<1x32xf32> to vector<8x32xf32>
    %63 = arith.addf %57, %62 : vector<8x32xf32>
    %64 = vector.broadcast %15 : vector<8x1xf32> to vector<8x32xf32>
    %65 = arith.mulf %64, %63 : vector<8x32xf32>
    %66 = arith.addf %61, %65 : vector<8x32xf32>
    %67 = arith.addf %66, %48 : vector<8x32xf32>
    %68 = arith.truncf %67 : vector<8x32xf32> to vector<8x32xbf16>
    %69 = arith.truncf %51 : vector<32x32xf32> to vector<32x32xbf16>
    %cst_45 = arith.constant dense<0.000000e+00> : vector<8x32xf32>
    %70 = tpu.matmul %68, %69, %cst_45 {dimension_numbers = #tpu.dot_dimension_numbers<[1], [0], [0], [1], [0, 0, 1, 1], [], []>} : vector<8x32xbf16>, vector<32x32xbf16>, vector<8x32xf32> -> vector<8x32xf32>
    %71 = arith.addf %58, %70 : vector<8x32xf32>
    %72 = vector.broadcast %52 : vector<1x32xf32> to vector<8x32xf32>
    %73 = arith.addf %71, %72 : vector<8x32xf32>
    %cst_46 = arith.constant dense<0.000000e+00> : vector<32xf32>
    %74 = vector.multi_reduction <add>, %73, %cst_46 [0] : vector<8x32xf32> to vector<32xf32>
    %75 = vector.shape_cast %74 : vector<32xf32> to vector<1x32xf32>
    %c0_47 = arith.constant 0 : index
    %c0_48 = arith.constant 0 : index
    %76 = vector.load %arg17[%c0_47, %c0_48] : memref<32x32xf32, #tpu.memory_space<vmem>>, vector<32x32xf32>
    %77 = arith.truncf %7 : vector<1x32xf32> to vector<1x32xbf16>
    %78 = arith.truncf %76 : vector<32x32xf32> to vector<32x32xbf16>
    %cst_49 = arith.constant dense<0.000000e+00> : vector<1x32xf32>
    %79 = tpu.matmul %77, %78, %cst_49 {dimension_numbers = #tpu.dot_dimension_numbers<[1], [0], [0], [1], [0, 0, 1, 1], [], []>} : vector<1x32xbf16>, vector<32x32xbf16>, vector<1x32xf32> -> vector<1x32xf32>
    %c0_50 = arith.constant 0 : index
    %c0_51 = arith.constant 0 : index
    %80 = vector.load %arg18[%c0_50, %c0_51] : memref<1x32xf32, #tpu.memory_space<vmem>>, vector<1x32xf32>
    %81 = arith.addf %79, %80 : vector<1x32xf32>
    %cst_52 = arith.constant 0.000000e+00 : f32
    %82 = vector.broadcast %cst_52 : f32 to vector<1x32xf32>
    %83 = arith.maximumf %81, %82 : vector<1x32xf32>
    %c0_53 = arith.constant 0 : index
    %c0_54 = arith.constant 0 : index
    %84 = vector.load %arg19[%c0_53, %c0_54] : memref<32x32xf32, #tpu.memory_space<vmem>>, vector<32x32xf32>
    %85 = arith.truncf %75 : vector<1x32xf32> to vector<1x32xbf16>
    %86 = arith.truncf %84 : vector<32x32xf32> to vector<32x32xbf16>
    %cst_55 = arith.constant dense<0.000000e+00> : vector<1x32xf32>
    %87 = tpu.matmul %85, %86, %cst_55 {dimension_numbers = #tpu.dot_dimension_numbers<[1], [0], [0], [1], [0, 0, 1, 1], [], []>} : vector<1x32xbf16>, vector<32x32xbf16>, vector<1x32xf32> -> vector<1x32xf32>
    %c0_56 = arith.constant 0 : index
    %c0_57 = arith.constant 0 : index
    %88 = vector.load %arg20[%c0_56, %c0_57] : memref<32x32xf32, #tpu.memory_space<vmem>>, vector<32x32xf32>
    %89 = arith.truncf %83 : vector<1x32xf32> to vector<1x32xbf16>
    %90 = arith.truncf %88 : vector<32x32xf32> to vector<32x32xbf16>
    %cst_58 = arith.constant dense<0.000000e+00> : vector<1x32xf32>
    %91 = tpu.matmul %89, %90, %cst_58 {dimension_numbers = #tpu.dot_dimension_numbers<[1], [0], [0], [1], [0, 0, 1, 1], [], []>} : vector<1x32xbf16>, vector<32x32xbf16>, vector<1x32xf32> -> vector<1x32xf32>
    %92 = arith.addf %87, %91 : vector<1x32xf32>
    %c0_59 = arith.constant 0 : index
    %c0_60 = arith.constant 0 : index
    %93 = vector.load %arg21[%c0_59, %c0_60] : memref<1x32xf32, #tpu.memory_space<vmem>>, vector<1x32xf32>
    %94 = arith.addf %92, %93 : vector<1x32xf32>
    %cst_61 = arith.constant 0.000000e+00 : f32
    %95 = vector.broadcast %cst_61 : f32 to vector<1x32xf32>
    %96 = arith.maximumf %94, %95 : vector<1x32xf32>
    %c0_62 = arith.constant 0 : index
    %c0_63 = arith.constant 0 : index
    %97 = vector.load %arg22[%c0_62, %c0_63] : memref<32x32xf32, #tpu.memory_space<vmem>>, vector<32x32xf32>
    %98 = arith.truncf %9 : vector<8x32xf32> to vector<8x32xbf16>
    %99 = arith.truncf %97 : vector<32x32xf32> to vector<32x32xbf16>
    %cst_64 = arith.constant dense<0.000000e+00> : vector<8x32xf32>
    %100 = tpu.matmul %98, %99, %cst_64 {dimension_numbers = #tpu.dot_dimension_numbers<[1], [0], [0], [1], [0, 0, 1, 1], [], []>} : vector<8x32xbf16>, vector<32x32xbf16>, vector<8x32xf32> -> vector<8x32xf32>
    %c0_65 = arith.constant 0 : index
    %c0_66 = arith.constant 0 : index
    %101 = vector.load %arg23[%c0_65, %c0_66] : memref<1x32xf32, #tpu.memory_space<vmem>>, vector<1x32xf32>
    %102 = vector.broadcast %101 : vector<1x32xf32> to vector<8x32xf32>
    %103 = arith.addf %100, %102 : vector<8x32xf32>
    %cst_67 = arith.constant 0.000000e+00 : f32
    %104 = vector.broadcast %cst_67 : f32 to vector<8x32xf32>
    %105 = arith.maximumf %103, %104 : vector<8x32xf32>
    %cst_68 = arith.constant dense<0.000000e+00> : vector<32xf32>
    %106 = vector.multi_reduction <add>, %105, %cst_68 [0] : vector<8x32xf32> to vector<32xf32>
    %107 = vector.shape_cast %106 : vector<32xf32> to vector<1x32xf32>
    %cst_69 = arith.constant 0.000000e+00 : f32
    %108 = vector.broadcast %cst_69 : f32 to vector<7x32xf32>
    %109 = arith.maximumf %11, %108 : vector<7x32xf32>
    %cst_70 = arith.constant dense<0.000000e+00> : vector<32xf32>
    %110 = vector.multi_reduction <add>, %109, %cst_70 [0] : vector<7x32xf32> to vector<32xf32>
    %111 = vector.shape_cast %110 : vector<32xf32> to vector<1x32xf32>
    %c0_71 = arith.constant 0 : index
    %c0_72 = arith.constant 0 : index
    %112 = vector.load %arg24[%c0_71, %c0_72] : memref<32x32xf32, #tpu.memory_space<vmem>>, vector<32x32xf32>
    %113 = arith.truncf %107 : vector<1x32xf32> to vector<1x32xbf16>
    %114 = arith.truncf %112 : vector<32x32xf32> to vector<32x32xbf16>
    %cst_73 = arith.constant dense<0.000000e+00> : vector<1x32xf32>
    %115 = tpu.matmul %113, %114, %cst_73 {dimension_numbers = #tpu.dot_dimension_numbers<[1], [0], [0], [1], [0, 0, 1, 1], [], []>} : vector<1x32xbf16>, vector<32x32xbf16>, vector<1x32xf32> -> vector<1x32xf32>
    %c0_74 = arith.constant 0 : index
    %c0_75 = arith.constant 0 : index
    %116 = vector.load %arg25[%c0_74, %c0_75] : memref<32x32xf32, #tpu.memory_space<vmem>>, vector<32x32xf32>
    %117 = arith.truncf %111 : vector<1x32xf32> to vector<1x32xbf16>
    %118 = arith.truncf %116 : vector<32x32xf32> to vector<32x32xbf16>
    %cst_76 = arith.constant dense<0.000000e+00> : vector<1x32xf32>
    %119 = tpu.matmul %117, %118, %cst_76 {dimension_numbers = #tpu.dot_dimension_numbers<[1], [0], [0], [1], [0, 0, 1, 1], [], []>} : vector<1x32xbf16>, vector<32x32xbf16>, vector<1x32xf32> -> vector<1x32xf32>
    %120 = arith.addf %115, %119 : vector<1x32xf32>
    %c0_77 = arith.constant 0 : index
    %c0_78 = arith.constant 0 : index
    %121 = vector.load %arg26[%c0_77, %c0_78] : memref<1x32xf32, #tpu.memory_space<vmem>>, vector<1x32xf32>
    %122 = arith.addf %120, %121 : vector<1x32xf32>
    %cst_79 = arith.constant 0.000000e+00 : f32
    %123 = vector.broadcast %cst_79 : f32 to vector<1x32xf32>
    %124 = arith.maximumf %122, %123 : vector<1x32xf32>
    %c0_80 = arith.constant 0 : index
    %c0_81 = arith.constant 0 : index
    %125 = vector.load %arg29[%c0_80, %c0_81] : memref<1x6xf32, #tpu.memory_space<vmem>>, vector<1x6xf32>
    %126 = arith.subf %13, %125 : vector<1x6xf32>
    %c0_82 = arith.constant 0 : index
    %c0_83 = arith.constant 0 : index
    %127 = vector.load %arg30[%c0_82, %c0_83] : memref<1x6xf32, #tpu.memory_space<vmem>>, vector<1x6xf32>
    %cst_84 = arith.constant 9.99999974E-6 : f32
    %128 = vector.broadcast %cst_84 : f32 to vector<1x6xf32>
    %129 = arith.addf %127, %128 : vector<1x6xf32>
    %130 = math.rsqrt %129 : vector<1x6xf32>
    %131 = arith.mulf %126, %130 : vector<1x6xf32>
    %c0_85 = arith.constant 0 : index
    %c0_86 = arith.constant 0 : index
    %132 = vector.load %arg27[%c0_85, %c0_86] : memref<1x6xf32, #tpu.memory_space<vmem>>, vector<1x6xf32>
    %133 = arith.mulf %131, %132 : vector<1x6xf32>
    %c0_87 = arith.constant 0 : index
    %c0_88 = arith.constant 0 : index
    %134 = vector.load %arg28[%c0_87, %c0_88] : memref<1x6xf32, #tpu.memory_space<vmem>>, vector<1x6xf32>
    %135 = arith.addf %133, %134 : vector<1x6xf32>
    %c0_89 = arith.constant 0 : index
    %c0_90 = arith.constant 0 : index
    %136 = vector.load %arg31[%c0_89, %c0_90] : memref<6x32xf32, #tpu.memory_space<vmem>>, vector<6x32xf32>
    %137 = arith.truncf %135 : vector<1x6xf32> to vector<1x6xbf16>
    %138 = arith.truncf %136 : vector<6x32xf32> to vector<6x32xbf16>
    %cst_91 = arith.constant dense<0.000000e+00> : vector<1x32xf32>
    %139 = tpu.matmul %137, %138, %cst_91 {dimension_numbers = #tpu.dot_dimension_numbers<[1], [0], [0], [1], [0, 0, 1, 1], [], []>} : vector<1x6xbf16>, vector<6x32xbf16>, vector<1x32xf32> -> vector<1x32xf32>
    %c0_92 = arith.constant 0 : index
    %c0_93 = arith.constant 0 : index
    %140 = vector.load %arg32[%c0_92, %c0_93] : memref<1x32xf32, #tpu.memory_space<vmem>>, vector<1x32xf32>
    %141 = arith.addf %139, %140 : vector<1x32xf32>
    %cst_94 = arith.constant 0.000000e+00 : f32
    %142 = vector.broadcast %cst_94 : f32 to vector<1x32xf32>
    %143 = arith.maximumf %141, %142 : vector<1x32xf32>
    %c0_95 = arith.constant 0 : index
    %c0_96 = arith.constant 0 : index
    %144 = vector.load %arg33[%c0_95, %c0_96] : memref<32x32xf32, #tpu.memory_space<vmem>>, vector<32x32xf32>
    %145 = arith.truncf %96 : vector<1x32xf32> to vector<1x32xbf16>
    %146 = arith.truncf %144 : vector<32x32xf32> to vector<32x32xbf16>
    %cst_97 = arith.constant dense<0.000000e+00> : vector<1x32xf32>
    %147 = tpu.matmul %145, %146, %cst_97 {dimension_numbers = #tpu.dot_dimension_numbers<[1], [0], [0], [1], [0, 0, 1, 1], [], []>} : vector<1x32xbf16>, vector<32x32xbf16>, vector<1x32xf32> -> vector<1x32xf32>
    %c0_98 = arith.constant 0 : index
    %c0_99 = arith.constant 0 : index
    %148 = vector.load %arg34[%c0_98, %c0_99] : memref<32x32xf32, #tpu.memory_space<vmem>>, vector<32x32xf32>
    %149 = arith.truncf %124 : vector<1x32xf32> to vector<1x32xbf16>
    %150 = arith.truncf %148 : vector<32x32xf32> to vector<32x32xbf16>
    %cst_100 = arith.constant dense<0.000000e+00> : vector<1x32xf32>
    %151 = tpu.matmul %149, %150, %cst_100 {dimension_numbers = #tpu.dot_dimension_numbers<[1], [0], [0], [1], [0, 0, 1, 1], [], []>} : vector<1x32xbf16>, vector<32x32xbf16>, vector<1x32xf32> -> vector<1x32xf32>
    %152 = arith.addf %147, %151 : vector<1x32xf32>
    %c0_101 = arith.constant 0 : index
    %c0_102 = arith.constant 0 : index
    %153 = vector.load %arg35[%c0_101, %c0_102] : memref<32x32xf32, #tpu.memory_space<vmem>>, vector<32x32xf32>
    %154 = arith.truncf %143 : vector<1x32xf32> to vector<1x32xbf16>
    %155 = arith.truncf %153 : vector<32x32xf32> to vector<32x32xbf16>
    %cst_103 = arith.constant dense<0.000000e+00> : vector<1x32xf32>
    %156 = tpu.matmul %154, %155, %cst_103 {dimension_numbers = #tpu.dot_dimension_numbers<[1], [0], [0], [1], [0, 0, 1, 1], [], []>} : vector<1x32xbf16>, vector<32x32xbf16>, vector<1x32xf32> -> vector<1x32xf32>
    %157 = arith.addf %152, %156 : vector<1x32xf32>
    %c0_104 = arith.constant 0 : index
    %c0_105 = arith.constant 0 : index
    %158 = vector.load %arg36[%c0_104, %c0_105] : memref<1x32xf32, #tpu.memory_space<vmem>>, vector<1x32xf32>
    %159 = arith.addf %157, %158 : vector<1x32xf32>
    %cst_106 = arith.constant 0.000000e+00 : f32
    %160 = vector.broadcast %cst_106 : f32 to vector<1x32xf32>
    %161 = arith.maximumf %159, %160 : vector<1x32xf32>
    %c0_107 = arith.constant 0 : index
    %c0_108 = arith.constant 0 : index
    %c0_109 = arith.constant 0 : index
    %162 = vector.load %arg37[%c0_107, %c0_108, %c0_109] : memref<2x32x32xf32, #tpu.memory_space<vmem>>, vector<1x32x32xf32>
    %163 = vector.shape_cast %162 : vector<1x32x32xf32> to vector<32x32xf32>
    %164 = arith.truncf %161 : vector<1x32xf32> to vector<1x32xbf16>
    %165 = arith.truncf %163 : vector<32x32xf32> to vector<32x32xbf16>
    %cst_110 = arith.constant dense<0.000000e+00> : vector<1x32xf32>
    %166 = tpu.matmul %164, %165, %cst_110 {dimension_numbers = #tpu.dot_dimension_numbers<[1], [0], [0], [1], [0, 0, 1, 1], [], []>} : vector<1x32xbf16>, vector<32x32xbf16>, vector<1x32xf32> -> vector<1x32xf32>
    %c0_111 = arith.constant 0 : index
    %c0_112 = arith.constant 0 : index
    %c0_113 = arith.constant 0 : index
    %167 = vector.load %arg38[%c0_111, %c0_112, %c0_113] : memref<2x1x32xf32, #tpu.memory_space<vmem>>, vector<1x1x32xf32>
    %168 = vector.shape_cast %167 : vector<1x1x32xf32> to vector<1x32xf32>
    %169 = arith.addf %166, %168 : vector<1x32xf32>
    %cst_114 = arith.constant 0.000000e+00 : f32
    %170 = vector.broadcast %cst_114 : f32 to vector<1x32xf32>
    %171 = arith.maximumf %169, %170 : vector<1x32xf32>
    %c1 = arith.constant 1 : index
    %c0_115 = arith.constant 0 : index
    %c0_116 = arith.constant 0 : index
    %172 = vector.load %arg37[%c1, %c0_115, %c0_116] : memref<2x32x32xf32, #tpu.memory_space<vmem>>, vector<1x32x32xf32>
    %173 = vector.shape_cast %172 : vector<1x32x32xf32> to vector<32x32xf32>
    %174 = arith.truncf %171 : vector<1x32xf32> to vector<1x32xbf16>
    %175 = arith.truncf %173 : vector<32x32xf32> to vector<32x32xbf16>
    %cst_117 = arith.constant dense<0.000000e+00> : vector<1x32xf32>
    %176 = tpu.matmul %174, %175, %cst_117 {dimension_numbers = #tpu.dot_dimension_numbers<[1], [0], [0], [1], [0, 0, 1, 1], [], []>} : vector<1x32xbf16>, vector<32x32xbf16>, vector<1x32xf32> -> vector<1x32xf32>
    %c1_118 = arith.constant 1 : index
    %c0_119 = arith.constant 0 : index
    %c0_120 = arith.constant 0 : index
    %177 = vector.load %arg38[%c1_118, %c0_119, %c0_120] : memref<2x1x32xf32, #tpu.memory_space<vmem>>, vector<1x1x32xf32>
    %178 = vector.shape_cast %177 : vector<1x1x32xf32> to vector<1x32xf32>
    %179 = arith.addf %176, %178 : vector<1x32xf32>
    %cst_121 = arith.constant 0.000000e+00 : f32
    %180 = vector.broadcast %cst_121 : f32 to vector<1x32xf32>
    %181 = arith.maximumf %179, %180 : vector<1x32xf32>
    %c0_122 = arith.constant 0 : index
    %c0_123 = arith.constant 0 : index
    %182 = vector.load %arg39[%c0_122, %c0_123] : memref<1x32xf32, #tpu.memory_space<vmem>>, vector<1x32xf32>
    %183 = arith.mulf %181, %182 : vector<1x32xf32>
    %cst_124 = arith.constant dense<0.000000e+00> : vector<1xf32>
    %184 = vector.multi_reduction <add>, %183, %cst_124 [1] : vector<1x32xf32> to vector<1xf32>
    %185 = vector.shape_cast %184 : vector<1xf32> to vector<1x1xf32>
    %c0_125 = arith.constant 0 : index
    %c0_126 = arith.constant 0 : index
    %186 = vector.load %arg40[%c0_125, %c0_126] : memref<1x1xf32, #tpu.memory_space<vmem>>, vector<1x1xf32>
    %187 = arith.addf %185, %186 : vector<1x1xf32>
    %188 = vector.shape_cast %187 : vector<1x1xf32> to vector<1x1xf32>
    %189 = vector.broadcast %188 : vector<1x1xf32> to vector<1x128xf32>
    %c0_127 = arith.constant 0 : index
    %c0_128 = arith.constant 0 : index
    %c0_129 = arith.constant 0 : index
    %190 = vector.load %arg41[%c0_127, %c0_128, %c0_129] : memref<1x1x128xf32, #tpu.memory_space<vmem>>, vector<1x1x128xf32>
    %191 = vector.shape_cast %190 : vector<1x1x128xf32> to vector<1x128xf32>
    %192 = vector.shape_cast %189 : vector<1x128xf32> to vector<1x1x128xf32>
    tpu.vector_store %arg41[%c0_127, %c0_128, %c0_129], %192 {strides = array<i32>} : memref<1x1x128xf32, #tpu.memory_space<vmem>>, vector<1x1x128xf32>,
    return
  }
  func.func @transform_0(%arg0: i32) -> (i32, i32, i32) {
    %c0_i32 = arith.constant 0 : i32
    %c0_i32_0 = arith.constant 0 : i32
    %c0_i32_1 = arith.constant 0 : i32
    return %arg0, %c0_i32, %c0_i32_0 : i32, i32, i32
  }
  func.func @transform_1(%arg0: i32) -> (i32, i32, i32) {
    %c0_i32 = arith.constant 0 : i32
    %c0_i32_0 = arith.constant 0 : i32
    %c0_i32_1 = arith.constant 0 : i32
    return %arg0, %c0_i32, %c0_i32_0 : i32, i32, i32
  }
  func.func @transform_2(%arg0: i32) -> (i32, i32, i32) {
    %c0_i32 = arith.constant 0 : i32
    %c0_i32_0 = arith.constant 0 : i32
    %c0_i32_1 = arith.constant 0 : i32
    return %arg0, %c0_i32, %c0_i32_0 : i32, i32, i32
  }
  func.func @transform_3(%arg0: i32) -> (i32, i32, i32) {
    %c0_i32 = arith.constant 0 : i32
    %c0_i32_0 = arith.constant 0 : i32
    %c0_i32_1 = arith.constant 0 : i32
    return %arg0, %c0_i32, %c0_i32_0 : i32, i32, i32
  }
  func.func @transform_4(%arg0: i32) -> (i32, i32, i32) {
    %c0_i32 = arith.constant 0 : i32
    %c0_i32_0 = arith.constant 0 : i32
    %c0_i32_1 = arith.constant 0 : i32
    return %arg0, %c0_i32, %c0_i32_0 : i32, i32, i32
  }
  func.func @transform_5(%arg0: i32) -> (i32, i32, i32) {
    %c0_i32 = arith.constant 0 : i32
    %c0_i32_0 = arith.constant 0 : i32
    %c0_i32_1 = arith.constant 0 : i32
    return %arg0, %c0_i32, %c0_i32_0 : i32, i32, i32
  }
  func.func @transform_6(%arg0: i32) -> (i32, i32, i32) {
    %c0_i32 = arith.constant 0 : i32
    %c0_i32_0 = arith.constant 0 : i32
    %c0_i32_1 = arith.constant 0 : i32
    return %arg0, %c0_i32, %c0_i32_0 : i32, i32, i32
  }
  func.func @transform_7(%arg0: i32) -> (i32, i32) {
    %c0_i32 = arith.constant 0 : i32
    %c0_i32_0 = arith.constant 0 : i32
    %c0_i32_1 = arith.constant 0 : i32
    return %c0_i32, %c0_i32_0 : i32, i32
  }
  func.func @transform_8(%arg0: i32) -> (i32, i32) {
    %c0_i32 = arith.constant 0 : i32
    %c0_i32_0 = arith.constant 0 : i32
    %c0_i32_1 = arith.constant 0 : i32
    return %c0_i32, %c0_i32_0 : i32, i32
  }
  func.func @transform_9(%arg0: i32) -> (i32, i32) {
    %c0_i32 = arith.constant 0 : i32
    %c0_i32_0 = arith.constant 0 : i32
    %c0_i32_1 = arith.constant 0 : i32
    return %c0_i32, %c0_i32_0 : i32, i32
  }
  func.func @transform_10(%arg0: i32) -> (i32, i32) {
    %c0_i32 = arith.constant 0 : i32
    %c0_i32_0 = arith.constant 0 : i32
    %c0_i32_1 = arith.constant 0 : i32
    return %c0_i32, %c0_i32_0 : i32, i32
  }
  func.func @transform_11(%arg0: i32) -> (i32, i32) {
    %c0_i32 = arith.constant 0 : i32
    %c0_i32_0 = arith.constant 0 : i32
    %c0_i32_1 = arith.constant 0 : i32
    return %c0_i32, %c0_i32_0 : i32, i32
  }
  func.func @transform_12(%arg0: i32) -> (i32, i32) {
    %c0_i32 = arith.constant 0 : i32
    %c0_i32_0 = arith.constant 0 : i32
    %c0_i32_1 = arith.constant 0 : i32
    return %c0_i32, %c0_i32_0 : i32, i32
  }
  func.func @transform_13(%arg0: i32) -> (i32, i32) {
    %c0_i32 = arith.constant 0 : i32
    %c0_i32_0 = arith.constant 0 : i32
    %c0_i32_1 = arith.constant 0 : i32
    return %c0_i32, %c0_i32_0 : i32, i32
  }
  func.func @transform_14(%arg0: i32) -> (i32, i32) {
    %c0_i32 = arith.constant 0 : i32
    %c0_i32_0 = arith.constant 0 : i32
    %c0_i32_1 = arith.constant 0 : i32
    return %c0_i32, %c0_i32_0 : i32, i32
  }
  func.func @transform_15(%arg0: i32) -> (i32, i32) {
    %c0_i32 = arith.constant 0 : i32
    %c0_i32_0 = arith.constant 0 : i32
    %c0_i32_1 = arith.constant 0 : i32
    return %c0_i32, %c0_i32_0 : i32, i32
  }
  func.func @transform_16(%arg0: i32) -> (i32, i32) {
    %c0_i32 = arith.constant 0 : i32
    %c0_i32_0 = arith.constant 0 : i32
    %c0_i32_1 = arith.constant 0 : i32
    return %c0_i32, %c0_i32_0 : i32, i32
  }
  func.func @transform_17(%arg0: i32) -> (i32, i32) {
    %c0_i32 = arith.constant 0 : i32
    %c0_i32_0 = arith.constant 0 : i32
    %c0_i32_1 = arith.constant 0 : i32
    return %c0_i32, %c0_i32_0 : i32, i32
  }
  func.func @transform_18(%arg0: i32) -> (i32, i32) {
    %c0_i32 = arith.constant 0 : i32
    %c0_i32_0 = arith.constant 0 : i32
    %c0_i32_1 = arith.constant 0 : i32
    return %c0_i32, %c0_i32_0 : i32, i32
  }
  func.func @transform_19(%arg0: i32) -> (i32, i32) {
    %c0_i32 = arith.constant 0 : i32
    %c0_i32_0 = arith.constant 0 : i32
    %c0_i32_1 = arith.constant 0 : i32
    return %c0_i32, %c0_i32_0 : i32, i32
  }
  func.func @transform_20(%arg0: i32) -> (i32, i32) {
    %c0_i32 = arith.constant 0 : i32
    %c0_i32_0 = arith.constant 0 : i32
    %c0_i32_1 = arith.constant 0 : i32
    return %c0_i32, %c0_i32_0 : i32, i32
  }
  func.func @transform_21(%arg0: i32) -> (i32, i32) {
    %c0_i32 = arith.constant 0 : i32
    %c0_i32_0 = arith.constant 0 : i32
    %c0_i32_1 = arith.constant 0 : i32
    return %c0_i32, %c0_i32_0 : i32, i32
  }
  func.func @transform_22(%arg0: i32) -> (i32, i32) {
    %c0_i32 = arith.constant 0 : i32
    %c0_i32_0 = arith.constant 0 : i32
    %c0_i32_1 = arith.constant 0 : i32
    return %c0_i32, %c0_i32_0 : i32, i32
  }
  func.func @transform_23(%arg0: i32) -> (i32, i32) {
    %c0_i32 = arith.constant 0 : i32
    %c0_i32_0 = arith.constant 0 : i32
    %c0_i32_1 = arith.constant 0 : i32
    return %c0_i32, %c0_i32_0 : i32, i32
  }
  func.func @transform_24(%arg0: i32) -> (i32, i32) {
    %c0_i32 = arith.constant 0 : i32
    %c0_i32_0 = arith.constant 0 : i32
    %c0_i32_1 = arith.constant 0 : i32
    return %c0_i32, %c0_i32_0 : i32, i32
  }
  func.func @transform_25(%arg0: i32) -> (i32, i32) {
    %c0_i32 = arith.constant 0 : i32
    %c0_i32_0 = arith.constant 0 : i32
    %c0_i32_1 = arith.constant 0 : i32
    return %c0_i32, %c0_i32_0 : i32, i32
  }
  func.func @transform_26(%arg0: i32) -> (i32, i32) {
    %c0_i32 = arith.constant 0 : i32
    %c0_i32_0 = arith.constant 0 : i32
    %c0_i32_1 = arith.constant 0 : i32
    return %c0_i32, %c0_i32_0 : i32, i32
  }
  func.func @transform_27(%arg0: i32) -> (i32, i32) {
    %c0_i32 = arith.constant 0 : i32
    %c0_i32_0 = arith.constant 0 : i32
    %c0_i32_1 = arith.constant 0 : i32
    return %c0_i32, %c0_i32_0 : i32, i32
  }
  func.func @transform_28(%arg0: i32) -> (i32, i32) {
    %c0_i32 = arith.constant 0 : i32
    %c0_i32_0 = arith.constant 0 : i32
    %c0_i32_1 = arith.constant 0 : i32
    return %c0_i32, %c0_i32_0 : i32, i32
  }
  func.func @transform_29(%arg0: i32) -> (i32, i32) {
    %c0_i32 = arith.constant 0 : i32
    %c0_i32_0 = arith.constant 0 : i32
    %c0_i32_1 = arith.constant 0 : i32
    return %c0_i32, %c0_i32_0 : i32, i32
  }
  func.func @transform_30(%arg0: i32) -> (i32, i32) {
    %c0_i32 = arith.constant 0 : i32
    %c0_i32_0 = arith.constant 0 : i32
    %c0_i32_1 = arith.constant 0 : i32
    return %c0_i32, %c0_i32_0 : i32, i32
  }
  func.func @transform_31(%arg0: i32) -> (i32, i32) {
    %c0_i32 = arith.constant 0 : i32
    %c0_i32_0 = arith.constant 0 : i32
    %c0_i32_1 = arith.constant 0 : i32
    return %c0_i32, %c0_i32_0 : i32, i32
  }
  func.func @transform_32(%arg0: i32) -> (i32, i32) {
    %c0_i32 = arith.constant 0 : i32
    %c0_i32_0 = arith.constant 0 : i32
    %c0_i32_1 = arith.constant 0 : i32
    return %c0_i32, %c0_i32_0 : i32, i32
  }
  func.func @transform_33(%arg0: i32) -> (i32, i32) {
    %c0_i32 = arith.constant 0 : i32
    %c0_i32_0 = arith.constant 0 : i32
    %c0_i32_1 = arith.constant 0 : i32
    return %c0_i32, %c0_i32_0 : i32, i32
  }
  func.func @transform_34(%arg0: i32) -> (i32, i32) {
    %c0_i32 = arith.constant 0 : i32
    %c0_i32_0 = arith.constant 0 : i32
    %c0_i32_1 = arith.constant 0 : i32
    return %c0_i32, %c0_i32_0 : i32, i32
  }
  func.func @transform_35(%arg0: i32) -> (i32, i32) {
    %c0_i32 = arith.constant 0 : i32
    %c0_i32_0 = arith.constant 0 : i32
    %c0_i32_1 = arith.constant 0 : i32
    return %c0_i32, %c0_i32_0 : i32, i32
  }
  func.func @transform_36(%arg0: i32) -> (i32, i32, i32) {
    %c0_i32 = arith.constant 0 : i32
    %c0_i32_0 = arith.constant 0 : i32
    %c0_i32_1 = arith.constant 0 : i32
    %c0_i32_2 = arith.constant 0 : i32
    return %c0_i32, %c0_i32_0, %c0_i32_1 : i32, i32, i32
  }
  func.func @transform_37(%arg0: i32) -> (i32, i32, i32) {
    %c0_i32 = arith.constant 0 : i32
    %c0_i32_0 = arith.constant 0 : i32
    %c0_i32_1 = arith.constant 0 : i32
    %c0_i32_2 = arith.constant 0 : i32
    return %c0_i32, %c0_i32_0, %c0_i32_1 : i32, i32, i32
  }
  func.func @transform_38(%arg0: i32) -> (i32, i32) {
    %c0_i32 = arith.constant 0 : i32
    %c0_i32_0 = arith.constant 0 : i32
    %c0_i32_1 = arith.constant 0 : i32
    return %c0_i32, %c0_i32_0 : i32, i32
  }
  func.func @transform_39(%arg0: i32) -> (i32, i32) {
    %c0_i32 = arith.constant 0 : i32
    %c0_i32_0 = arith.constant 0 : i32
    %c0_i32_1 = arith.constant 0 : i32
    return %c0_i32, %c0_i32_0 : i32, i32
  }
  func.func @transform_40(%arg0: i32) -> (i32, i32, i32) {
    %c0_i32 = arith.constant 0 : i32
    %c0_i32_0 = arith.constant 0 : i32
    %c0_i32_1 = arith.constant 0 : i32
    return %arg0, %c0_i32, %c0_i32_0 : i32, i32, i32
  }
}

</mosaic_0001>

<llo_original>
// kernel: tpu_custom_call.1
$region0: #{tpu_custom_call.1}
  #allocation0 [shape = 'u32[]', space=smem, size = 0x4, offset = 0x4, fixed_abs, tag = 'smem constant byte address 0x4 - core index']
  #allocation1 [shape = 'u32[72,128]{1,0:T(1,128)}', space=vmem, size = 0x9000, scoped, tag = 'internal scratch']
  #allocation2 [shape = 'f32[1,1]{1,0:T(1,128)S(1)}', space=vmem, size = 0x200, scoped, tag = 'scoped memory for tpu_custom_call.1']
  %s0 = inlined_call_operand.smem [shape: u32[41], index: -1, kind: input, shape index: {}]
  %s1 = sld [smem:[%s0]]
  %s2 = scalar_lea.smem %s0, 1
  %s3 = sld [smem:[%s2]]
  %s4 = scalar_lea.smem %s0, 2
  %s5 = sld [smem:[%s4]]
  %s6 = scalar_lea.smem %s0, 3
  %s7 = sld [smem:[%s6]]
  %s8 = scalar_lea.smem %s0, 4
  %s9 = sld [smem:[%s8]]
  %s10 = scalar_lea.smem %s0, 5
  %s11 = sld [smem:[%s10]]
  %s12 = scalar_lea.smem %s0, 6
  %s13 = sld [smem:[%s12]]
  %s14 = scalar_lea.smem %s0, 7
  %s15 = sld [smem:[%s14]]
  %s16 = scalar_lea.smem %s0, 8
  %s17 = sld [smem:[%s16]]
  %s18 = scalar_lea.smem %s0, 9
  %s19 = sld [smem:[%s18]]
  %s20 = scalar_lea.smem %s0, 10
  %s21 = sld [smem:[%s20]]
  %s22 = scalar_lea.smem %s0, 11
  %s23 = sld [smem:[%s22]]
  %s24 = scalar_lea.smem %s0, 12
  %s25 = sld [smem:[%s24]]
  %s26 = scalar_lea.smem %s0, 13
  %s27 = sld [smem:[%s26]]
  %s28 = scalar_lea.smem %s0, 14
  %s29 = sld [smem:[%s28]]
  %s30 = scalar_lea.smem %s0, 15
  %s31 = sld [smem:[%s30]]
  %s32 = scalar_lea.smem %s0, 16
  %s33 = sld [smem:[%s32]]
  %s34 = scalar_lea.smem %s0, 17
  %s35 = sld [smem:[%s34]]
  %s36 = scalar_lea.smem %s0, 18
  %s37 = sld [smem:[%s36]]
  %s38 = scalar_lea.smem %s0, 19
  %s39 = sld [smem:[%s38]]
  %s40 = scalar_lea.smem %s0, 20
  %s41 = sld [smem:[%s40]]
  %s42 = scalar_lea.smem %s0, 21
  %s43 = sld [smem:[%s42]]
  %s44 = scalar_lea.smem %s0, 22
  %s45 = sld [smem:[%s44]]
  %s46 = scalar_lea.smem %s0, 23
  %s47 = sld [smem:[%s46]]
  %s48 = scalar_lea.smem %s0, 24
  %s49 = sld [smem:[%s48]]
  %s50 = scalar_lea.smem %s0, 25
  %s51 = sld [smem:[%s50]]
  %s52 = scalar_lea.smem %s0, 26
  %s53 = sld [smem:[%s52]]
  %s54 = scalar_lea.smem %s0, 27
  %s55 = sld [smem:[%s54]]
  %s56 = scalar_lea.smem %s0, 28
  %s57 = sld [smem:[%s56]]
  %s58 = scalar_lea.smem %s0, 29
  %s59 = sld [smem:[%s58]]
  %s60 = scalar_lea.smem %s0, 30
  %s61 = sld [smem:[%s60]]
  %s62 = scalar_lea.smem %s0, 31
  %s63 = sld [smem:[%s62]]
  %s64 = scalar_lea.smem %s0, 32
  %s65 = sld [smem:[%s64]]
  %s66 = scalar_lea.smem %s0, 33
  %s67 = sld [smem:[%s66]]
  %s68 = scalar_lea.smem %s0, 34
  %s69 = sld [smem:[%s68]]
  %s70 = scalar_lea.smem %s0, 35
  %s71 = sld [smem:[%s70]]
  %s72 = scalar_lea.smem %s0, 36
  %s73 = sld [smem:[%s72]]
  %s74 = scalar_lea.smem %s0, 37
  %s75 = sld [smem:[%s74]]
  %s76 = scalar_lea.smem %s0, 38
  %s77 = sld [smem:[%s76]]
  %s78 = scalar_lea.smem %s0, 39
  %s79 = sld [smem:[%s78]]
  %s80 = scalar_lea.smem %s0, 40
  %s81 = sld [smem:[%s80]]
  %s82 = sld [smem:[#allocation0]]
  $region333: #{tpu_custom_call.1} parent=0
    _
  %s84 = ssub.s32 1, %s82
  %s85 = scalar_select 0, %s84, %s82
  %v86 = vstv %s79
  %87 = vst [vmem:[#allocation2] sm:$0x1] %v86
  $region1: #{tpu_custom_call.1} parent=0
    #allocation3 [shape = 'u8[8192]{0}', space=vmem, size = 0x2000, scoped, tag = 'input window, operand 0']
    #allocation4 [shape = 's32[2]{0}', space=sflag, size = 0x8, scoped, tag = 'scoped memory for tpu_custom_call.1']
    #allocation5 [shape = 's32[2]{0}', space=sflag, size = 0x8, scoped, tag = 'scoped memory for tpu_custom_call.1']
    #allocation6 [shape = 'u8[8192]{0}', space=vmem, size = 0x2000, scoped, tag = 'input window, operand 1']
    #allocation7 [shape = 's32[2]{0}', space=sflag, size = 0x8, scoped, tag = 'scoped memory for tpu_custom_call.1']
    #allocation8 [shape = 'u8[8192]{0}', space=vmem, size = 0x2000, scoped, tag = 'input window, operand 2']
    #allocation9 [shape = 'u8[8192]{0}', space=vmem, size = 0x2000, scoped, tag = 'input window, operand 4']
    #allocation10 [shape = 's32[2]{0}', space=sflag, size = 0x8, scoped, tag = 'scoped memory for tpu_custom_call.1']
    #allocation11 [shape = 'u8[1024]{0}', space=vmem, size = 0x400, scoped, tag = 'input window, operand 6']
    #allocation12 [shape = 'u8[16384]{0}', space=vmem, size = 0x4000, scoped, tag = 'input window, operand 7, single buffered']
    #allocation13 [shape = 's32[1]{0}', space=sflag, size = 0x4, scoped, tag = 'scoped memory for tpu_custom_call.1']
    #allocation14 [shape = 'u8[512]{0}', space=vmem, size = 0x400, scoped, tag = 'input window, operand 8, single buffered']
    #allocation15 [shape = 'u8[16384]{0}', space=vmem, size = 0x4000, scoped, tag = 'input window, operand 9, single buffered']
    #allocation16 [shape = 's32[1]{0}', space=sflag, size = 0x4, scoped, tag = 'scoped memory for tpu_custom_call.1']
    #allocation17 [shape = 'u8[512]{0}', space=vmem, size = 0x400, scoped, tag = 'input window, operand 10, single buffered']
    #allocation18 [shape = 'u8[16384]{0}', space=vmem, size = 0x4000, scoped, tag = 'input window, operand 11, single buffered']
    #allocation19 [shape = 's32[1]{0}', space=sflag, size = 0x4, scoped, tag = 'scoped memory for tpu_custom_call.1']
    #allocation20 [shape = 'u8[512]{0}', space=vmem, size = 0x400, scoped, tag = 'input window, operand 12, single buffered']
    #allocation21 [shape = 'u8[16384]{0}', space=vmem, size = 0x4000, scoped, tag = 'input window, operand 13, single buffered']
    #allocation22 [shape = 's32[1]{0}', space=sflag, size = 0x4, scoped, tag = 'scoped memory for tpu_custom_call.1']
    #allocation23 [shape = 'u8[512]{0}', space=vmem, size = 0x400, scoped, tag = 'input window, operand 14, single buffered']
    #allocation24 [shape = 'u8[16384]{0}', space=vmem, size = 0x4000, scoped, tag = 'input window, operand 15, single buffered']
    #allocation25 [shape = 's32[1]{0}', space=sflag, size = 0x4, scoped, tag = 'scoped memory for tpu_custom_call.1']
    #allocation26 [shape = 'u8[16384]{0}', space=vmem, size = 0x4000, scoped, tag = 'input window, operand 16, single buffered']
    #allocation27 [shape = 'u8[512]{0}', space=vmem, size = 0x400, scoped, tag = 'input window, operand 17, single buffered']
    #allocation28 [shape = 's32[1]{0}', space=sflag, size = 0x4, scoped, tag = 'scoped memory for tpu_custom_call.1']
    #allocation29 [shape = 'u8[16384]{0}', space=vmem, size = 0x4000, scoped, tag = 'input window, operand 18, single buffered']
    #allocation30 [shape = 'u8[16384]{0}', space=vmem, size = 0x4000, scoped, tag = 'input window, operand 19, single buffered']
    #allocation31 [shape = 's32[1]{0}', space=sflag, size = 0x4, scoped, tag = 'scoped memory for tpu_custom_call.1']
    #allocation32 [shape = 'u8[512]{0}', space=vmem, size = 0x400, scoped, tag = 'input window, operand 20, single buffered']
    #allocation33 [shape = 'u8[16384]{0}', space=vmem, size = 0x4000, scoped, tag = 'input window, operand 21, single buffered']
    #allocation34 [shape = 's32[1]{0}', space=sflag, size = 0x4, scoped, tag = 'scoped memory for tpu_custom_call.1']
    #allocation35 [shape = 'u8[512]{0}', space=vmem, size = 0x400, scoped, tag = 'input window, operand 22, single buffered']
    #allocation36 [shape = 'u8[16384]{0}', space=vmem, size = 0x4000, scoped, tag = 'input window, operand 23, single buffered']
    #allocation37 [shape = 's32[1]{0}', space=sflag, size = 0x4, scoped, tag = 'scoped memory for tpu_custom_call.1']
    #allocation38 [shape = 'u8[16384]{0}', space=vmem, size = 0x4000, scoped, tag = 'input window, operand 24, single buffered']
    #allocation39 [shape = 'u8[512]{0}', space=vmem, size = 0x400, scoped, tag = 'input window, operand 25, single buffered']
    #allocation40 [shape = 's32[1]{0}', space=sflag, size = 0x4, scoped, tag = 'scoped memory for tpu_custom_call.1']
    #allocation41 [shape = 'u8[512]{0}', space=vmem, size = 0x400, scoped, tag = 'input window, operand 26, single buffered']
    #allocation42 [shape = 'u8[512]{0}', space=vmem, size = 0x400, scoped, tag = 'input window, operand 27, single buffered']
    #allocation43 [shape = 's32[1]{0}', space=sflag, size = 0x4, scoped, tag = 'scoped memory for tpu_custom_call.1']
    #allocation44 [shape = 'u8[512]{0}', space=vmem, size = 0x400, scoped, tag = 'input window, operand 28, single buffered']
    #allocation45 [shape = 'u8[512]{0}', space=vmem, size = 0x400, scoped, tag = 'input window, operand 29, single buffered']
    #allocation46 [shape = 's32[1]{0}', space=sflag, size = 0x4, scoped, tag = 'scoped memory for tpu_custom_call.1']
    #allocation47 [shape = 'u8[4096]{0}', space=vmem, size = 0x1000, scoped, tag = 'input window, operand 30, single buffered']
    #allocation48 [shape = 'u8[512]{0}', space=vmem, size = 0x400, scoped, tag = 'input window, operand 31, single buffered']
    #allocation49 [shape = 's32[1]{0}', space=sflag, size = 0x4, scoped, tag = 'scoped memory for tpu_custom_call.1']
    #allocation50 [shape = 'u8[16384]{0}', space=vmem, size = 0x4000, scoped, tag = 'input window, operand 32, single buffered']
    #allocation51 [shape = 'u8[16384]{0}', space=vmem, size = 0x4000, scoped, tag = 'input window, operand 33, single buffered']
    #allocation52 [shape = 's32[1]{0}', space=sflag, size = 0x4, scoped, tag = 'scoped memory for tpu_custom_call.1']
    #allocation53 [shape = 'u8[16384]{0}', space=vmem, size = 0x4000, scoped, tag = 'input window, operand 34, single buffered']
    #allocation54 [shape = 'u8[512]{0}', space=vmem, size = 0x400, scoped, tag = 'input window, operand 35, single buffered']
    #allocation55 [shape = 's32[1]{0}', space=sflag, size = 0x4, scoped, tag = 'scoped memory for tpu_custom_call.1']
    #allocation56 [shape = 'u8[1024]{0}', space=vmem, size = 0x400, scoped, tag = 'input window, operand 37, single buffered']
    #allocation57 [shape = 'u8[1024]{0}', space=vmem, size = 0x400, scoped, tag = 'output window, operand 0']
    %88 = vsyncpa [#allocation4], 0
    %s89 = scalar_lea.sflag [#allocation4], 1
    %90 = vsyncpa %s89, 0
    %91 = vsyncpa [#allocation7], 0
    %s92 = scalar_lea.sflag [#allocation7], 1
    %93 = vsyncpa %s92, 0
    %94 = vsyncpa [#allocation10], 0
    %s95 = scalar_lea.sflag [#allocation10], 1
    %96 = vsyncpa %s95, 0
    %97 = vsyncpa [#allocation13], 0
    %98 = vsyncpa [#allocation16], 0
    %99 = vsyncpa [#allocation19], 0
    %100 = vsyncpa [#allocation22], 0
    %101 = vsyncpa [#allocation25], 0
    %102 = vsyncpa [#allocation28], 0
    %103 = vsyncpa [#allocation31], 0
    %104 = vsyncpa [#allocation34], 0
    %105 = vsyncpa [#allocation37], 0
    %106 = vsyncpa [#allocation40], 0
    %107 = vsyncpa [#allocation43], 0
    %108 = vsyncpa [#allocation46], 0
    %109 = vsyncpa [#allocation49], 0
    %110 = vsyncpa [#allocation52], 0
    %111 = vsyncpa [#allocation55], 0
    %112 = vsyncpa [#allocation5], 0
    %s113 = scalar_lea.sflag [#allocation5], 1
    %114 = vsyncpa %s113, 0
    loop: start=0, step=1, limit=4
    $region2: #{tpu_custom_call.1} parent=1 // loop_pre_header
      _
    $region3: #{tpu_custom_call.1} parent=1 // loop_header
      %s116 = sphi 0, %s120
      %p117 = scmp.ge.s32.totalorder %s116, 4
      %s126 = sphi 0, %s128
      %s129 = sphi 0, %s126
      %s130 = sphi 0, %s129
      %s146 = sphi 0, %s130
      %s152 = sphi 0, %s154
      %s155 = sphi 0, %s152
      %s156 = sphi 0, %s155
      %s172 = sphi 0, %s156
      %s178 = sphi 0, %s180
      %s181 = sphi 0, %s178
      %s182 = sphi 0, %s181
      %s198 = sphi 0, %s182
      %s204 = sphi 0, %s206
      %s207 = sphi 0, %s204
      %s208 = sphi 0, %s207
      %s224 = sphi 0, %s208
      %s230 = sphi 0, %s232
      %s233 = sphi 0, %s230
      %s234 = sphi 0, %s233
      %s250 = sphi 0, %s234
      %s256 = sphi 0, %s258
      %s259 = sphi 0, %s256
      %s260 = sphi 0, %s259
      %s276 = sphi 0, %s260
      %s282 = sphi 0, %s284
      %s285 = sphi 0, %s282
      %s286 = sphi 0, %s285
      %s302 = sphi 0, %s286
      %s306 = sphi 0, %s306
      %s308 = sphi 0, %s306
      %s309 = sphi 0, %s308
      %s323 = sphi 0, %s309
      %s327 = sphi 0, %s327
      %s329 = sphi 0, %s327
      %s330 = sphi 0, %s329
      %s344 = sphi 0, %s330
      %s348 = sphi 0, %s348
      %s350 = sphi 0, %s348
      %s351 = sphi 0, %s350
      %s365 = sphi 0, %s351
      %s369 = sphi 0, %s369
      %s371 = sphi 0, %s369
      %s372 = sphi 0, %s371
      %s386 = sphi 0, %s372
      %s390 = sphi 0, %s390
      %s392 = sphi 0, %s390
      %s393 = sphi 0, %s392
      %s407 = sphi 0, %s393
      %s411 = sphi 0, %s411
      %s413 = sphi 0, %s411
      %s414 = sphi 0, %s413
      %s428 = sphi 0, %s414
      %s432 = sphi 0, %s432
      %s434 = sphi 0, %s432
      %s435 = sphi 0, %s434
      %s449 = sphi 0, %s435
      %s453 = sphi 0, %s453
      %s455 = sphi 0, %s453
      %s456 = sphi 0, %s455
      %s470 = sphi 0, %s456
      %s474 = sphi 0, %s474
      %s476 = sphi 0, %s474
      %s477 = sphi 0, %s476
      %s491 = sphi 0, %s477
      %s495 = sphi 0, %s495
      %s497 = sphi 0, %s495
      %s498 = sphi 0, %s497
      %s512 = sphi 0, %s498
      %s516 = sphi 0, %s516
      %s518 = sphi 0, %s516
      %s519 = sphi 0, %s518
      %s533 = sphi 0, %s519
      %s537 = sphi 0, %s537
      %s539 = sphi 0, %s537
      %s540 = sphi 0, %s539
      %s554 = sphi 0, %s540
      %s558 = sphi 0, %s558
      %s560 = sphi 0, %s558
      %s561 = sphi 0, %s560
      %s575 = sphi 0, %s561
      %s579 = sphi 0, %s579
      %s581 = sphi 0, %s579
      %s582 = sphi 0, %s581
      %s596 = sphi 0, %s582
      %s600 = sphi 0, %s600
      %s602 = sphi 0, %s600
      %s603 = sphi 0, %s602
      %s617 = sphi 0, %s603
      %s621 = sphi 0, %s621
      %s623 = sphi 0, %s621
      %s624 = sphi 0, %s623
      %s638 = sphi 0, %s624
      %s642 = sphi 0, %s642
      %s644 = sphi 0, %s642
      %s645 = sphi 0, %s644
      %s659 = sphi 0, %s645
      %s663 = sphi 0, %s663
      %s665 = sphi 0, %s663
      %s666 = sphi 0, %s665
      %s680 = sphi 0, %s666
      %s684 = sphi 0, %s684
      %s686 = sphi 0, %s684
      %s687 = sphi 0, %s686
      %s701 = sphi 0, %s687
      %s705 = sphi 0, %s705
      %s707 = sphi 0, %s705
      %s708 = sphi 0, %s707
      %s722 = sphi 0, %s708
      %s726 = sphi 0, %s726
      %s728 = sphi 0, %s726
      %s729 = sphi 0, %s728
      %s743 = sphi 0, %s729
      %s747 = sphi 0, %s747
      %s749 = sphi 0, %s747
      %s750 = sphi 0, %s749
      %s764 = sphi 0, %s750
      %s768 = sphi 0, %s768
      %s770 = sphi 0, %s768
      %s771 = sphi 0, %s770
      %s785 = sphi 0, %s771
      %s789 = sphi 0, %s789
      %s791 = sphi 0, %s789
      %s792 = sphi 0, %s791
      %s806 = sphi 0, %s792
      %s810 = sphi 0, %s810
      %s812 = sphi 0, %s810
      %s813 = sphi 0, %s812
      %s827 = sphi 0, %s813
      %s831 = sphi 0, %s831
      %s833 = sphi 0, %s831
      %s834 = sphi 0, %s833
      %s848 = sphi 0, %s834
      %s852 = sphi 0, %s852
      %s854 = sphi 0, %s852
      %s855 = sphi 0, %s854
      %s869 = sphi 0, %s855
      %s873 = sphi 0, %s873
      %s875 = sphi 0, %s873
      %s876 = sphi 0, %s875
      %s890 = sphi 0, %s876
      %s894 = sphi 0, %s894
      %s896 = sphi 0, %s894
      %s897 = sphi 0, %s896
      %s911 = sphi 0, %s897
      %s915 = sphi 0, %s915
      %s917 = sphi 0, %s915
      %s918 = sphi 0, %s917
      %s932 = sphi 0, %s918
      %s936 = sphi 0, %s936
      %s938 = sphi 0, %s936
      %s939 = sphi 0, %s938
      %s953 = sphi 0, %s939
      %s957 = sphi 0, %s957
      %s959 = sphi 0, %s957
      %s960 = sphi 0, %s959
      %s974 = sphi 0, %s960
      %s978 = sphi 0, %s978
      %s980 = sphi 0, %s978
      %s981 = sphi 0, %s980
      %s995 = sphi 0, %s981
      %s1001 = sphi 0, %s1003
      %s1004 = sphi 0, %s1001
      %s1005 = sphi 0, %s1004
      %s1021 = sphi 0, %s1005
    $region4: #{tpu_custom_call.1} parent=1 // loop_header_branch
      %119 = sbr.rel (%p117) target = $region8
    $region5: #{tpu_custom_call.1} parent=1 // loop_body
      %s121 = ssub.s32 %s116, 1
      %s122 = ssub.s32 %s116, 2
      %s123 = sadd.s32 %s116, 1
      %s124 = ssub.s32 %s116, %s123
      %p125 = scmp.eq.s32.totalorder %s124, 0
      %s127 = sadd.s32 %s126, 1
      %s128 = scalar_select %p125, %s126, %s127
      %p131 = pneg %p125
      %p132 = scmp.eq.s32.totalorder %s116, 1
      %p133 = por %p131, %p132
      %p134 = scmp.ne.s32.totalorder %s126, %s129
      %p135 = scmp.eq.s32.totalorder %s116, 0
      %p136 = por %p134, %p135
      %p137 = scmp.ne.s32.totalorder %s126, %s129
      %p138 = scmp.eq.s32.totalorder %s121, 1
      %p139 = por %p137, %p138
      %p140 = scmp.ne.s32.totalorder %s129, %s130
      %p141 = scmp.eq.s32.totalorder %s121, 0
      %p142 = por %p140, %p141
      %p143 = scmp.ne.s32.totalorder %s129, %s130
      %p144 = scmp.eq.s32.totalorder %s122, 1
      %p145 = por %p143, %p144
      %p147 = scmp.ne.s32.totalorder %s130, %s146
      %p148 = scmp.eq.s32.totalorder %s122, 0
      %p149 = por %p147, %p148
      %s150 = ssub.s32 %s116, %s123
      %p151 = scmp.eq.s32.totalorder %s150, 0
      %s153 = sadd.s32 %s152, 1
      %s154 = scalar_select %p151, %s152, %s153
      %p157 = pneg %p151
      %p158 = scmp.eq.s32.totalorder %s116, 1
      %p159 = por %p157, %p158
      %p160 = scmp.ne.s32.totalorder %s152, %s155
      %p161 = scmp.eq.s32.totalorder %s116, 0
      %p162 = por %p160, %p161
      %p163 = scmp.ne.s32.totalorder %s152, %s155
      %p164 = scmp.eq.s32.totalorder %s121, 1
      %p165 = por %p163, %p164
      %p166 = scmp.ne.s32.totalorder %s155, %s156
      %p167 = scmp.eq.s32.totalorder %s121, 0
      %p168 = por %p166, %p167
      %p169 = scmp.ne.s32.totalorder %s155, %s156
      %p170 = scmp.eq.s32.totalorder %s122, 1
      %p171 = por %p169, %p170
      %p173 = scmp.ne.s32.totalorder %s156, %s172
      %p174 = scmp.eq.s32.totalorder %s122, 0
      %p175 = por %p173, %p174
      %s176 = ssub.s32 %s116, %s123
      %p177 = scmp.eq.s32.totalorder %s176, 0
      %s179 = sadd.s32 %s178, 1
      %s180 = scalar_select %p177, %s178, %s179
      %p183 = pneg %p177
      %p184 = scmp.eq.s32.totalorder %s116, 1
      %p185 = por %p183, %p184
      %p186 = scmp.ne.s32.totalorder %s178, %s181
      %p187 = scmp.eq.s32.totalorder %s116, 0
      %p188 = por %p186, %p187
      %p189 = scmp.ne.s32.totalorder %s178, %s181
      %p190 = scmp.eq.s32.totalorder %s121, 1
      %p191 = por %p189, %p190
      %p192 = scmp.ne.s32.totalorder %s181, %s182
      %p193 = scmp.eq.s32.totalorder %s121, 0
      %p194 = por %p192, %p193
      %p195 = scmp.ne.s32.totalorder %s181, %s182
      %p196 = scmp.eq.s32.totalorder %s122, 1
      %p197 = por %p195, %p196
      %p199 = scmp.ne.s32.totalorder %s182, %s198
      %p200 = scmp.eq.s32.totalorder %s122, 0
      %p201 = por %p199, %p200
      %s202 = ssub.s32 %s116, %s123
      %p203 = scmp.eq.s32.totalorder %s202, 0
      %s205 = sadd.s32 %s204, 1
      %s206 = scalar_select %p203, %s204, %s205
      %p209 = pneg %p203
      %p210 = scmp.eq.s32.totalorder %s116, 1
      %p211 = por %p209, %p210
      %p212 = scmp.ne.s32.totalorder %s204, %s207
      %p213 = scmp.eq.s32.totalorder %s116, 0
      %p214 = por %p212, %p213
      %p215 = scmp.ne.s32.totalorder %s204, %s207
      %p216 = scmp.eq.s32.totalorder %s121, 1
      %p217 = por %p215, %p216
      %p218 = scmp.ne.s32.totalorder %s207, %s208
      %p219 = scmp.eq.s32.totalorder %s121, 0
      %p220 = por %p218, %p219
      %p221 = scmp.ne.s32.totalorder %s207, %s208
      %p222 = scmp.eq.s32.totalorder %s122, 1
      %p223 = por %p221, %p222
      %p225 = scmp.ne.s32.totalorder %s208, %s224
      %p226 = scmp.eq.s32.totalorder %s122, 0
      %p227 = por %p225, %p226
      %s228 = ssub.s32 %s116, %s123
      %p229 = scmp.eq.s32.totalorder %s228, 0
      %s231 = sadd.s32 %s230, 1
      %s232 = scalar_select %p229, %s230, %s231
      %p235 = pneg %p229
      %p236 = scmp.eq.s32.totalorder %s116, 1
      %p237 = por %p235, %p236
      %p238 = scmp.ne.s32.totalorder %s230, %s233
      %p239 = scmp.eq.s32.totalorder %s116, 0
      %p240 = por %p238, %p239
      %p241 = scmp.ne.s32.totalorder %s230, %s233
      %p242 = scmp.eq.s32.totalorder %s121, 1
      %p243 = por %p241, %p242
      %p244 = scmp.ne.s32.totalorder %s233, %s234
      %p245 = scmp.eq.s32.totalorder %s121, 0
      %p246 = por %p244, %p245
      %p247 = scmp.ne.s32.totalorder %s233, %s234
      %p248 = scmp.eq.s32.totalorder %s122, 1
      %p249 = por %p247, %p248
      %p251 = scmp.ne.s32.totalorder %s234, %s250
      %p252 = scmp.eq.s32.totalorder %s122, 0
      %p253 = por %p251, %p252
      %s254 = ssub.s32 %s116, %s123
      %p255 = scmp.eq.s32.totalorder %s254, 0
      %s257 = sadd.s32 %s256, 1
      %s258 = scalar_select %p255, %s256, %s257
      %p261 = pneg %p255
      %p262 = scmp.eq.s32.totalorder %s116, 1
      %p263 = por %p261, %p262
      %p264 = scmp.ne.s32.totalorder %s256, %s259
      %p265 = scmp.eq.s32.totalorder %s116, 0
      %p266 = por %p264, %p265
      %p267 = scmp.ne.s32.totalorder %s256, %s259
      %p268 = scmp.eq.s32.totalorder %s121, 1
      %p269 = por %p267, %p268
      %p270 = scmp.ne.s32.totalorder %s259, %s260
      %p271 = scmp.eq.s32.totalorder %s121, 0
      %p272 = por %p270, %p271
      %p273 = scmp.ne.s32.totalorder %s259, %s260
      %p274 = scmp.eq.s32.totalorder %s122, 1
      %p275 = por %p273, %p274
      %p277 = scmp.ne.s32.totalorder %s260, %s276
      %p278 = scmp.eq.s32.totalorder %s122, 0
      %p279 = por %p277, %p278
      %s280 = ssub.s32 %s116, %s123
      %p281 = scmp.eq.s32.totalorder %s280, 0
      %s283 = sadd.s32 %s282, 1
      %s284 = scalar_select %p281, %s282, %s283
      %p287 = pneg %p281
      %p288 = scmp.eq.s32.totalorder %s116, 1
      %p289 = por %p287, %p288
      %p290 = scmp.ne.s32.totalorder %s282, %s285
      %p291 = scmp.eq.s32.totalorder %s116, 0
      %p292 = por %p290, %p291
      %p293 = scmp.ne.s32.totalorder %s282, %s285
      %p294 = scmp.eq.s32.totalorder %s121, 1
      %p295 = por %p293, %p294
      %p296 = scmp.ne.s32.totalorder %s285, %s286
      %p297 = scmp.eq.s32.totalorder %s121, 0
      %p298 = por %p296, %p297
      %p299 = scmp.ne.s32.totalorder %s285, %s286
      %p300 = scmp.eq.s32.totalorder %s122, 1
      %p301 = por %p299, %p300
      %p303 = scmp.ne.s32.totalorder %s286, %s302
      %p304 = scmp.eq.s32.totalorder %s122, 0
      %p305 = por %p303, %p304
      %s307 = sadd.s32 %s306, 1
      %p310 = scmp.eq.s32.totalorder %s116, 1
      %p311 = scmp.ne.s32.totalorder %s306, %s308
      %p312 = scmp.eq.s32.totalorder %s116, 0
      %p313 = por %p311, %p312
      %p314 = scmp.ne.s32.totalorder %s306, %s308
      %p315 = scmp.eq.s32.totalorder %s121, 1
      %p316 = por %p314, %p315
      %p317 = scmp.ne.s32.totalorder %s308, %s309
      %p318 = scmp.eq.s32.totalorder %s121, 0
      %p319 = por %p317, %p318
      %p320 = scmp.ne.s32.totalorder %s308, %s309
      %p321 = scmp.eq.s32.totalorder %s122, 1
      %p322 = por %p320, %p321
      %p324 = scmp.ne.s32.totalorder %s309, %s323
      %p325 = scmp.eq.s32.totalorder %s122, 0
      %p326 = por %p324, %p325
      %s328 = sadd.s32 %s327, 1
      %p331 = scmp.eq.s32.totalorder %s116, 1
      %p332 = scmp.ne.s32.totalorder %s327, %s329
      %p333 = scmp.eq.s32.totalorder %s116, 0
      %p334 = por %p332, %p333
      %p335 = scmp.ne.s32.totalorder %s327, %s329
      %p336 = scmp.eq.s32.totalorder %s121, 1
      %p337 = por %p335, %p336
      %p338 = scmp.ne.s32.totalorder %s329, %s330
      %p339 = scmp.eq.s32.totalorder %s121, 0
      %p340 = por %p338, %p339
      %p341 = scmp.ne.s32.totalorder %s329, %s330
      %p342 = scmp.eq.s32.totalorder %s122, 1
      %p343 = por %p341, %p342
      %p345 = scmp.ne.s32.totalorder %s330, %s344
      %p346 = scmp.eq.s32.totalorder %s122, 0
      %p347 = por %p345, %p346
      %s349 = sadd.s32 %s348, 1
      %p352 = scmp.eq.s32.totalorder %s116, 1
      %p353 = scmp.ne.s32.totalorder %s348, %s350
      %p354 = scmp.eq.s32.totalorder %s116, 0
      %p355 = por %p353, %p354
      %p356 = scmp.ne.s32.totalorder %s348, %s350
      %p357 = scmp.eq.s32.totalorder %s121, 1
      %p358 = por %p356, %p357
      %p359 = scmp.ne.s32.totalorder %s350, %s351
      %p360 = scmp.eq.s32.totalorder %s121, 0
      %p361 = por %p359, %p360
      %p362 = scmp.ne.s32.totalorder %s350, %s351
      %p363 = scmp.eq.s32.totalorder %s122, 1
      %p364 = por %p362, %p363
      %p366 = scmp.ne.s32.totalorder %s351, %s365
      %p367 = scmp.eq.s32.totalorder %s122, 0
      %p368 = por %p366, %p367
      %s370 = sadd.s32 %s369, 1
      %p373 = scmp.eq.s32.totalorder %s116, 1
      %p374 = scmp.ne.s32.totalorder %s369, %s371
      %p375 = scmp.eq.s32.totalorder %s116, 0
      %p376 = por %p374, %p375
      %p377 = scmp.ne.s32.totalorder %s369, %s371
      %p378 = scmp.eq.s32.totalorder %s121, 1
      %p379 = por %p377, %p378
      %p380 = scmp.ne.s32.totalorder %s371, %s372
      %p381 = scmp.eq.s32.totalorder %s121, 0
      %p382 = por %p380, %p381
      %p383 = scmp.ne.s32.totalorder %s371, %s372
      %p384 = scmp.eq.s32.totalorder %s122, 1
      %p385 = por %p383, %p384
      %p387 = scmp.ne.s32.totalorder %s372, %s386
      %p388 = scmp.eq.s32.totalorder %s122, 0
      %p389 = por %p387, %p388
      %s391 = sadd.s32 %s390, 1
      %p394 = scmp.eq.s32.totalorder %s116, 1
      %p395 = scmp.ne.s32.totalorder %s390, %s392
      %p396 = scmp.eq.s32.totalorder %s116, 0
      %p397 = por %p395, %p396
      %p398 = scmp.ne.s32.totalorder %s390, %s392
      %p399 = scmp.eq.s32.totalorder %s121, 1
      %p400 = por %p398, %p399
      %p401 = scmp.ne.s32.totalorder %s392, %s393
      %p402 = scmp.eq.s32.totalorder %s121, 0
      %p403 = por %p401, %p402
      %p404 = scmp.ne.s32.totalorder %s392, %s393
      %p405 = scmp.eq.s32.totalorder %s122, 1
      %p406 = por %p404, %p405
      %p408 = scmp.ne.s32.totalorder %s393, %s407
      %p409 = scmp.eq.s32.totalorder %s122, 0
      %p410 = por %p408, %p409
      %s412 = sadd.s32 %s411, 1
      %p415 = scmp.eq.s32.totalorder %s116, 1
      %p416 = scmp.ne.s32.totalorder %s411, %s413
      %p417 = scmp.eq.s32.totalorder %s116, 0
      %p418 = por %p416, %p417
      %p419 = scmp.ne.s32.totalorder %s411, %s413
      %p420 = scmp.eq.s32.totalorder %s121, 1
      %p421 = por %p419, %p420
      %p422 = scmp.ne.s32.totalorder %s413, %s414
      %p423 = scmp.eq.s32.totalorder %s121, 0
      %p424 = por %p422, %p423
      %p425 = scmp.ne.s32.totalorder %s413, %s414
      %p426 = scmp.eq.s32.totalorder %s122, 1
      %p427 = por %p425, %p426
      %p429 = scmp.ne.s32.totalorder %s414, %s428
      %p430 = scmp.eq.s32.totalorder %s122, 0
      %p431 = por %p429, %p430
      %s433 = sadd.s32 %s432, 1
      %p436 = scmp.eq.s32.totalorder %s116, 1
      %p437 = scmp.ne.s32.totalorder %s432, %s434
      %p438 = scmp.eq.s32.totalorder %s116, 0
      %p439 = por %p437, %p438
      %p440 = scmp.ne.s32.totalorder %s432, %s434
      %p441 = scmp.eq.s32.totalorder %s121, 1
      %p442 = por %p440, %p441
      %p443 = scmp.ne.s32.totalorder %s434, %s435
      %p444 = scmp.eq.s32.totalorder %s121, 0
      %p445 = por %p443, %p444
      %p446 = scmp.ne.s32.totalorder %s434, %s435
      %p447 = scmp.eq.s32.totalorder %s122, 1
      %p448 = por %p446, %p447
      %p450 = scmp.ne.s32.totalorder %s435, %s449
      %p451 = scmp.eq.s32.totalorder %s122, 0
      %p452 = por %p450, %p451
      %s454 = sadd.s32 %s453, 1
      %p457 = scmp.eq.s32.totalorder %s116, 1
      %p458 = scmp.ne.s32.totalorder %s453, %s455
      %p459 = scmp.eq.s32.totalorder %s116, 0
      %p460 = por %p458, %p459
      %p461 = scmp.ne.s32.totalorder %s453, %s455
      %p462 = scmp.eq.s32.totalorder %s121, 1
      %p463 = por %p461, %p462
      %p464 = scmp.ne.s32.totalorder %s455, %s456
      %p465 = scmp.eq.s32.totalorder %s121, 0
      %p466 = por %p464, %p465
      %p467 = scmp.ne.s32.totalorder %s455, %s456
      %p468 = scmp.eq.s32.totalorder %s122, 1
      %p469 = por %p467, %p468
      %p471 = scmp.ne.s32.totalorder %s456, %s470
      %p472 = scmp.eq.s32.totalorder %s122, 0
      %p473 = por %p471, %p472
      %s475 = sadd.s32 %s474, 1
      %p478 = scmp.eq.s32.totalorder %s116, 1
      %p479 = scmp.ne.s32.totalorder %s474, %s476
      %p480 = scmp.eq.s32.totalorder %s116, 0
      %p481 = por %p479, %p480
      %p482 = scmp.ne.s32.totalorder %s474, %s476
      %p483 = scmp.eq.s32.totalorder %s121, 1
      %p484 = por %p482, %p483
      %p485 = scmp.ne.s32.totalorder %s476, %s477
      %p486 = scmp.eq.s32.totalorder %s121, 0
      %p487 = por %p485, %p486
      %p488 = scmp.ne.s32.totalorder %s476, %s477
      %p489 = scmp.eq.s32.totalorder %s122, 1
      %p490 = por %p488, %p489
      %p492 = scmp.ne.s32.totalorder %s477, %s491
      %p493 = scmp.eq.s32.totalorder %s122, 0
      %p494 = por %p492, %p493
      %s496 = sadd.s32 %s495, 1
      %p499 = scmp.eq.s32.totalorder %s116, 1
      %p500 = scmp.ne.s32.totalorder %s495, %s497
      %p501 = scmp.eq.s32.totalorder %s116, 0
      %p502 = por %p500, %p501
      %p503 = scmp.ne.s32.totalorder %s495, %s497
      %p504 = scmp.eq.s32.totalorder %s121, 1
      %p505 = por %p503, %p504
      %p506 = scmp.ne.s32.totalorder %s497, %s498
      %p507 = scmp.eq.s32.totalorder %s121, 0
      %p508 = por %p506, %p507
      %p509 = scmp.ne.s32.totalorder %s497, %s498
      %p510 = scmp.eq.s32.totalorder %s122, 1
      %p511 = por %p509, %p510
      %p513 = scmp.ne.s32.totalorder %s498, %s512
      %p514 = scmp.eq.s32.totalorder %s122, 0
      %p515 = por %p513, %p514
      %s517 = sadd.s32 %s516, 1
      %p520 = scmp.eq.s32.totalorder %s116, 1
      %p521 = scmp.ne.s32.totalorder %s516, %s518
      %p522 = scmp.eq.s32.totalorder %s116, 0
      %p523 = por %p521, %p522
      %p524 = scmp.ne.s32.totalorder %s516, %s518
      %p525 = scmp.eq.s32.totalorder %s121, 1
      %p526 = por %p524, %p525
      %p527 = scmp.ne.s32.totalorder %s518, %s519
      %p528 = scmp.eq.s32.totalorder %s121, 0
      %p529 = por %p527, %p528
      %p530 = scmp.ne.s32.totalorder %s518, %s519
      %p531 = scmp.eq.s32.totalorder %s122, 1
      %p532 = por %p530, %p531
      %p534 = scmp.ne.s32.totalorder %s519, %s533
      %p535 = scmp.eq.s32.totalorder %s122, 0
      %p536 = por %p534, %p535
      %s538 = sadd.s32 %s537, 1
      %p541 = scmp.eq.s32.totalorder %s116, 1
      %p542 = scmp.ne.s32.totalorder %s537, %s539
      %p543 = scmp.eq.s32.totalorder %s116, 0
      %p544 = por %p542, %p543
      %p545 = scmp.ne.s32.totalorder %s537, %s539
      %p546 = scmp.eq.s32.totalorder %s121, 1
      %p547 = por %p545, %p546
      %p548 = scmp.ne.s32.totalorder %s539, %s540
      %p549 = scmp.eq.s32.totalorder %s121, 0
      %p550 = por %p548, %p549
      %p551 = scmp.ne.s32.totalorder %s539, %s540
      %p552 = scmp.eq.s32.totalorder %s122, 1
      %p553 = por %p551, %p552
      %p555 = scmp.ne.s32.totalorder %s540, %s554
      %p556 = scmp.eq.s32.totalorder %s122, 0
      %p557 = por %p555, %p556
      %s559 = sadd.s32 %s558, 1
      %p562 = scmp.eq.s32.totalorder %s116, 1
      %p563 = scmp.ne.s32.totalorder %s558, %s560
      %p564 = scmp.eq.s32.totalorder %s116, 0
      %p565 = por %p563, %p564
      %p566 = scmp.ne.s32.totalorder %s558, %s560
      %p567 = scmp.eq.s32.totalorder %s121, 1
      %p568 = por %p566, %p567
      %p569 = scmp.ne.s32.totalorder %s560, %s561
      %p570 = scmp.eq.s32.totalorder %s121, 0
      %p571 = por %p569, %p570
      %p572 = scmp.ne.s32.totalorder %s560, %s561
      %p573 = scmp.eq.s32.totalorder %s122, 1
      %p574 = por %p572, %p573
      %p576 = scmp.ne.s32.totalorder %s561, %s575
      %p577 = scmp.eq.s32.totalorder %s122, 0
      %p578 = por %p576, %p577
      %s580 = sadd.s32 %s579, 1
      %p583 = scmp.eq.s32.totalorder %s116, 1
      %p584 = scmp.ne.s32.totalorder %s579, %s581
      %p585 = scmp.eq.s32.totalorder %s116, 0
      %p586 = por %p584, %p585
      %p587 = scmp.ne.s32.totalorder %s579, %s581
      %p588 = scmp.eq.s32.totalorder %s121, 1
      %p589 = por %p587, %p588
      %p590 = scmp.ne.s32.totalorder %s581, %s582
      %p591 = scmp.eq.s32.totalorder %s121, 0
      %p592 = por %p590, %p591
      %p593 = scmp.ne.s32.totalorder %s581, %s582
      %p594 = scmp.eq.s32.totalorder %s122, 1
      %p595 = por %p593, %p594
      %p597 = scmp.ne.s32.totalorder %s582, %s596
      %p598 = scmp.eq.s32.totalorder %s122, 0
      %p599 = por %p597, %p598
      %s601 = sadd.s32 %s600, 1
      %p604 = scmp.eq.s32.totalorder %s116, 1
      %p605 = scmp.ne.s32.totalorder %s600, %s602
      %p606 = scmp.eq.s32.totalorder %s116, 0
      %p607 = por %p605, %p606
      %p608 = scmp.ne.s32.totalorder %s600, %s602
      %p609 = scmp.eq.s32.totalorder %s121, 1
      %p610 = por %p608, %p609
      %p611 = scmp.ne.s32.totalorder %s602, %s603
      %p612 = scmp.eq.s32.totalorder %s121, 0
      %p613 = por %p611, %p612
      %p614 = scmp.ne.s32.totalorder %s602, %s603
      %p615 = scmp.eq.s32.totalorder %s122, 1
      %p616 = por %p614, %p615
      %p618 = scmp.ne.s32.totalorder %s603, %s617
      %p619 = scmp.eq.s32.totalorder %s122, 0
      %p620 = por %p618, %p619
      %s622 = sadd.s32 %s621, 1
      %p625 = scmp.eq.s32.totalorder %s116, 1
      %p626 = scmp.ne.s32.totalorder %s621, %s623
      %p627 = scmp.eq.s32.totalorder %s116, 0
      %p628 = por %p626, %p627
      %p629 = scmp.ne.s32.totalorder %s621, %s623
      %p630 = scmp.eq.s32.totalorder %s121, 1
      %p631 = por %p629, %p630
      %p632 = scmp.ne.s32.totalorder %s623, %s624
      %p633 = scmp.eq.s32.totalorder %s121, 0
      %p634 = por %p632, %p633
      %p635 = scmp.ne.s32.totalorder %s623, %s624
      %p636 = scmp.eq.s32.totalorder %s122, 1
      %p637 = por %p635, %p636
      %p639 = scmp.ne.s32.totalorder %s624, %s638
      %p640 = scmp.eq.s32.totalorder %s122, 0
      %p641 = por %p639, %p640
      %s643 = sadd.s32 %s642, 1
      %p646 = scmp.eq.s32.totalorder %s116, 1
      %p647 = scmp.ne.s32.totalorder %s642, %s644
      %p648 = scmp.eq.s32.totalorder %s116, 0
      %p649 = por %p647, %p648
      %p650 = scmp.ne.s32.totalorder %s642, %s644
      %p651 = scmp.eq.s32.totalorder %s121, 1
      %p652 = por %p650, %p651
      %p653 = scmp.ne.s32.totalorder %s644, %s645
      %p654 = scmp.eq.s32.totalorder %s121, 0
      %p655 = por %p653, %p654
      %p656 = scmp.ne.s32.totalorder %s644, %s645
      %p657 = scmp.eq.s32.totalorder %s122, 1
      %p658 = por %p656, %p657
      %p660 = scmp.ne.s32.totalorder %s645, %s659
      %p661 = scmp.eq.s32.totalorder %s122, 0
      %p662 = por %p660, %p661
      %s664 = sadd.s32 %s663, 1
      %p667 = scmp.eq.s32.totalorder %s116, 1
      %p668 = scmp.ne.s32.totalorder %s663, %s665
      %p669 = scmp.eq.s32.totalorder %s116, 0
      %p670 = por %p668, %p669
      %p671 = scmp.ne.s32.totalorder %s663, %s665
      %p672 = scmp.eq.s32.totalorder %s121, 1
      %p673 = por %p671, %p672
      %p674 = scmp.ne.s32.totalorder %s665, %s666
      %p675 = scmp.eq.s32.totalorder %s121, 0
      %p676 = por %p674, %p675
      %p677 = scmp.ne.s32.totalorder %s665, %s666
      %p678 = scmp.eq.s32.totalorder %s122, 1
      %p679 = por %p677, %p678
      %p681 = scmp.ne.s32.totalorder %s666, %s680
      %p682 = scmp.eq.s32.totalorder %s122, 0
      %p683 = por %p681, %p682
      %s685 = sadd.s32 %s684, 1
      %p688 = scmp.eq.s32.totalorder %s116, 1
      %p689 = scmp.ne.s32.totalorder %s684, %s686
      %p690 = scmp.eq.s32.totalorder %s116, 0
      %p691 = por %p689, %p690
      %p692 = scmp.ne.s32.totalorder %s684, %s686
      %p693 = scmp.eq.s32.totalorder %s121, 1
      %p694 = por %p692, %p693
      %p695 = scmp.ne.s32.totalorder %s686, %s687
      %p696 = scmp.eq.s32.totalorder %s121, 0
      %p697 = por %p695, %p696
      %p698 = scmp.ne.s32.totalorder %s686, %s687
      %p699 = scmp.eq.s32.totalorder %s122, 1
      %p700 = por %p698, %p699
      %p702 = scmp.ne.s32.totalorder %s687, %s701
      %p703 = scmp.eq.s32.totalorder %s122, 0
      %p704 = por %p702, %p703
      %s706 = sadd.s32 %s705, 1
      %p709 = scmp.eq.s32.totalorder %s116, 1
      %p710 = scmp.ne.s32.totalorder %s705, %s707
      %p711 = scmp.eq.s32.totalorder %s116, 0
      %p712 = por %p710, %p711
      %p713 = scmp.ne.s32.totalorder %s705, %s707
      %p714 = scmp.eq.s32.totalorder %s121, 1
      %p715 = por %p713, %p714
      %p716 = scmp.ne.s32.totalorder %s707, %s708
      %p717 = scmp.eq.s32.totalorder %s121, 0
      %p718 = por %p716, %p717
      %p719 = scmp.ne.s32.totalorder %s707, %s708
      %p720 = scmp.eq.s32.totalorder %s122, 1
      %p721 = por %p719, %p720
      %p723 = scmp.ne.s32.totalorder %s708, %s722
      %p724 = scmp.eq.s32.totalorder %s122, 0
      %p725 = por %p723, %p724
      %s727 = sadd.s32 %s726, 1
      %p730 = scmp.eq.s32.totalorder %s116, 1
      %p731 = scmp.ne.s32.totalorder %s726, %s728
      %p732 = scmp.eq.s32.totalorder %s116, 0
      %p733 = por %p731, %p732
      %p734 = scmp.ne.s32.totalorder %s726, %s728
      %p735 = scmp.eq.s32.totalorder %s121, 1
      %p736 = por %p734, %p735
      %p737 = scmp.ne.s32.totalorder %s728, %s729
      %p738 = scmp.eq.s32.totalorder %s121, 0
      %p739 = por %p737, %p738
      %p740 = scmp.ne.s32.totalorder %s728, %s729
      %p741 = scmp.eq.s32.totalorder %s122, 1
      %p742 = por %p740, %p741
      %p744 = scmp.ne.s32.totalorder %s729, %s743
      %p745 = scmp.eq.s32.totalorder %s122, 0
      %p746 = por %p744, %p745
      %s748 = sadd.s32 %s747, 1
      %p751 = scmp.eq.s32.totalorder %s116, 1
      %p752 = scmp.ne.s32.totalorder %s747, %s749
      %p753 = scmp.eq.s32.totalorder %s116, 0
      %p754 = por %p752, %p753
      %p755 = scmp.ne.s32.totalorder %s747, %s749
      %p756 = scmp.eq.s32.totalorder %s121, 1
      %p757 = por %p755, %p756
      %p758 = scmp.ne.s32.totalorder %s749, %s750
      %p759 = scmp.eq.s32.totalorder %s121, 0
      %p760 = por %p758, %p759
      %p761 = scmp.ne.s32.totalorder %s749, %s750
      %p762 = scmp.eq.s32.totalorder %s122, 1
      %p763 = por %p761, %p762
      %p765 = scmp.ne.s32.totalorder %s750, %s764
      %p766 = scmp.eq.s32.totalorder %s122, 0
      %p767 = por %p765, %p766
      %s769 = sadd.s32 %s768, 1
      %p772 = scmp.eq.s32.totalorder %s116, 1
      %p773 = scmp.ne.s32.totalorder %s768, %s770
      %p774 = scmp.eq.s32.totalorder %s116, 0
      %p775 = por %p773, %p774
      %p776 = scmp.ne.s32.totalorder %s768, %s770
      %p777 = scmp.eq.s32.totalorder %s121, 1
      %p778 = por %p776, %p777
      %p779 = scmp.ne.s32.totalorder %s770, %s771
      %p780 = scmp.eq.s32.totalorder %s121, 0
      %p781 = por %p779, %p780
      %p782 = scmp.ne.s32.totalorder %s770, %s771
      %p783 = scmp.eq.s32.totalorder %s122, 1
      %p784 = por %p782, %p783
      %p786 = scmp.ne.s32.totalorder %s771, %s785
      %p787 = scmp.eq.s32.totalorder %s122, 0
      %p788 = por %p786, %p787
      %s790 = sadd.s32 %s789, 1
      %p793 = scmp.eq.s32.totalorder %s116, 1
      %p794 = scmp.ne.s32.totalorder %s789, %s791
      %p795 = scmp.eq.s32.totalorder %s116, 0
      %p796 = por %p794, %p795
      %p797 = scmp.ne.s32.totalorder %s789, %s791
      %p798 = scmp.eq.s32.totalorder %s121, 1
      %p799 = por %p797, %p798
      %p800 = scmp.ne.s32.totalorder %s791, %s792
      %p801 = scmp.eq.s32.totalorder %s121, 0
      %p802 = por %p800, %p801
      %p803 = scmp.ne.s32.totalorder %s791, %s792
      %p804 = scmp.eq.s32.totalorder %s122, 1
      %p805 = por %p803, %p804
      %p807 = scmp.ne.s32.totalorder %s792, %s806
      %p808 = scmp.eq.s32.totalorder %s122, 0
      %p809 = por %p807, %p808
      %s811 = sadd.s32 %s810, 1
      %p814 = scmp.eq.s32.totalorder %s116, 1
      %p815 = scmp.ne.s32.totalorder %s810, %s812
      %p816 = scmp.eq.s32.totalorder %s116, 0
      %p817 = por %p815, %p816
      %p818 = scmp.ne.s32.totalorder %s810, %s812
      %p819 = scmp.eq.s32.totalorder %s121, 1
      %p820 = por %p818, %p819
      %p821 = scmp.ne.s32.totalorder %s812, %s813
      %p822 = scmp.eq.s32.totalorder %s121, 0
      %p823 = por %p821, %p822
      %p824 = scmp.ne.s32.totalorder %s812, %s813
      %p825 = scmp.eq.s32.totalorder %s122, 1
      %p826 = por %p824, %p825
      %p828 = scmp.ne.s32.totalorder %s813, %s827
      %p829 = scmp.eq.s32.totalorder %s122, 0
      %p830 = por %p828, %p829
      %s832 = sadd.s32 %s831, 1
      %p835 = scmp.eq.s32.totalorder %s116, 1
      %p836 = scmp.ne.s32.totalorder %s831, %s833
      %p837 = scmp.eq.s32.totalorder %s116, 0
      %p838 = por %p836, %p837
      %p839 = scmp.ne.s32.totalorder %s831, %s833
      %p840 = scmp.eq.s32.totalorder %s121, 1
      %p841 = por %p839, %p840
      %p842 = scmp.ne.s32.totalorder %s833, %s834
      %p843 = scmp.eq.s32.totalorder %s121, 0
      %p844 = por %p842, %p843
      %p845 = scmp.ne.s32.totalorder %s833, %s834
      %p846 = scmp.eq.s32.totalorder %s122, 1
      %p847 = por %p845, %p846
      %p849 = scmp.ne.s32.totalorder %s834, %s848
      %p850 = scmp.eq.s32.totalorder %s122, 0
      %p851 = por %p849, %p850
      %s853 = sadd.s32 %s852, 1
      %p856 = scmp.eq.s32.totalorder %s116, 1
      %p857 = scmp.ne.s32.totalorder %s852, %s854
      %p858 = scmp.eq.s32.totalorder %s116, 0
      %p859 = por %p857, %p858
      %p860 = scmp.ne.s32.totalorder %s852, %s854
      %p861 = scmp.eq.s32.totalorder %s121, 1
      %p862 = por %p860, %p861
      %p863 = scmp.ne.s32.totalorder %s854, %s855
      %p864 = scmp.eq.s32.totalorder %s121, 0
      %p865 = por %p863, %p864
      %p866 = scmp.ne.s32.totalorder %s854, %s855
      %p867 = scmp.eq.s32.totalorder %s122, 1
      %p868 = por %p866, %p867
      %p870 = scmp.ne.s32.totalorder %s855, %s869
      %p871 = scmp.eq.s32.totalorder %s122, 0
      %p872 = por %p870, %p871
      %s874 = sadd.s32 %s873, 1
      %p877 = scmp.eq.s32.totalorder %s116, 1
      %p878 = scmp.ne.s32.totalorder %s873, %s875
      %p879 = scmp.eq.s32.totalorder %s116, 0
      %p880 = por %p878, %p879
      %p881 = scmp.ne.s32.totalorder %s873, %s875
      %p882 = scmp.eq.s32.totalorder %s121, 1
      %p883 = por %p881, %p882
      %p884 = scmp.ne.s32.totalorder %s875, %s876
      %p885 = scmp.eq.s32.totalorder %s121, 0
      %p886 = por %p884, %p885
      %p887 = scmp.ne.s32.totalorder %s875, %s876
      %p888 = scmp.eq.s32.totalorder %s122, 1
      %p889 = por %p887, %p888
      %p891 = scmp.ne.s32.totalorder %s876, %s890
      %p892 = scmp.eq.s32.totalorder %s122, 0
      %p893 = por %p891, %p892
      %s895 = sadd.s32 %s894, 1
      %p898 = scmp.eq.s32.totalorder %s116, 1
      %p899 = scmp.ne.s32.totalorder %s894, %s896
      %p900 = scmp.eq.s32.totalorder %s116, 0
      %p901 = por %p899, %p900
      %p902 = scmp.ne.s32.totalorder %s894, %s896
      %p903 = scmp.eq.s32.totalorder %s121, 1
      %p904 = por %p902, %p903
      %p905 = scmp.ne.s32.totalorder %s896, %s897
      %p906 = scmp.eq.s32.totalorder %s121, 0
      %p907 = por %p905, %p906
      %p908 = scmp.ne.s32.totalorder %s896, %s897
      %p909 = scmp.eq.s32.totalorder %s122, 1
      %p910 = por %p908, %p909
      %p912 = scmp.ne.s32.totalorder %s897, %s911
      %p913 = scmp.eq.s32.totalorder %s122, 0
      %p914 = por %p912, %p913
      %s916 = sadd.s32 %s915, 1
      %p919 = scmp.eq.s32.totalorder %s116, 1
      %p920 = scmp.ne.s32.totalorder %s915, %s917
      %p921 = scmp.eq.s32.totalorder %s116, 0
      %p922 = por %p920, %p921
      %p923 = scmp.ne.s32.totalorder %s915, %s917
      %p924 = scmp.eq.s32.totalorder %s121, 1
      %p925 = por %p923, %p924
      %p926 = scmp.ne.s32.totalorder %s917, %s918
      %p927 = scmp.eq.s32.totalorder %s121, 0
      %p928 = por %p926, %p927
      %p929 = scmp.ne.s32.totalorder %s917, %s918
      %p930 = scmp.eq.s32.totalorder %s122, 1
      %p931 = por %p929, %p930
      %p933 = scmp.ne.s32.totalorder %s918, %s932
      %p934 = scmp.eq.s32.totalorder %s122, 0
      %p935 = por %p933, %p934
      %s937 = sadd.s32 %s936, 1
      %p940 = scmp.eq.s32.totalorder %s116, 1
      %p941 = scmp.ne.s32.totalorder %s936, %s938
      %p942 = scmp.eq.s32.totalorder %s116, 0
      %p943 = por %p941, %p942
      %p944 = scmp.ne.s32.totalorder %s936, %s938
      %p945 = scmp.eq.s32.totalorder %s121, 1
      %p946 = por %p944, %p945
      %p947 = scmp.ne.s32.totalorder %s938, %s939
      %p948 = scmp.eq.s32.totalorder %s121, 0
      %p949 = por %p947, %p948
      %p950 = scmp.ne.s32.totalorder %s938, %s939
      %p951 = scmp.eq.s32.totalorder %s122, 1
      %p952 = por %p950, %p951
      %p954 = scmp.ne.s32.totalorder %s939, %s953
      %p955 = scmp.eq.s32.totalorder %s122, 0
      %p956 = por %p954, %p955
      %s958 = sadd.s32 %s957, 1
      %p961 = scmp.eq.s32.totalorder %s116, 1
      %p962 = scmp.ne.s32.totalorder %s957, %s959
      %p963 = scmp.eq.s32.totalorder %s116, 0
      %p964 = por %p962, %p963
      %p965 = scmp.ne.s32.totalorder %s957, %s959
      %p966 = scmp.eq.s32.totalorder %s121, 1
      %p967 = por %p965, %p966
      %p968 = scmp.ne.s32.totalorder %s959, %s960
      %p969 = scmp.eq.s32.totalorder %s121, 0
      %p970 = por %p968, %p969
      %p971 = scmp.ne.s32.totalorder %s959, %s960
      %p972 = scmp.eq.s32.totalorder %s122, 1
      %p973 = por %p971, %p972
      %p975 = scmp.ne.s32.totalorder %s960, %s974
      %p976 = scmp.eq.s32.totalorder %s122, 0
      %p977 = por %p975, %p976
      %s979 = sadd.s32 %s978, 1
      %p982 = scmp.eq.s32.totalorder %s116, 1
      %p983 = scmp.ne.s32.totalorder %s978, %s980
      %p984 = scmp.eq.s32.totalorder %s116, 0
      %p985 = por %p983, %p984
      %p986 = scmp.ne.s32.totalorder %s978, %s980
      %p987 = scmp.eq.s32.totalorder %s121, 1
      %p988 = por %p986, %p987
      %p989 = scmp.ne.s32.totalorder %s980, %s981
      %p990 = scmp.eq.s32.totalorder %s121, 0
      %p991 = por %p989, %p990
      %p992 = scmp.ne.s32.totalorder %s980, %s981
      %p993 = scmp.eq.s32.totalorder %s122, 1
      %p994 = por %p992, %p993
      %p996 = scmp.ne.s32.totalorder %s981, %s995
      %p997 = scmp.eq.s32.totalorder %s122, 0
      %p998 = por %p996, %p997
      %s999 = ssub.s32 %s116, %s123
      %p1000 = scmp.eq.s32.totalorder %s999, 0
      %s1002 = sadd.s32 %s1001, 1
      %s1003 = scalar_select %p1000, %s1001, %s1002
      %p1006 = pneg %p1000
      %p1007 = scmp.eq.s32.totalorder %s116, 1
      %p1008 = por %p1006, %p1007
      %p1009 = scmp.ne.s32.totalorder %s1001, %s1004
      %p1010 = scmp.eq.s32.totalorder %s116, 0
      %p1011 = por %p1009, %p1010
      %p1012 = scmp.ne.s32.totalorder %s1001, %s1004
      %p1013 = scmp.eq.s32.totalorder %s121, 1
      %p1014 = por %p1012, %p1013
      %p1015 = scmp.ne.s32.totalorder %s1004, %s1005
      %p1016 = scmp.eq.s32.totalorder %s121, 0
      %p1017 = por %p1015, %p1016
      %p1018 = scmp.ne.s32.totalorder %s1004, %s1005
      %p1019 = scmp.eq.s32.totalorder %s122, 1
      %p1020 = por %p1018, %p1019
      %p1022 = scmp.ne.s32.totalorder %s1005, %s1021
      %p1023 = scmp.eq.s32.totalorder %s122, 0
      %p1024 = por %p1022, %p1023
      %p1025 = scmp.le.s32.totalorder 1, %s116
      %p1026 = scmp.lt.s32.totalorder %s116, 3
      %p1027 = pnand %p1025, %p1026
      %p1028 = pneg %p1027
      // Predicated region
      $region9: #{tpu_custom_call.1} parent=5 // pred_check
        _
      $region10: #{tpu_custom_call.1} parent=5 // pred_check_branch
        %1030 = sbr.rel (%p1027) target = $region12
      $region11: #{tpu_custom_call.1} parent=5 // pred_region
        %s1031 = ssub.s32 %s116, 1
        // Predicated region
        $region13: #{tpu_custom_call.1} parent=11 // pred_check
          %p1032 = pneg %p319
        $region14: #{tpu_custom_call.1} parent=11 // pred_check_branch
          %1034 = sbr.rel (%p1032) target = $region16
        $region15: #{tpu_custom_call.1} parent=11 // pred_region
          %1036 = vsyncadd [#allocation13], 0
          %s1037 = sshll.u32 %s15, 4
          %s1038 = int_to_ptr.hbm [resolvable:$true] %s1037
          %s1039 = sshll.u32 [#allocation12], 4
          %s1040 = int_to_ptr.vmem [resolvable:$true] %s1039
          %1045 = dma.hbm_to_vmem [thread:$0]  %s1038, 512, %s1040, [#allocation13], 128, 128, 8
        $region16: #{tpu_custom_call.1} parent=11 // pred_fallthru
          _
        // Predicated region
        $region17: #{tpu_custom_call.1} parent=11 // pred_check
          %p1046 = pneg %p340
        $region18: #{tpu_custom_call.1} parent=11 // pred_check_branch
          %1048 = sbr.rel (%p1046) target = $region20
        $region19: #{tpu_custom_call.1} parent=11 // pred_region
          %1050 = vsyncadd [#allocation13], 0
          %s1052 = sshll.u32 %s17, 4
          %s1053 = int_to_ptr.hbm [resolvable:$true] %s1052
          %s1054 = sshll.u32 [#allocation14], 4
          %s1055 = int_to_ptr.vmem [resolvable:$true] %s1054
          %1057 = dma.hbm_to_vmem [thread:$0]  %s1053, 16, %s1055, [#allocation13]
        $region20: #{tpu_custom_call.1} parent=11 // pred_fallthru
          _
        // Predicated region
        $region21: #{tpu_custom_call.1} parent=11 // pred_check
          %p1058 = pneg %p361
        $region22: #{tpu_custom_call.1} parent=11 // pred_check_branch
          %1060 = sbr.rel (%p1058) target = $region24
        $region23: #{tpu_custom_call.1} parent=11 // pred_region
          %1062 = vsyncadd [#allocation16], 0
          %s1063 = sshll.u32 %s19, 4
          %s1064 = int_to_ptr.hbm [resolvable:$true] %s1063
          %s1065 = sshll.u32 [#allocation15], 4
          %s1066 = int_to_ptr.vmem [resolvable:$true] %s1065
          %1071 = dma.hbm_to_vmem [thread:$0]  %s1064, 512, %s1066, [#allocation16], 128, 128, 8
        $region24: #{tpu_custom_call.1} parent=11 // pred_fallthru
          _
        // Predicated region
        $region25: #{tpu_custom_call.1} parent=11 // pred_check
          %p1072 = pneg %p382
        $region26: #{tpu_custom_call.1} parent=11 // pred_check_branch
          %1074 = sbr.rel (%p1072) target = $region28
        $region27: #{tpu_custom_call.1} parent=11 // pred_region
          %1076 = vsyncadd [#allocation16], 0
          %s1078 = sshll.u32 %s21, 4
          %s1079 = int_to_ptr.hbm [resolvable:$true] %s1078
          %s1080 = sshll.u32 [#allocation17], 4
          %s1081 = int_to_ptr.vmem [resolvable:$true] %s1080
          %1083 = dma.hbm_to_vmem [thread:$0]  %s1079, 16, %s1081, [#allocation16]
        $region28: #{tpu_custom_call.1} parent=11 // pred_fallthru
          _
        // Predicated region
        $region29: #{tpu_custom_call.1} parent=11 // pred_check
          %p1084 = pneg %p403
        $region30: #{tpu_custom_call.1} parent=11 // pred_check_branch
          %1086 = sbr.rel (%p1084) target = $region32
        $region31: #{tpu_custom_call.1} parent=11 // pred_region
          %1088 = vsyncadd [#allocation19], 0
          %s1089 = sshll.u32 %s23, 4
          %s1090 = int_to_ptr.hbm [resolvable:$true] %s1089
          %s1091 = sshll.u32 [#allocation18], 4
          %s1092 = int_to_ptr.vmem [resolvable:$true] %s1091
          %1097 = dma.hbm_to_vmem [thread:$0]  %s1090, 512, %s1092, [#allocation19], 128, 128, 8
        $region32: #{tpu_custom_call.1} parent=11 // pred_fallthru
          _
        // Predicated region
        $region33: #{tpu_custom_call.1} parent=11 // pred_check
          %p1098 = pneg %p424
        $region34: #{tpu_custom_call.1} parent=11 // pred_check_branch
          %1100 = sbr.rel (%p1098) target = $region36
        $region35: #{tpu_custom_call.1} parent=11 // pred_region
          %1102 = vsyncadd [#allocation19], 0
          %s1104 = sshll.u32 %s25, 4
          %s1105 = int_to_ptr.hbm [resolvable:$true] %s1104
          %s1106 = sshll.u32 [#allocation20], 4
          %s1107 = int_to_ptr.vmem [resolvable:$true] %s1106
          %1109 = dma.hbm_to_vmem [thread:$0]  %s1105, 16, %s1107, [#allocation19]
        $region36: #{tpu_custom_call.1} parent=11 // pred_fallthru
          _
        // Predicated region
        $region37: #{tpu_custom_call.1} parent=11 // pred_check
          %p1110 = pneg %p445
        $region38: #{tpu_custom_call.1} parent=11 // pred_check_branch
          %1112 = sbr.rel (%p1110) target = $region40
        $region39: #{tpu_custom_call.1} parent=11 // pred_region
          %1114 = vsyncadd [#allocation22], 0
          %s1115 = sshll.u32 %s27, 4
          %s1116 = int_to_ptr.hbm [resolvable:$true] %s1115
          %s1117 = sshll.u32 [#allocation21], 4
          %s1118 = int_to_ptr.vmem [resolvable:$true] %s1117
          %1123 = dma.hbm_to_vmem [thread:$0]  %s1116, 512, %s1118, [#allocation22], 128, 128, 8
        $region40: #{tpu_custom_call.1} parent=11 // pred_fallthru
          _
        // Predicated region
        $region41: #{tpu_custom_call.1} parent=11 // pred_check
          %p1124 = pneg %p466
        $region42: #{tpu_custom_call.1} parent=11 // pred_check_branch
          %1126 = sbr.rel (%p1124) target = $region44
        $region43: #{tpu_custom_call.1} parent=11 // pred_region
          %1128 = vsyncadd [#allocation22], 0
          %s1130 = sshll.u32 %s29, 4
          %s1131 = int_to_ptr.hbm [resolvable:$true] %s1130
          %s1132 = sshll.u32 [#allocation23], 4
          %s1133 = int_to_ptr.vmem [resolvable:$true] %s1132
          %1135 = dma.hbm_to_vmem [thread:$0]  %s1131, 16, %s1133, [#allocation22]
        $region44: #{tpu_custom_call.1} parent=11 // pred_fallthru
          _
        // Predicated region
        $region45: #{tpu_custom_call.1} parent=11 // pred_check
          %p1136 = pneg %p487
        $region46: #{tpu_custom_call.1} parent=11 // pred_check_branch
          %1138 = sbr.rel (%p1136) target = $region48
        $region47: #{tpu_custom_call.1} parent=11 // pred_region
          %1140 = vsyncadd [#allocation25], 0
          %s1141 = sshll.u32 %s31, 4
          %s1142 = int_to_ptr.hbm [resolvable:$true] %s1141
          %s1143 = sshll.u32 [#allocation24], 4
          %s1144 = int_to_ptr.vmem [resolvable:$true] %s1143
          %1149 = dma.hbm_to_vmem [thread:$0]  %s1142, 512, %s1144, [#allocation25], 128, 128, 8
        $region48: #{tpu_custom_call.1} parent=11 // pred_fallthru
          _
        // Predicated region
        $region49: #{tpu_custom_call.1} parent=11 // pred_check
          %p1150 = pneg %p508
        $region50: #{tpu_custom_call.1} parent=11 // pred_check_branch
          %1152 = sbr.rel (%p1150) target = $region52
        $region51: #{tpu_custom_call.1} parent=11 // pred_region
          %1154 = vsyncadd [#allocation25], 0
          %s1155 = sshll.u32 %s33, 4
          %s1156 = int_to_ptr.hbm [resolvable:$true] %s1155
          %s1157 = sshll.u32 [#allocation26], 4
          %s1158 = int_to_ptr.vmem [resolvable:$true] %s1157
          %1163 = dma.hbm_to_vmem [thread:$0]  %s1156, 512, %s1158, [#allocation25], 128, 128, 8
        $region52: #{tpu_custom_call.1} parent=11 // pred_fallthru
          _
        // Predicated region
        $region53: #{tpu_custom_call.1} parent=11 // pred_check
          %p1164 = pneg %p529
        $region54: #{tpu_custom_call.1} parent=11 // pred_check_branch
          %1166 = sbr.rel (%p1164) target = $region56
        $region55: #{tpu_custom_call.1} parent=11 // pred_region
          %1168 = vsyncadd [#allocation28], 0
          %s1170 = sshll.u32 %s35, 4
          %s1171 = int_to_ptr.hbm [resolvable:$true] %s1170
          %s1172 = sshll.u32 [#allocation27], 4
          %s1173 = int_to_ptr.vmem [resolvable:$true] %s1172
          %1175 = dma.hbm_to_vmem [thread:$0]  %s1171, 16, %s1173, [#allocation28]
        $region56: #{tpu_custom_call.1} parent=11 // pred_fallthru
          _
        // Predicated region
        $region57: #{tpu_custom_call.1} parent=11 // pred_check
          %p1176 = pneg %p550
        $region58: #{tpu_custom_call.1} parent=11 // pred_check_branch
          %1178 = sbr.rel (%p1176) target = $region60
        $region59: #{tpu_custom_call.1} parent=11 // pred_region
          %1180 = vsyncadd [#allocation28], 0
          %s1181 = sshll.u32 %s37, 4
          %s1182 = int_to_ptr.hbm [resolvable:$true] %s1181
          %s1183 = sshll.u32 [#allocation29], 4
          %s1184 = int_to_ptr.vmem [resolvable:$true] %s1183
          %1189 = dma.hbm_to_vmem [thread:$0]  %s1182, 512, %s1184, [#allocation28], 128, 128, 8
        $region60: #{tpu_custom_call.1} parent=11 // pred_fallthru
          _
        // Predicated region
        $region61: #{tpu_custom_call.1} parent=11 // pred_check
          %p1190 = pneg %p571
        $region62: #{tpu_custom_call.1} parent=11 // pred_check_branch
          %1192 = sbr.rel (%p1190) target = $region64
        $region63: #{tpu_custom_call.1} parent=11 // pred_region
          %1194 = vsyncadd [#allocation31], 0
          %s1195 = sshll.u32 %s39, 4
          %s1196 = int_to_ptr.hbm [resolvable:$true] %s1195
          %s1197 = sshll.u32 [#allocation30], 4
          %s1198 = int_to_ptr.vmem [resolvable:$true] %s1197
          %1203 = dma.hbm_to_vmem [thread:$0]  %s1196, 512, %s1198, [#allocation31], 128, 128, 8
        $region64: #{tpu_custom_call.1} parent=11 // pred_fallthru
          _
        // Predicated region
        $region65: #{tpu_custom_call.1} parent=11 // pred_check
          %p1204 = pneg %p592
        $region66: #{tpu_custom_call.1} parent=11 // pred_check_branch
          %1206 = sbr.rel (%p1204) target = $region68
        $region67: #{tpu_custom_call.1} parent=11 // pred_region
          %1208 = vsyncadd [#allocation31], 0
          %s1210 = sshll.u32 %s41, 4
          %s1211 = int_to_ptr.hbm [resolvable:$true] %s1210
          %s1212 = sshll.u32 [#allocation32], 4
          %s1213 = int_to_ptr.vmem [resolvable:$true] %s1212
          %1215 = dma.hbm_to_vmem [thread:$0]  %s1211, 16, %s1213, [#allocation31]
        $region68: #{tpu_custom_call.1} parent=11 // pred_fallthru
          _
        // Predicated region
        $region69: #{tpu_custom_call.1} parent=11 // pred_check
          %p1216 = pneg %p613
        $region70: #{tpu_custom_call.1} parent=11 // pred_check_branch
          %1218 = sbr.rel (%p1216) target = $region72
        $region71: #{tpu_custom_call.1} parent=11 // pred_region
          %1220 = vsyncadd [#allocation34], 0
          %s1221 = sshll.u32 %s43, 4
          %s1222 = int_to_ptr.hbm [resolvable:$true] %s1221
          %s1223 = sshll.u32 [#allocation33], 4
          %s1224 = int_to_ptr.vmem [resolvable:$true] %s1223
          %1229 = dma.hbm_to_vmem [thread:$0]  %s1222, 512, %s1224, [#allocation34], 128, 128, 8
        $region72: #{tpu_custom_call.1} parent=11 // pred_fallthru
          _
        // Predicated region
        $region73: #{tpu_custom_call.1} parent=11 // pred_check
          %p1230 = pneg %p634
        $region74: #{tpu_custom_call.1} parent=11 // pred_check_branch
          %1232 = sbr.rel (%p1230) target = $region76
        $region75: #{tpu_custom_call.1} parent=11 // pred_region
          %1234 = vsyncadd [#allocation34], 0
          %s1236 = sshll.u32 %s45, 4
          %s1237 = int_to_ptr.hbm [resolvable:$true] %s1236
          %s1238 = sshll.u32 [#allocation35], 4
          %s1239 = int_to_ptr.vmem [resolvable:$true] %s1238
          %1241 = dma.hbm_to_vmem [thread:$0]  %s1237, 16, %s1239, [#allocation34]
        $region76: #{tpu_custom_call.1} parent=11 // pred_fallthru
          _
        // Predicated region
        $region77: #{tpu_custom_call.1} parent=11 // pred_check
          %p1242 = pneg %p655
        $region78: #{tpu_custom_call.1} parent=11 // pred_check_branch
          %1244 = sbr.rel (%p1242) target = $region80
        $region79: #{tpu_custom_call.1} parent=11 // pred_region
          %1246 = vsyncadd [#allocation37], 0
          %s1247 = sshll.u32 %s47, 4
          %s1248 = int_to_ptr.hbm [resolvable:$true] %s1247
          %s1249 = sshll.u32 [#allocation36], 4
          %s1250 = int_to_ptr.vmem [resolvable:$true] %s1249
          %1255 = dma.hbm_to_vmem [thread:$0]  %s1248, 512, %s1250, [#allocation37], 128, 128, 8
        $region80: #{tpu_custom_call.1} parent=11 // pred_fallthru
          _
        // Predicated region
        $region81: #{tpu_custom_call.1} parent=11 // pred_check
          %p1256 = pneg %p676
        $region82: #{tpu_custom_call.1} parent=11 // pred_check_branch
          %1258 = sbr.rel (%p1256) target = $region84
        $region83: #{tpu_custom_call.1} parent=11 // pred_region
          %1260 = vsyncadd [#allocation37], 0
          %s1261 = sshll.u32 %s49, 4
          %s1262 = int_to_ptr.hbm [resolvable:$true] %s1261
          %s1263 = sshll.u32 [#allocation38], 4
          %s1264 = int_to_ptr.vmem [resolvable:$true] %s1263
          %1269 = dma.hbm_to_vmem [thread:$0]  %s1262, 512, %s1264, [#allocation37], 128, 128, 8
        $region84: #{tpu_custom_call.1} parent=11 // pred_fallthru
          _
        // Predicated region
        $region85: #{tpu_custom_call.1} parent=11 // pred_check
          %p1270 = pneg %p697
        $region86: #{tpu_custom_call.1} parent=11 // pred_check_branch
          %1272 = sbr.rel (%p1270) target = $region88
        $region87: #{tpu_custom_call.1} parent=11 // pred_region
          %1274 = vsyncadd [#allocation40], 0
          %s1276 = sshll.u32 %s51, 4
          %s1277 = int_to_ptr.hbm [resolvable:$true] %s1276
          %s1278 = sshll.u32 [#allocation39], 4
          %s1279 = int_to_ptr.vmem [resolvable:$true] %s1278
          %1281 = dma.hbm_to_vmem [thread:$0]  %s1277, 16, %s1279, [#allocation40]
        $region88: #{tpu_custom_call.1} parent=11 // pred_fallthru
          _
        // Predicated region
        $region89: #{tpu_custom_call.1} parent=11 // pred_check
          %p1282 = pneg %p718
        $region90: #{tpu_custom_call.1} parent=11 // pred_check_branch
          %1284 = sbr.rel (%p1282) target = $region92
        $region91: #{tpu_custom_call.1} parent=11 // pred_region
          %1286 = vsyncadd [#allocation40], 0
          %s1288 = sshll.u32 %s53, 4
          %s1289 = int_to_ptr.hbm [resolvable:$true] %s1288
          %s1290 = sshll.u32 [#allocation41], 4
          %s1291 = int_to_ptr.vmem [resolvable:$true] %s1290
          %1293 = dma.hbm_to_vmem [thread:$0]  %s1289, 16, %s1291, [#allocation40]
        $region92: #{tpu_custom_call.1} parent=11 // pred_fallthru
          _
        // Predicated region
        $region93: #{tpu_custom_call.1} parent=11 // pred_check
          %p1294 = pneg %p739
        $region94: #{tpu_custom_call.1} parent=11 // pred_check_branch
          %1296 = sbr.rel (%p1294) target = $region96
        $region95: #{tpu_custom_call.1} parent=11 // pred_region
          %1298 = vsyncadd [#allocation43], 0
          %s1300 = sshll.u32 %s55, 4
          %s1301 = int_to_ptr.hbm [resolvable:$true] %s1300
          %s1302 = sshll.u32 [#allocation42], 4
          %s1303 = int_to_ptr.vmem [resolvable:$true] %s1302
          %1305 = dma.hbm_to_vmem [thread:$0]  %s1301, 16, %s1303, [#allocation43]
        $region96: #{tpu_custom_call.1} parent=11 // pred_fallthru
          _
        // Predicated region
        $region97: #{tpu_custom_call.1} parent=11 // pred_check
          %p1306 = pneg %p760
        $region98: #{tpu_custom_call.1} parent=11 // pred_check_branch
          %1308 = sbr.rel (%p1306) target = $region100
        $region99: #{tpu_custom_call.1} parent=11 // pred_region
          %1310 = vsyncadd [#allocation43], 0
          %s1312 = sshll.u32 %s57, 4
          %s1313 = int_to_ptr.hbm [resolvable:$true] %s1312
          %s1314 = sshll.u32 [#allocation44], 4
          %s1315 = int_to_ptr.vmem [resolvable:$true] %s1314
          %1317 = dma.hbm_to_vmem [thread:$0]  %s1313, 16, %s1315, [#allocation43]
        $region100: #{tpu_custom_call.1} parent=11 // pred_fallthru
          _
        // Predicated region
        $region101: #{tpu_custom_call.1} parent=11 // pred_check
          %p1318 = pneg %p781
        $region102: #{tpu_custom_call.1} parent=11 // pred_check_branch
          %1320 = sbr.rel (%p1318) target = $region104
        $region103: #{tpu_custom_call.1} parent=11 // pred_region
          %1322 = vsyncadd [#allocation46], 0
          %s1324 = sshll.u32 %s59, 4
          %s1325 = int_to_ptr.hbm [resolvable:$true] %s1324
          %s1326 = sshll.u32 [#allocation45], 4
          %s1327 = int_to_ptr.vmem [resolvable:$true] %s1326
          %1329 = dma.hbm_to_vmem [thread:$0]  %s1325, 16, %s1327, [#allocation46]
        $region104: #{tpu_custom_call.1} parent=11 // pred_fallthru
          _
        // Predicated region
        $region105: #{tpu_custom_call.1} parent=11 // pred_check
          %p1330 = pneg %p802
        $region106: #{tpu_custom_call.1} parent=11 // pred_check_branch
          %1332 = sbr.rel (%p1330) target = $region108
        $region107: #{tpu_custom_call.1} parent=11 // pred_region
          %1334 = vsyncadd [#allocation46], 0
          %s1336 = sshll.u32 %s61, 4
          %s1337 = int_to_ptr.hbm [resolvable:$true] %s1336
          %s1338 = sshll.u32 [#allocation47], 4
          %s1339 = int_to_ptr.vmem [resolvable:$true] %s1338
          %1341 = dma.hbm_to_vmem [thread:$0]  %s1337, 128, %s1339, [#allocation46]
        $region108: #{tpu_custom_call.1} parent=11 // pred_fallthru
          _
        // Predicated region
        $region109: #{tpu_custom_call.1} parent=11 // pred_check
          %p1342 = pneg %p823
        $region110: #{tpu_custom_call.1} parent=11 // pred_check_branch
          %1344 = sbr.rel (%p1342) target = $region112
        $region111: #{tpu_custom_call.1} parent=11 // pred_region
          %1346 = vsyncadd [#allocation49], 0
          %s1348 = sshll.u32 %s63, 4
          %s1349 = int_to_ptr.hbm [resolvable:$true] %s1348
          %s1350 = sshll.u32 [#allocation48], 4
          %s1351 = int_to_ptr.vmem [resolvable:$true] %s1350
          %1353 = dma.hbm_to_vmem [thread:$0]  %s1349, 16, %s1351, [#allocation49]
        $region112: #{tpu_custom_call.1} parent=11 // pred_fallthru
          _
        // Predicated region
        $region113: #{tpu_custom_call.1} parent=11 // pred_check
          %p1354 = pneg %p844
        $region114: #{tpu_custom_call.1} parent=11 // pred_check_branch
          %1356 = sbr.rel (%p1354) target = $region116
        $region115: #{tpu_custom_call.1} parent=11 // pred_region
          %1358 = vsyncadd [#allocation49], 0
          %s1359 = sshll.u32 %s65, 4
          %s1360 = int_to_ptr.hbm [resolvable:$true] %s1359
          %s1361 = sshll.u32 [#allocation50], 4
          %s1362 = int_to_ptr.vmem [resolvable:$true] %s1361
          %1367 = dma.hbm_to_vmem [thread:$0]  %s1360, 512, %s1362, [#allocation49], 128, 128, 8
        $region116: #{tpu_custom_call.1} parent=11 // pred_fallthru
          _
        // Predicated region
        $region117: #{tpu_custom_call.1} parent=11 // pred_check
          %p1368 = pneg %p865
        $region118: #{tpu_custom_call.1} parent=11 // pred_check_branch
          %1370 = sbr.rel (%p1368) target = $region120
        $region119: #{tpu_custom_call.1} parent=11 // pred_region
          %1372 = vsyncadd [#allocation52], 0
          %s1373 = sshll.u32 %s67, 4
          %s1374 = int_to_ptr.hbm [resolvable:$true] %s1373
          %s1375 = sshll.u32 [#allocation51], 4
          %s1376 = int_to_ptr.vmem [resolvable:$true] %s1375
          %1381 = dma.hbm_to_vmem [thread:$0]  %s1374, 512, %s1376, [#allocation52], 128, 128, 8
        $region120: #{tpu_custom_call.1} parent=11 // pred_fallthru
          _
        // Predicated region
        $region121: #{tpu_custom_call.1} parent=11 // pred_check
          %p1382 = pneg %p886
        $region122: #{tpu_custom_call.1} parent=11 // pred_check_branch
          %1384 = sbr.rel (%p1382) target = $region124
        $region123: #{tpu_custom_call.1} parent=11 // pred_region
          %1386 = vsyncadd [#allocation52], 0
          %s1387 = sshll.u32 %s69, 4
          %s1388 = int_to_ptr.hbm [resolvable:$true] %s1387
          %s1389 = sshll.u32 [#allocation53], 4
          %s1390 = int_to_ptr.vmem [resolvable:$true] %s1389
          %1395 = dma.hbm_to_vmem [thread:$0]  %s1388, 512, %s1390, [#allocation52], 128, 128, 8
        $region124: #{tpu_custom_call.1} parent=11 // pred_fallthru
          _
        // Predicated region
        $region125: #{tpu_custom_call.1} parent=11 // pred_check
          %p1396 = pneg %p907
        $region126: #{tpu_custom_call.1} parent=11 // pred_check_branch
          %1398 = sbr.rel (%p1396) target = $region128
        $region127: #{tpu_custom_call.1} parent=11 // pred_region
          %1400 = vsyncadd [#allocation55], 0
          %s1402 = sshll.u32 %s71, 4
          %s1403 = int_to_ptr.hbm [resolvable:$true] %s1402
          %s1404 = sshll.u32 [#allocation54], 4
          %s1405 = int_to_ptr.vmem [resolvable:$true] %s1404
          %1407 = dma.hbm_to_vmem [thread:$0]  %s1403, 16, %s1405, [#allocation55]
        $region128: #{tpu_custom_call.1} parent=11 // pred_fallthru
          _
        // Predicated region
        $region129: #{tpu_custom_call.1} parent=11 // pred_check
          %p1408 = pneg %p928
        $region130: #{tpu_custom_call.1} parent=11 // pred_check_branch
          %1410 = sbr.rel (%p1408) target = $region132
        $region131: #{tpu_custom_call.1} parent=11 // pred_region
          _
        $region132: #{tpu_custom_call.1} parent=11 // pred_fallthru
          _
        // Predicated region
        $region133: #{tpu_custom_call.1} parent=11 // pred_check
          %p1411 = pneg %p949
        $region134: #{tpu_custom_call.1} parent=11 // pred_check_branch
          %1413 = sbr.rel (%p1411) target = $region136
        $region135: #{tpu_custom_call.1} parent=11 // pred_region
          %1415 = vsyncadd [#allocation55], 0
          %s1416 = sshll.u32 %s75, 4
          %s1417 = int_to_ptr.hbm [resolvable:$true] %s1416
          %s1418 = sshll.u32 [#allocation56], 4
          %s1419 = int_to_ptr.vmem [resolvable:$true] %s1418
          %1424 = dma.hbm_to_vmem [thread:$0]  %s1417, 32, %s1419, [#allocation55], 16, 16, 1
        $region136: #{tpu_custom_call.1} parent=11 // pred_fallthru
          _
        // Predicated region
        $region137: #{tpu_custom_call.1} parent=11 // pred_check
          %p1425 = pneg %p970
        $region138: #{tpu_custom_call.1} parent=11 // pred_check_branch
          %1427 = sbr.rel (%p1425) target = $region140
        $region139: #{tpu_custom_call.1} parent=11 // pred_region
          _
        $region140: #{tpu_custom_call.1} parent=11 // pred_fallthru
          _
        // Predicated region
        $region141: #{tpu_custom_call.1} parent=11 // pred_check
          %p1428 = pneg %p991
        $region142: #{tpu_custom_call.1} parent=11 // pred_check_branch
          %1430 = sbr.rel (%p1428) target = $region144
        $region143: #{tpu_custom_call.1} parent=11 // pred_region
          _
        $region144: #{tpu_custom_call.1} parent=11 // pred_fallthru
          _
      $region12: #{tpu_custom_call.1} parent=5 // pred_fallthru
        _
      %p1431 = scmp.lt.s32.totalorder %s116, 2
      // Predicated region
      $region145: #{tpu_custom_call.1} parent=5 // pred_check
        %p1432 = pneg %p1431
      $region146: #{tpu_custom_call.1} parent=5 // pred_check_branch
        %1434 = sbr.rel (%p1432) target = $region148
      $region147: #{tpu_custom_call.1} parent=5 // pred_region
        // Predicated region
        $region149: #{tpu_custom_call.1} parent=147 // pred_check
          %p1435 = pneg %p136
        $region150: #{tpu_custom_call.1} parent=147 // pred_check_branch
          %1437 = sbr.rel (%p1435) target = $region152
        $region151: #{tpu_custom_call.1} parent=147 // pred_region
          %s1438 = sand.u32 %s126, 1
          %s1439 = scalar_lea.sflag [#allocation4], %s1438
          %s1440 = sand.u32 %s126, 1
          %s1441 = smul.addr %s1440, 8
          %s1442 = scalar_lea.vmem [#allocation3], %s1441
          %1444 = vsyncadd %s1439, 0
          %s1445 = smul.addr %s116, 8
          %s1446 = scalar_lea.hbm %s1, %s1445
          %s1448 = sshll.u32 %s1446, 4
          %s1449 = int_to_ptr.hbm [resolvable:$true] %s1448
          %s1450 = sshll.u32 %s1442, 4
          %s1451 = int_to_ptr.vmem [resolvable:$true] %s1450
          %1453 = dma.hbm_to_vmem [thread:$0]  %s1449, 128, %s1451, %s1439
        $region152: #{tpu_custom_call.1} parent=147 // pred_fallthru
          _
        // Predicated region
        $region153: #{tpu_custom_call.1} parent=147 // pred_check
          %p1454 = pneg %p162
        $region154: #{tpu_custom_call.1} parent=147 // pred_check_branch
          %1456 = sbr.rel (%p1454) target = $region156
        $region155: #{tpu_custom_call.1} parent=147 // pred_region
          %s1457 = sand.u32 %s116, 1
          %s1458 = scalar_lea.sflag [#allocation7], %s1457
          %s1459 = sand.u32 %s152, 1
          %s1460 = smul.addr %s1459, 8
          %s1461 = scalar_lea.vmem [#allocation6], %s1460
          %1463 = vsyncadd %s1458, 0
          %s1464 = smul.addr %s116, 8
          %s1465 = scalar_lea.hbm %s3, %s1464
          %s1467 = sshll.u32 %s1465, 4
          %s1468 = int_to_ptr.hbm [resolvable:$true] %s1467
          %s1469 = sshll.u32 %s1461, 4
          %s1470 = int_to_ptr.vmem [resolvable:$true] %s1469
          %1472 = dma.hbm_to_vmem [thread:$0]  %s1468, 128, %s1470, %s1458
        $region156: #{tpu_custom_call.1} parent=147 // pred_fallthru
          _
        // Predicated region
        $region157: #{tpu_custom_call.1} parent=147 // pred_check
          %p1473 = pneg %p188
        $region158: #{tpu_custom_call.1} parent=147 // pred_check_branch
          %1475 = sbr.rel (%p1473) target = $region160
        $region159: #{tpu_custom_call.1} parent=147 // pred_region
          %s1476 = sand.u32 %s116, 1
          %s1477 = scalar_lea.sflag [#allocation7], %s1476
          %s1478 = sand.u32 %s178, 1
          %s1479 = smul.addr %s1478, 8
          %s1480 = scalar_lea.vmem [#allocation8], %s1479
          %1482 = vsyncadd %s1477, 0
          %s1483 = smul.addr %s116, 8
          %s1484 = scalar_lea.hbm %s5, %s1483
          %s1486 = sshll.u32 %s1484, 4
          %s1487 = int_to_ptr.hbm [resolvable:$true] %s1486
          %s1488 = sshll.u32 %s1480, 4
          %s1489 = int_to_ptr.vmem [resolvable:$true] %s1488
          %1491 = dma.hbm_to_vmem [thread:$0]  %s1487, 128, %s1489, %s1477
        $region160: #{tpu_custom_call.1} parent=147 // pred_fallthru
          _
        // Predicated region
        $region161: #{tpu_custom_call.1} parent=147 // pred_check
          %p1492 = pneg %p214
        $region162: #{tpu_custom_call.1} parent=147 // pred_check_branch
          %1494 = sbr.rel (%p1492) target = $region164
        $region163: #{tpu_custom_call.1} parent=147 // pred_region
          %p1495 = scmp.lt.s32.totalorder %s116, 1
          %s1496 = scalar_select %p1495, %s116, 1
          %s1497 = scalar_lea.vmem %s7, %s1496
        $region164: #{tpu_custom_call.1} parent=147 // pred_fallthru
          _
        // Predicated region
        $region165: #{tpu_custom_call.1} parent=147 // pred_check
          %p1498 = pneg %p240
        $region166: #{tpu_custom_call.1} parent=147 // pred_check_branch
          %1500 = sbr.rel (%p1498) target = $region168
        $region167: #{tpu_custom_call.1} parent=147 // pred_region
          %s1501 = sand.u32 %s116, 1
          %s1502 = scalar_lea.sflag [#allocation10], %s1501
          %s1503 = sand.u32 %s230, 1
          %s1504 = smul.addr %s1503, 8
          %s1505 = scalar_lea.vmem [#allocation9], %s1504
          %1507 = vsyncadd %s1502, 0
          %s1508 = smul.addr %s116, 8
          %s1509 = scalar_lea.hbm %s9, %s1508
          %s1511 = sshll.u32 %s1509, 4
          %s1512 = int_to_ptr.hbm [resolvable:$true] %s1511
          %s1513 = sshll.u32 %s1505, 4
          %s1514 = int_to_ptr.vmem [resolvable:$true] %s1513
          %1516 = dma.hbm_to_vmem [thread:$0]  %s1512, 128, %s1514, %s1502
        $region168: #{tpu_custom_call.1} parent=147 // pred_fallthru
          _
        // Predicated region
        $region169: #{tpu_custom_call.1} parent=147 // pred_check
          %p1517 = pneg %p266
        $region170: #{tpu_custom_call.1} parent=147 // pred_check_branch
          %1519 = sbr.rel (%p1517) target = $region172
        $region171: #{tpu_custom_call.1} parent=147 // pred_region
          %p1520 = scmp.lt.s32.totalorder %s116, 1
          %s1521 = scalar_select %p1520, %s116, 1
          %s1522 = smul.addr %s1521, 8
          %s1523 = scalar_lea.vmem %s11, %s1522
        $region172: #{tpu_custom_call.1} parent=147 // pred_fallthru
          _
        // Predicated region
        $region173: #{tpu_custom_call.1} parent=147 // pred_check
          %p1524 = pneg %p292
        $region174: #{tpu_custom_call.1} parent=147 // pred_check_branch
          %1526 = sbr.rel (%p1524) target = $region176
        $region175: #{tpu_custom_call.1} parent=147 // pred_region
          %s1527 = sand.u32 %s116, 1
          %s1528 = scalar_lea.sflag [#allocation10], %s1527
          %s1529 = sand.u32 %s282, 1
          %s1530 = scalar_lea.vmem [#allocation11], %s1529
          %1532 = vsyncadd %s1528, 0
          %s1533 = scalar_lea.hbm %s13, %s116
          %s1535 = sshll.u32 %s1533, 4
          %s1536 = int_to_ptr.hbm [resolvable:$true] %s1535
          %s1537 = sshll.u32 %s1530, 4
          %s1538 = int_to_ptr.vmem [resolvable:$true] %s1537
          %1540 = dma.hbm_to_vmem [thread:$0]  %s1536, 16, %s1538, %s1528
        $region176: #{tpu_custom_call.1} parent=147 // pred_fallthru
          _
      $region148: #{tpu_custom_call.1} parent=5 // pred_fallthru
        _
      %p1541 = scmp.le.s32.totalorder 1, %s116
      %p1542 = scmp.lt.s32.totalorder %s116, 3
      %p1543 = pnand %p1541, %p1542
      %p1544 = pneg %p1543
      // Predicated region
      $region177: #{tpu_custom_call.1} parent=5 // pred_check
        _
      $region178: #{tpu_custom_call.1} parent=5 // pred_check_branch
        %1546 = sbr.rel (%p1543) target = $region180
      $region179: #{tpu_custom_call.1} parent=5 // pred_region
        %s1547 = ssub.s32 %s116, 1
        %s1548 = sand.u32 %s129, 1
        %s1549 = scalar_lea.sflag [#allocation4], %s1548
        %s1550 = sand.u32 %s129, 1
        %s1551 = smul.addr %s1550, 8
        %s1552 = scalar_lea.vmem [#allocation3], %s1551
        // Predicated region
        $region181: #{tpu_custom_call.1} parent=179 // pred_check
          %p1553 = pneg %p142
        $region182: #{tpu_custom_call.1} parent=179 // pred_check_branch
          %1555 = sbr.rel (%p1553) target = $region184
        $region183: #{tpu_custom_call.1} parent=179 // pred_region
          %1557 = dma.done %s1549, 128
        $region184: #{tpu_custom_call.1} parent=179 // pred_fallthru
          _
        %s1558 = sand.u32 %s121, 1
        %s1559 = scalar_lea.sflag [#allocation7], %s1558
        %s1560 = sand.u32 %s155, 1
        %s1561 = smul.addr %s1560, 8
        %s1562 = scalar_lea.vmem [#allocation6], %s1561
        // Predicated region
        $region185: #{tpu_custom_call.1} parent=179 // pred_check
          %p1563 = pneg %p168
        $region186: #{tpu_custom_call.1} parent=179 // pred_check_branch
          %1565 = sbr.rel (%p1563) target = $region188
        $region187: #{tpu_custom_call.1} parent=179 // pred_region
          %1567 = dma.done %s1559, 128
        $region188: #{tpu_custom_call.1} parent=179 // pred_fallthru
          _
        %s1568 = sand.u32 %s121, 1
        %s1569 = scalar_lea.sflag [#allocation7], %s1568
        %s1570 = sand.u32 %s181, 1
        %s1571 = smul.addr %s1570, 8
        %s1572 = scalar_lea.vmem [#allocation8], %s1571
        // Predicated region
        $region189: #{tpu_custom_call.1} parent=179 // pred_check
          %p1573 = pneg %p194
        $region190: #{tpu_custom_call.1} parent=179 // pred_check_branch
          %1575 = sbr.rel (%p1573) target = $region192
        $region191: #{tpu_custom_call.1} parent=179 // pred_region
          %1577 = dma.done %s1569, 128
        $region192: #{tpu_custom_call.1} parent=179 // pred_fallthru
          _
        %s1578 = sand.u32 %s121, 1
        %s1579 = scalar_lea.sflag [#allocation10], %s1578
        %s1580 = sand.u32 %s233, 1
        %s1581 = smul.addr %s1580, 8
        %s1582 = scalar_lea.vmem [#allocation9], %s1581
        // Predicated region
        $region193: #{tpu_custom_call.1} parent=179 // pred_check
          %p1583 = pneg %p246
        $region194: #{tpu_custom_call.1} parent=179 // pred_check_branch
          %1585 = sbr.rel (%p1583) target = $region196
        $region195: #{tpu_custom_call.1} parent=179 // pred_region
          %1587 = dma.done %s1579, 128
        $region196: #{tpu_custom_call.1} parent=179 // pred_fallthru
          _
        %s1588 = sand.u32 %s121, 1
        %s1589 = scalar_lea.sflag [#allocation10], %s1588
        %s1590 = sand.u32 %s285, 1
        %s1591 = scalar_lea.vmem [#allocation11], %s1590
        // Predicated region
        $region197: #{tpu_custom_call.1} parent=179 // pred_check
          %p1592 = pneg %p298
        $region198: #{tpu_custom_call.1} parent=179 // pred_check_branch
          %1594 = sbr.rel (%p1592) target = $region200
        $region199: #{tpu_custom_call.1} parent=179 // pred_region
          %1596 = dma.done %s1589, 16
        $region200: #{tpu_custom_call.1} parent=179 // pred_fallthru
          _
        // Predicated region
        $region201: #{tpu_custom_call.1} parent=179 // pred_check
          %p1597 = pneg %p319
        $region202: #{tpu_custom_call.1} parent=179 // pred_check_branch
          %1599 = sbr.rel (%p1597) target = $region204
        $region203: #{tpu_custom_call.1} parent=179 // pred_region
          %1601 = dma.done [#allocation13], 512
        $region204: #{tpu_custom_call.1} parent=179 // pred_fallthru
          _
        // Predicated region
        $region205: #{tpu_custom_call.1} parent=179 // pred_check
          %p1602 = pneg %p340
        $region206: #{tpu_custom_call.1} parent=179 // pred_check_branch
          %1604 = sbr.rel (%p1602) target = $region208
        $region207: #{tpu_custom_call.1} parent=179 // pred_region
          %1606 = dma.done [#allocation13], 16
        $region208: #{tpu_custom_call.1} parent=179 // pred_fallthru
          _
        // Predicated region
        $region209: #{tpu_custom_call.1} parent=179 // pred_check
          %p1607 = pneg %p361
        $region210: #{tpu_custom_call.1} parent=179 // pred_check_branch
          %1609 = sbr.rel (%p1607) target = $region212
        $region211: #{tpu_custom_call.1} parent=179 // pred_region
          %1611 = dma.done [#allocation16], 512
        $region212: #{tpu_custom_call.1} parent=179 // pred_fallthru
          _
        // Predicated region
        $region213: #{tpu_custom_call.1} parent=179 // pred_check
          %p1612 = pneg %p382
        $region214: #{tpu_custom_call.1} parent=179 // pred_check_branch
          %1614 = sbr.rel (%p1612) target = $region216
        $region215: #{tpu_custom_call.1} parent=179 // pred_region
          %1616 = dma.done [#allocation16], 16
        $region216: #{tpu_custom_call.1} parent=179 // pred_fallthru
          _
        // Predicated region
        $region217: #{tpu_custom_call.1} parent=179 // pred_check
          %p1617 = pneg %p403
        $region218: #{tpu_custom_call.1} parent=179 // pred_check_branch
          %1619 = sbr.rel (%p1617) target = $region220
        $region219: #{tpu_custom_call.1} parent=179 // pred_region
          %1621 = dma.done [#allocation19], 512
        $region220: #{tpu_custom_call.1} parent=179 // pred_fallthru
          _
        // Predicated region
        $region221: #{tpu_custom_call.1} parent=179 // pred_check
          %p1622 = pneg %p424
        $region222: #{tpu_custom_call.1} parent=179 // pred_check_branch
          %1624 = sbr.rel (%p1622) target = $region224
        $region223: #{tpu_custom_call.1} parent=179 // pred_region
          %1626 = dma.done [#allocation19], 16
        $region224: #{tpu_custom_call.1} parent=179 // pred_fallthru
          _
        // Predicated region
        $region225: #{tpu_custom_call.1} parent=179 // pred_check
          %p1627 = pneg %p445
        $region226: #{tpu_custom_call.1} parent=179 // pred_check_branch
          %1629 = sbr.rel (%p1627) target = $region228
        $region227: #{tpu_custom_call.1} parent=179 // pred_region
          %1631 = dma.done [#allocation22], 512
        $region228: #{tpu_custom_call.1} parent=179 // pred_fallthru
          _
        // Predicated region
        $region229: #{tpu_custom_call.1} parent=179 // pred_check
          %p1632 = pneg %p466
        $region230: #{tpu_custom_call.1} parent=179 // pred_check_branch
          %1634 = sbr.rel (%p1632) target = $region232
        $region231: #{tpu_custom_call.1} parent=179 // pred_region
          %1636 = dma.done [#allocation22], 16
        $region232: #{tpu_custom_call.1} parent=179 // pred_fallthru
          _
        // Predicated region
        $region233: #{tpu_custom_call.1} parent=179 // pred_check
          %p1637 = pneg %p487
        $region234: #{tpu_custom_call.1} parent=179 // pred_check_branch
          %1639 = sbr.rel (%p1637) target = $region236
        $region235: #{tpu_custom_call.1} parent=179 // pred_region
          %1641 = dma.done [#allocation25], 512
        $region236: #{tpu_custom_call.1} parent=179 // pred_fallthru
          _
        // Predicated region
        $region237: #{tpu_custom_call.1} parent=179 // pred_check
          %p1642 = pneg %p508
        $region238: #{tpu_custom_call.1} parent=179 // pred_check_branch
          %1644 = sbr.rel (%p1642) target = $region240
        $region239: #{tpu_custom_call.1} parent=179 // pred_region
          %1646 = dma.done [#allocation25], 512
        $region240: #{tpu_custom_call.1} parent=179 // pred_fallthru
          _
        // Predicated region
        $region241: #{tpu_custom_call.1} parent=179 // pred_check
          %p1647 = pneg %p529
        $region242: #{tpu_custom_call.1} parent=179 // pred_check_branch
          %1649 = sbr.rel (%p1647) target = $region244
        $region243: #{tpu_custom_call.1} parent=179 // pred_region
          %1651 = dma.done [#allocation28], 16
        $region244: #{tpu_custom_call.1} parent=179 // pred_fallthru
          _
        // Predicated region
        $region245: #{tpu_custom_call.1} parent=179 // pred_check
          %p1652 = pneg %p550
        $region246: #{tpu_custom_call.1} parent=179 // pred_check_branch
          %1654 = sbr.rel (%p1652) target = $region248
        $region247: #{tpu_custom_call.1} parent=179 // pred_region
          %1656 = dma.done [#allocation28], 512
        $region248: #{tpu_custom_call.1} parent=179 // pred_fallthru
          _
        // Predicated region
        $region249: #{tpu_custom_call.1} parent=179 // pred_check
          %p1657 = pneg %p571
        $region250: #{tpu_custom_call.1} parent=179 // pred_check_branch
          %1659 = sbr.rel (%p1657) target = $region252
        $region251: #{tpu_custom_call.1} parent=179 // pred_region
          %1661 = dma.done [#allocation31], 512
        $region252: #{tpu_custom_call.1} parent=179 // pred_fallthru
          _
        // Predicated region
        $region253: #{tpu_custom_call.1} parent=179 // pred_check
          %p1662 = pneg %p592
        $region254: #{tpu_custom_call.1} parent=179 // pred_check_branch
          %1664 = sbr.rel (%p1662) target = $region256
        $region255: #{tpu_custom_call.1} parent=179 // pred_region
          %1666 = dma.done [#allocation31], 16
        $region256: #{tpu_custom_call.1} parent=179 // pred_fallthru
          _
        // Predicated region
        $region257: #{tpu_custom_call.1} parent=179 // pred_check
          %p1667 = pneg %p613
        $region258: #{tpu_custom_call.1} parent=179 // pred_check_branch
          %1669 = sbr.rel (%p1667) target = $region260
        $region259: #{tpu_custom_call.1} parent=179 // pred_region
          %1671 = dma.done [#allocation34], 512
        $region260: #{tpu_custom_call.1} parent=179 // pred_fallthru
          _
        // Predicated region
        $region261: #{tpu_custom_call.1} parent=179 // pred_check
          %p1672 = pneg %p634
        $region262: #{tpu_custom_call.1} parent=179 // pred_check_branch
          %1674 = sbr.rel (%p1672) target = $region264
        $region263: #{tpu_custom_call.1} parent=179 // pred_region
          %1676 = dma.done [#allocation34], 16
        $region264: #{tpu_custom_call.1} parent=179 // pred_fallthru
          _
        // Predicated region
        $region265: #{tpu_custom_call.1} parent=179 // pred_check
          %p1677 = pneg %p655
        $region266: #{tpu_custom_call.1} parent=179 // pred_check_branch
          %1679 = sbr.rel (%p1677) target = $region268
        $region267: #{tpu_custom_call.1} parent=179 // pred_region
          %1681 = dma.done [#allocation37], 512
        $region268: #{tpu_custom_call.1} parent=179 // pred_fallthru
          _
        // Predicated region
        $region269: #{tpu_custom_call.1} parent=179 // pred_check
          %p1682 = pneg %p676
        $region270: #{tpu_custom_call.1} parent=179 // pred_check_branch
          %1684 = sbr.rel (%p1682) target = $region272
        $region271: #{tpu_custom_call.1} parent=179 // pred_region
          %1686 = dma.done [#allocation37], 512
        $region272: #{tpu_custom_call.1} parent=179 // pred_fallthru
          _
        // Predicated region
        $region273: #{tpu_custom_call.1} parent=179 // pred_check
          %p1687 = pneg %p697
        $region274: #{tpu_custom_call.1} parent=179 // pred_check_branch
          %1689 = sbr.rel (%p1687) target = $region276
        $region275: #{tpu_custom_call.1} parent=179 // pred_region
          %1691 = dma.done [#allocation40], 16
        $region276: #{tpu_custom_call.1} parent=179 // pred_fallthru
          _
        // Predicated region
        $region277: #{tpu_custom_call.1} parent=179 // pred_check
          %p1692 = pneg %p718
        $region278: #{tpu_custom_call.1} parent=179 // pred_check_branch
          %1694 = sbr.rel (%p1692) target = $region280
        $region279: #{tpu_custom_call.1} parent=179 // pred_region
          %1696 = dma.done [#allocation40], 16
        $region280: #{tpu_custom_call.1} parent=179 // pred_fallthru
          _
        // Predicated region
        $region281: #{tpu_custom_call.1} parent=179 // pred_check
          %p1697 = pneg %p739
        $region282: #{tpu_custom_call.1} parent=179 // pred_check_branch
          %1699 = sbr.rel (%p1697) target = $region284
        $region283: #{tpu_custom_call.1} parent=179 // pred_region
          %1701 = dma.done [#allocation43], 16
        $region284: #{tpu_custom_call.1} parent=179 // pred_fallthru
          _
        // Predicated region
        $region285: #{tpu_custom_call.1} parent=179 // pred_check
          %p1702 = pneg %p760
        $region286: #{tpu_custom_call.1} parent=179 // pred_check_branch
          %1704 = sbr.rel (%p1702) target = $region288
        $region287: #{tpu_custom_call.1} parent=179 // pred_region
          %1706 = dma.done [#allocation43], 16
        $region288: #{tpu_custom_call.1} parent=179 // pred_fallthru
          _
        // Predicated region
        $region289: #{tpu_custom_call.1} parent=179 // pred_check
          %p1707 = pneg %p781
        $region290: #{tpu_custom_call.1} parent=179 // pred_check_branch
          %1709 = sbr.rel (%p1707) target = $region292
        $region291: #{tpu_custom_call.1} parent=179 // pred_region
          %1711 = dma.done [#allocation46], 16
        $region292: #{tpu_custom_call.1} parent=179 // pred_fallthru
          _
        // Predicated region
        $region293: #{tpu_custom_call.1} parent=179 // pred_check
          %p1712 = pneg %p802
        $region294: #{tpu_custom_call.1} parent=179 // pred_check_branch
          %1714 = sbr.rel (%p1712) target = $region296
        $region295: #{tpu_custom_call.1} parent=179 // pred_region
          %1716 = dma.done [#allocation46], 128
        $region296: #{tpu_custom_call.1} parent=179 // pred_fallthru
          _
        // Predicated region
        $region297: #{tpu_custom_call.1} parent=179 // pred_check
          %p1717 = pneg %p823
        $region298: #{tpu_custom_call.1} parent=179 // pred_check_branch
          %1719 = sbr.rel (%p1717) target = $region300
        $region299: #{tpu_custom_call.1} parent=179 // pred_region
          %1721 = dma.done [#allocation49], 16
        $region300: #{tpu_custom_call.1} parent=179 // pred_fallthru
          _
        // Predicated region
        $region301: #{tpu_custom_call.1} parent=179 // pred_check
          %p1722 = pneg %p844
        $region302: #{tpu_custom_call.1} parent=179 // pred_check_branch
          %1724 = sbr.rel (%p1722) target = $region304
        $region303: #{tpu_custom_call.1} parent=179 // pred_region
          %1726 = dma.done [#allocation49], 512
        $region304: #{tpu_custom_call.1} parent=179 // pred_fallthru
          _
        // Predicated region
        $region305: #{tpu_custom_call.1} parent=179 // pred_check
          %p1727 = pneg %p865
        $region306: #{tpu_custom_call.1} parent=179 // pred_check_branch
          %1729 = sbr.rel (%p1727) target = $region308
        $region307: #{tpu_custom_call.1} parent=179 // pred_region
          %1731 = dma.done [#allocation52], 512
        $region308: #{tpu_custom_call.1} parent=179 // pred_fallthru
          _
        // Predicated region
        $region309: #{tpu_custom_call.1} parent=179 // pred_check
          %p1732 = pneg %p886
        $region310: #{tpu_custom_call.1} parent=179 // pred_check_branch
          %1734 = sbr.rel (%p1732) target = $region312
        $region311: #{tpu_custom_call.1} parent=179 // pred_region
          %1736 = dma.done [#allocation52], 512
        $region312: #{tpu_custom_call.1} parent=179 // pred_fallthru
          _
        // Predicated region
        $region313: #{tpu_custom_call.1} parent=179 // pred_check
          %p1737 = pneg %p907
        $region314: #{tpu_custom_call.1} parent=179 // pred_check_branch
          %1739 = sbr.rel (%p1737) target = $region316
        $region315: #{tpu_custom_call.1} parent=179 // pred_region
          %1741 = dma.done [#allocation55], 16
        $region316: #{tpu_custom_call.1} parent=179 // pred_fallthru
          _
        // Predicated region
        $region317: #{tpu_custom_call.1} parent=179 // pred_check
          %p1742 = pneg %p949
        $region318: #{tpu_custom_call.1} parent=179 // pred_check_branch
          %1744 = sbr.rel (%p1742) target = $region320
        $region319: #{tpu_custom_call.1} parent=179 // pred_region
          %1746 = dma.done [#allocation55], 32
        $region320: #{tpu_custom_call.1} parent=179 // pred_fallthru
          _
        %s1747 = sand.u32 %s129, 1
        %s1748 = scalar_lea.sflag [#allocation4], %s1747
        %s1749 = sand.u32 %s129, 1
        %s1750 = smul.addr %s1749, 8
        %s1751 = scalar_lea.vmem [#allocation3], %s1750
        %p1752 = pneg %p142
        %p1753 = pneg %p139
        %s1754 = sand.u32 %s121, 1
        %s1755 = scalar_lea.sflag [#allocation7], %s1754
        %s1756 = sand.u32 %s155, 1
        %s1757 = smul.addr %s1756, 8
        %s1758 = scalar_lea.vmem [#allocation6], %s1757
        %p1759 = pneg %p168
        %p1760 = pneg %p165
        %s1761 = sand.u32 %s121, 1
        %s1762 = scalar_lea.sflag [#allocation7], %s1761
        %s1763 = sand.u32 %s181, 1
        %s1764 = smul.addr %s1763, 8
        %s1765 = scalar_lea.vmem [#allocation8], %s1764
        %p1766 = pneg %p194
        %p1767 = pneg %p191
        %p1768 = scmp.lt.s32.totalorder %s121, 1
        %s1769 = scalar_select %p1768, %s121, 1
        %s1770 = scalar_lea.vmem %s7, %s1769
        %p1771 = pneg %p220
        %p1772 = pneg %p217
        %s1773 = sand.u32 %s121, 1
        %s1774 = scalar_lea.sflag [#allocation10], %s1773
        %s1775 = sand.u32 %s233, 1
        %s1776 = smul.addr %s1775, 8
        %s1777 = scalar_lea.vmem [#allocation9], %s1776
        %p1778 = pneg %p246
        %p1779 = pneg %p243
        %p1780 = scmp.lt.s32.totalorder %s121, 1
        %s1781 = scalar_select %p1780, %s121, 1
        %s1782 = smul.addr %s1781, 8
        %s1783 = scalar_lea.vmem %s11, %s1782
        %p1784 = pneg %p272
        %p1785 = pneg %p269
        %s1786 = sand.u32 %s121, 1
        %s1787 = scalar_lea.sflag [#allocation10], %s1786
        %s1788 = sand.u32 %s285, 1
        %s1789 = scalar_lea.vmem [#allocation11], %s1788
        %p1790 = pneg %p298
        %p1791 = pneg %p295
        %p1792 = pneg %p319
        %p1793 = pneg %p316
        %p1794 = pneg %p340
        %p1795 = pneg %p337
        %p1796 = pneg %p361
        %p1797 = pneg %p358
        %p1798 = pneg %p382
        %p1799 = pneg %p379
        %p1800 = pneg %p403
        %p1801 = pneg %p400
        %p1802 = pneg %p424
        %p1803 = pneg %p421
        %p1804 = pneg %p445
        %p1805 = pneg %p442
        %p1806 = pneg %p466
        %p1807 = pneg %p463
        %p1808 = pneg %p487
        %p1809 = pneg %p484
        %p1810 = pneg %p508
        %p1811 = pneg %p505
        %p1812 = pneg %p529
        %p1813 = pneg %p526
        %p1814 = pneg %p550
        %p1815 = pneg %p547
        %p1816 = pneg %p571
        %p1817 = pneg %p568
        %p1818 = pneg %p592
        %p1819 = pneg %p589
        %p1820 = pneg %p613
        %p1821 = pneg %p610
        %p1822 = pneg %p634
        %p1823 = pneg %p631
        %p1824 = pneg %p655
        %p1825 = pneg %p652
        %p1826 = pneg %p676
        %p1827 = pneg %p673
        %p1828 = pneg %p697
        %p1829 = pneg %p694
        %p1830 = pneg %p718
        %p1831 = pneg %p715
        %p1832 = pneg %p739
        %p1833 = pneg %p736
        %p1834 = pneg %p760
        %p1835 = pneg %p757
        %p1836 = pneg %p781
        %p1837 = pneg %p778
        %p1838 = pneg %p802
        %p1839 = pneg %p799
        %p1840 = pneg %p823
        %p1841 = pneg %p820
        %p1842 = pneg %p844
        %p1843 = pneg %p841
        %p1844 = pneg %p865
        %p1845 = pneg %p862
        %p1846 = pneg %p886
        %p1847 = pneg %p883
        %p1848 = pneg %p907
        %p1849 = pneg %p904
        %p1850 = pneg %p928
        %p1851 = pneg %p925
        %p1852 = pneg %p949
        %p1853 = pneg %p946
        %p1854 = pneg %p970
        %p1855 = pneg %p967
        %p1856 = pneg %p991
        %p1857 = pneg %p988
        %p1858 = pneg %p1017
        %p1859 = pneg %p1014
        %s1860 = sand.u32 %s1004, 1
        %s1861 = scalar_lea.sflag [#allocation5], %s1860
        %s1862 = sand.u32 %s1004, 1
        %s1863 = scalar_lea.vmem [#allocation57], %s1862
        %p1864 = scmp.lt.s32.totalorder %s121, 1
        %s1865 = scalar_select %p1864, %s121, 1
        %s1866 = scalar_lea.vmem %s7, %s1865
        %p1867 = scmp.lt.s32.totalorder %s121, 1
        %s1868 = scalar_select %p1867, %s121, 1
        %s1869 = smul.addr %s1868, 8
        %s1870 = scalar_lea.vmem %s11, %s1869
        %v1872 = vld [vmem:[%s1552] sm:$0xff]
        %v1873 = vld [vmem:[%s1562] sm:$0xff]
        %v1874 = vld [vmem:[%s1572] sm:$0xff]
        %v1875 = vld [vmem:[%s1866] sm:$0x1]
        %v1876 = vld [vmem:[%s1582] sm:$0xff]
        %v1877 = vld [vmem:[%s1870] sm:$0x7f]
        %v1878 = vld [vmem:[%s1591] sm:$0x1]
        %vm1879 = vcmask 64512
        %v1880 = vsel %vm1879, %v1873, 0.0
        %1881 = vadd.xlane.f32.xlu0 %v1880
        %v1882 = vpop.xlane.xlu0 %1881
        %v1883 = vld [vmem:[#allocation24] sm:$0xff]
        %v1884 = vld [vmem:[#allocation24 + $0x8] sm:$0xff]
        %v1885 = vld [vmem:[#allocation24 + $0x10] sm:$0xff]
        %v1886 = vld [vmem:[#allocation24 + $0x18] sm:$0xff]
        %v1887 = vpack.c.bf16 %v1874, %v1874
        %v1888 = vpack.c.bf16 %v1884, %v1883
        %v1889 = vpack.c.bf16 %v1886, %v1885
        %vm1890 = vcmask 261120
        %v1892 = vsel %vm1890, %v1887, 0
        %1894 = vmatpush.bf16.msra.mxu0 0
        %1895 = vmatpush.bf16.msra.mxu0 0
        %1896 = vmatpush.bf16.msra.mxu0 0
        %1897 = vmatpush.bf16.msra.mxu0 0
        %1898 = vmatpush.bf16.msra.mxu0 0
        %1899 = vmatpush.bf16.msra.mxu0 0
        %1900 = vmatpush.bf16.msra.mxu0 %v1889
        %1901 = vmatpush.bf16.msra.mxu0 %v1888
        %1902 = vmatmul.bf16.gmra.mxu0 %v1892
        %v1903 = vpop.f32.mrf.mxu0
        %v1904 = vadd.f32 0.0, %v1903
        %v1905 = vpop.f32.mrf.mxu0
        %1906 = vdwg.mxu0
        %v1907 = vld [vmem:[#allocation12] sm:$0xff]
        %v1908 = vld [vmem:[#allocation12 + $0x8] sm:$0xff]
        %v1909 = vld [vmem:[#allocation12 + $0x10] sm:$0xff]
        %v1910 = vld [vmem:[#allocation12 + $0x18] sm:$0xff]
        %v1911 = vld [vmem:[#allocation14] sm:$0x1]
        %v1912 = vld [vmem:[#allocation15] sm:$0xff]
        %v1913 = vld [vmem:[#allocation15 + $0x8] sm:$0xff]
        %v1914 = vld [vmem:[#allocation15 + $0x10] sm:$0xff]
        %v1915 = vld [vmem:[#allocation15 + $0x18] sm:$0xff]
        %v1916 = vld [vmem:[#allocation17] sm:$0x1]
        %v1917 = vpack.c.bf16 %v1872, %v1872
        %v1918 = vpack.c.bf16 %v1908, %v1907
        %v1919 = vpack.c.bf16 %v1910, %v1909
        %v1921 = vsel %vm1890, %v1917, 0
        %1923 = vmatpush.bf16.msra.mxu0 0
        %1924 = vmatpush.bf16.msra.mxu0 0
        %1925 = vmatpush.bf16.msra.mxu0 0
        %1926 = vmatpush.bf16.msra.mxu0 0
        %1927 = vmatpush.bf16.msra.mxu0 0
        %1928 = vmatpush.bf16.msra.mxu0 0
        %1929 = vmatpush.bf16.msra.mxu0 %v1919
        %1930 = vmatpush.bf16.msra.mxu0 %v1918
        %1931 = vmatmul.bf16.gmra.mxu0 %v1921
        %v1932 = vpop.f32.mrf.mxu0
        %v1933 = vadd.f32 0.0, %v1932
        %v1934 = vpop.f32.mrf.mxu0
        %1935 = vdwg.mxu0
        %v1936 = vpack.c.bf16 %v1873, %v1873
        %v1937 = vpack.c.bf16 %v1933, %v1933
        %v1939 = vperm.slane %v1911, 0
        %1940 = vrot.lane.b32.xlu0 %v1939, 32
        %v1941 = vpop.permute.xlu0 %1940
        %v1943 = vadd.f32 %v1933, %v1941
        %v1944 = vmul.f32 %v1882, %v1943
        %1946 = vrot.lane.b32.xlu0 %v1944, 96
        %v1947 = vpop.permute.xlu0 %1946
        %v1950 = vsel %vm1879, %v1936, 0
        %vm1952 = vcmask 1043456
        %v1954 = vsel %vm1952, %v1937, 0
        %1956 = vmatpush.bf16.msra.mxu0 0
        %1957 = vmatpush.bf16.msra.mxu0 0
        %1958 = vmatpush.bf16.msra.mxu0 0
        %1959 = vmatpush.bf16.msra.mxu0 0
        %1960 = vmatpush.bf16.msra.mxu0 0
        %1961 = vmatpush.bf16.msra.mxu0 0
        %1962 = vmatpush.bf16.msra.mxu0 0
        %1963 = vmatpush.bf16.msra.mxu0 %v1954
        %1964 = vmatmul.bf16.gmra.mxu0 %v1950
        %v1965 = vpop.f32.mrf.mxu0
        %v1966 = vadd.f32 %v1947, %v1965
        %v1967 = vpop.f32.mrf.mxu0
        %1968 = vdwg.mxu0
        %v1969 = vadd.f32 %v1966, %v1904
        %v1970 = vpack.c.bf16 %v1969, %v1969
        %v1971 = vpack.c.bf16 %v1913, %v1912
        %v1972 = vpack.c.bf16 %v1915, %v1914
        %v1974 = vsel %vm1890, %v1970, 0
        %1976 = vmatpush.bf16.msra.mxu0 0
        %1977 = vmatpush.bf16.msra.mxu0 0
        %1978 = vmatpush.bf16.msra.mxu0 0
        %1979 = vmatpush.bf16.msra.mxu0 0
        %1980 = vmatpush.bf16.msra.mxu0 0
        %1981 = vmatpush.bf16.msra.mxu0 0
        %1982 = vmatpush.bf16.msra.mxu0 %v1972
        %1983 = vmatpush.bf16.msra.mxu0 %v1971
        %1984 = vmatmul.bf16.gmra.mxu0 %v1974
        %v1985 = vpop.f32.mrf.mxu0
        %v1986 = vadd.f32 0.0, %v1985
        %v1987 = vpop.f32.mrf.mxu0
        %1988 = vdwg.mxu0
        %1990 = vrot.lane.b32.xlu0 %v1986, 64
        %v1991 = vpop.permute.xlu0 %1990
        %v1993 = vadd.f32 %v1933, %v1991
        %v1995 = vperm.slane %v1916, 0
        %1996 = vrot.lane.b32.xlu0 %v1995, 64
        %v1997 = vpop.permute.xlu0 %1996
        %v1999 = vadd.f32 %v1993, %v1997
        %v2000 = vmax.f32 %v1999, 0.0
        %v2001 = vld [vmem:[#allocation18] sm:$0xff]
        %v2002 = vld [vmem:[#allocation18 + $0x8] sm:$0xff]
        %v2003 = vld [vmem:[#allocation18 + $0x10] sm:$0xff]
        %v2004 = vld [vmem:[#allocation18 + $0x18] sm:$0xff]
        %v2005 = vld [vmem:[#allocation20] sm:$0x1]
        %v2006 = vld [vmem:[#allocation21] sm:$0xff]
        %v2007 = vld [vmem:[#allocation21 + $0x8] sm:$0xff]
        %v2008 = vld [vmem:[#allocation21 + $0x10] sm:$0xff]
        %v2009 = vld [vmem:[#allocation21 + $0x18] sm:$0xff]
        %v2010 = vld [vmem:[#allocation23] sm:$0x1]
        %v2011 = vpack.c.bf16 %v2000, %v2000
        %v2012 = vpack.c.bf16 %v2002, %v2001
        %v2013 = vpack.c.bf16 %v2004, %v2003
        %2015 = vrot.lane.b32.xlu0 %v2011, 64
        %v2016 = vpop.permute.xlu0 %2015
        %v2018 = vsel %vm1890, %v2016, 0
        %2020 = vmatpush.bf16.msra.mxu0 0
        %2021 = vmatpush.bf16.msra.mxu0 0
        %2022 = vmatpush.bf16.msra.mxu0 0
        %2023 = vmatpush.bf16.msra.mxu0 0
        %2024 = vmatpush.bf16.msra.mxu0 0
        %2025 = vmatpush.bf16.msra.mxu0 0
        %2026 = vmatpush.bf16.msra.mxu0 %v2013
        %2027 = vmatpush.bf16.msra.mxu0 %v2012
        %2028 = vmatmul.bf16.gmra.mxu0 %v2018
        %v2029 = vpop.f32.mrf.mxu0
        %v2030 = vadd.f32 0.0, %v2029
        %v2031 = vpop.f32.mrf.mxu0
        %2032 = vdwg.mxu0
        %v2033 = vpack.c.bf16 %v2030, %v2030
        %v2035 = vperm.slane %v2005, 0
        %2036 = vrot.lane.b32.xlu0 %v2035, 32
        %v2037 = vpop.permute.xlu0 %2036
        %v2039 = vadd.f32 %v2030, %v2037
        %v2040 = vmul.f32 %v1882, %v2039
        %2042 = vrot.lane.b32.xlu0 %v2040, 96
        %v2043 = vpop.permute.xlu0 %2042
        %v2046 = vsel %vm1952, %v2033, 0
        %2048 = vmatpush.bf16.msra.mxu0 0
        %2049 = vmatpush.bf16.msra.mxu0 0
        %2050 = vmatpush.bf16.msra.mxu0 0
        %2051 = vmatpush.bf16.msra.mxu0 0
        %2052 = vmatpush.bf16.msra.mxu0 0
        %2053 = vmatpush.bf16.msra.mxu0 0
        %2054 = vmatpush.bf16.msra.mxu0 0
        %2055 = vmatpush.bf16.msra.mxu0 %v2046
        %2056 = vmatmul.bf16.gmra.mxu0 %v1950
        %v2057 = vpop.f32.mrf.mxu0
        %v2058 = vadd.f32 %v2043, %v2057
        %v2059 = vpop.f32.mrf.mxu0
        %2060 = vdwg.mxu0
        %2062 = vrot.lane.b32.xlu0 %v1904, 96
        %v2063 = vpop.permute.xlu0 %2062
        %v2065 = vadd.f32 %v2058, %v2063
        %v2066 = vpack.c.bf16 %v2065, %v2065
        %v2067 = vpack.c.bf16 %v2007, %v2006
        %v2068 = vpack.c.bf16 %v2009, %v2008
        %v2070 = vsel %vm1890, %v2066, 0
        %2072 = vmatpush.bf16.msra.mxu0 0
        %2073 = vmatpush.bf16.msra.mxu0 0
        %2074 = vmatpush.bf16.msra.mxu0 0
        %2075 = vmatpush.bf16.msra.mxu0 0
        %2076 = vmatpush.bf16.msra.mxu0 0
        %2077 = vmatpush.bf16.msra.mxu0 0
        %2078 = vmatpush.bf16.msra.mxu0 %v2068
        %2079 = vmatpush.bf16.msra.mxu0 %v2067
        %2080 = vmatmul.bf16.gmra.mxu0 %v2070
        %v2081 = vpop.f32.mrf.mxu0
        %v2082 = vadd.f32 0.0, %v2081
        %v2083 = vpop.f32.mrf.mxu0
        %2084 = vdwg.mxu0
        %2086 = vrot.lane.b32.xlu0 %v2082, 64
        %v2087 = vpop.permute.xlu0 %2086
        %v2089 = vadd.f32 %v2030, %v2087
        %v2091 = vperm.slane %v2010, 0
        %2092 = vrot.lane.b32.xlu0 %v2091, 64
        %v2093 = vpop.permute.xlu0 %2092
        %v2095 = vadd.f32 %v2089, %v2093
        %vm2096 = vcmask 785920
        %v2097 = vsel %vm2096, %v2095, 0.0
        %v2098 = vrot.slane %v2097, 4
        %v2099 = vadd.f32 %v2097, %v2098
        %v2100 = vrot.slane %v2099, 2
        %v2101 = vadd.f32 %v2099, %v2100
        %v2102 = vrot.slane %v2101, 1
        %v2103 = vadd.f32 %v2101, %v2102
        %v2104 = vld [vmem:[#allocation26] sm:$0xff]
        %v2105 = vld [vmem:[#allocation26 + $0x8] sm:$0xff]
        %v2106 = vld [vmem:[#allocation26 + $0x10] sm:$0xff]
        %v2107 = vld [vmem:[#allocation26 + $0x18] sm:$0xff]
        %v2108 = vpack.c.bf16 %v1875, %v1875
        %v2109 = vpack.c.bf16 %v2105, %v2104
        %v2110 = vpack.c.bf16 %v2107, %v2106
        %v2111 = vld [vmem:[#allocation27] sm:$0x1]
        %v2113 = vsel %vm1890, %v2108, 0
        %2115 = vmatpush.bf16.msra.mxu0 0
        %2116 = vmatpush.bf16.msra.mxu0 0
        %2117 = vmatpush.bf16.msra.mxu0 0
        %2118 = vmatpush.bf16.msra.mxu0 0
        %2119 = vmatpush.bf16.msra.mxu0 0
        %2120 = vmatpush.bf16.msra.mxu0 0
        %2121 = vmatpush.bf16.msra.mxu0 %v2110
        %2122 = vmatpush.bf16.msra.mxu0 %v2109
        %2123 = vmatmul.bf16.gmra.mxu0 %v2113
        %v2124 = vpop.f32.mrf.mxu0
        %v2125 = vadd.f32 %v2111, %v2124
        %v2126 = vpop.f32.mrf.mxu0
        %2127 = vdwg.mxu0
        %v2128 = vmax.f32 %v2125, 0.0
        %v2129 = vld [vmem:[#allocation29] sm:$0xff]
        %v2130 = vld [vmem:[#allocation29 + $0x8] sm:$0xff]
        %v2131 = vld [vmem:[#allocation29 + $0x10] sm:$0xff]
        %v2132 = vld [vmem:[#allocation29 + $0x18] sm:$0xff]
        %v2133 = vpack.c.bf16 %v2103, %v2103
        %v2134 = vpack.c.bf16 %v2130, %v2129
        %v2135 = vpack.c.bf16 %v2132, %v2131
        %v2136 = vld [vmem:[#allocation30] sm:$0xff]
        %v2137 = vld [vmem:[#allocation30 + $0x8] sm:$0xff]
        %v2138 = vld [vmem:[#allocation30 + $0x10] sm:$0xff]
        %v2139 = vld [vmem:[#allocation30 + $0x18] sm:$0xff]
        %v2140 = vpack.c.bf16 %v2128, %v2128
        %v2141 = vpack.c.bf16 %v2137, %v2136
        %v2142 = vpack.c.bf16 %v2139, %v2138
        %v2144 = vsel %vm1890, %v2140, 0
        %2146 = vmatpush.bf16.msra.mxu0 0
        %2147 = vmatpush.bf16.msra.mxu0 0
        %2148 = vmatpush.bf16.msra.mxu0 0
        %2149 = vmatpush.bf16.msra.mxu0 0
        %2150 = vmatpush.bf16.msra.mxu0 0
        %2151 = vmatpush.bf16.msra.mxu0 0
        %2152 = vmatpush.bf16.msra.mxu0 %v2142
        %2153 = vmatpush.bf16.msra.mxu0 %v2141
        %2154 = vmatmul.bf16.gmra.mxu0 %v2144
        %v2155 = vpop.f32.mrf.mxu0
        %v2156 = vadd.f32 0.0, %v2155
        %v2157 = vpop.f32.mrf.mxu0
        %2158 = vdwg.mxu0
        %2160 = vrot.lane.b32.xlu0 %v2133, 64
        %v2161 = vpop.permute.xlu0 %2160
        %v2163 = vsel %vm1890, %v2161, 0
        %2165 = vmatpush.bf16.msra.mxu0 0
        %2166 = vmatpush.bf16.msra.mxu0 0
        %2167 = vmatpush.bf16.msra.mxu0 0
        %2168 = vmatpush.bf16.msra.mxu0 0
        %2169 = vmatpush.bf16.msra.mxu0 0
        %2170 = vmatpush.bf16.msra.mxu0 0
        %2171 = vmatpush.bf16.msra.mxu0 %v2135
        %2172 = vmatpush.bf16.msra.mxu0 %v2134
        %2173 = vmatmul.bf16.gmra.mxu0 %v2163
        %v2174 = vpop.f32.mrf.mxu0
        %v2175 = vadd.f32 %v2156, %v2174
        %v2176 = vpop.f32.mrf.mxu0
        %2177 = vdwg.mxu0
        %v2178 = vld [vmem:[#allocation32] sm:$0x1]
        %v2179 = vadd.f32 %v2175, %v2178
        %v2180 = vmax.f32 %v2179, 0.0
        %v2181 = vld [vmem:[#allocation33] sm:$0xff]
        %v2182 = vld [vmem:[#allocation33 + $0x8] sm:$0xff]
        %v2183 = vld [vmem:[#allocation33 + $0x10] sm:$0xff]
        %v2184 = vld [vmem:[#allocation33 + $0x18] sm:$0xff]
        %v2185 = vpack.c.bf16 %v1876, %v1876
        %v2186 = vpack.c.bf16 %v2182, %v2181
        %v2187 = vpack.c.bf16 %v2184, %v2183
        %v2188 = vld [vmem:[#allocation35] sm:$0x1]
        %v2190 = vperm.slane %v2188, 0
        %v2193 = vsel %vm1890, %v2185, 0
        %2195 = vmatpush.bf16.msra.mxu0 0
        %2196 = vmatpush.bf16.msra.mxu0 0
        %2197 = vmatpush.bf16.msra.mxu0 0
        %2198 = vmatpush.bf16.msra.mxu0 0
        %2199 = vmatpush.bf16.msra.mxu0 0
        %2200 = vmatpush.bf16.msra.mxu0 0
        %2201 = vmatpush.bf16.msra.mxu0 %v2187
        %2202 = vmatpush.bf16.msra.mxu0 %v2186
        %2203 = vmatmul.bf16.gmra.mxu0 %v2193
        %v2204 = vpop.f32.mrf.mxu0
        %v2205 = vadd.f32 %v2190, %v2204
        %v2206 = vpop.f32.mrf.mxu0
        %2207 = vdwg.mxu0
        %v2208 = vmax.f32 %v2205, 0.0
        %v2209 = vsel %vm1890, %v2208, 0.0
        %v2210 = vrot.slane %v2209, 4
        %v2211 = vadd.f32 %v2209, %v2210
        %v2212 = vrot.slane %v2211, 2
        %v2213 = vadd.f32 %v2211, %v2212
        %v2214 = vrot.slane %v2213, 1
        %v2215 = vadd.f32 %v2213, %v2214
        %v2216 = vmax.f32 %v1877, 0.0
        %vm2217 = vcmask 260096
        %v2218 = vsel %vm2217, %v2216, 0.0
        %v2219 = vrot.slane %v2218, 4
        %v2220 = vadd.f32 %v2218, %v2219
        %v2221 = vrot.slane %v2220, 2
        %v2222 = vadd.f32 %v2220, %v2221
        %v2223 = vrot.slane %v2222, 1
        %v2224 = vadd.f32 %v2222, %v2223
        %v2225 = vld [vmem:[#allocation36] sm:$0xff]
        %v2226 = vld [vmem:[#allocation36 + $0x8] sm:$0xff]
        %v2227 = vld [vmem:[#allocation36 + $0x10] sm:$0xff]
        %v2228 = vld [vmem:[#allocation36 + $0x18] sm:$0xff]
        %v2229 = vpack.c.bf16 %v2215, %v2215
        %v2230 = vpack.c.bf16 %v2226, %v2225
        %v2231 = vpack.c.bf16 %v2228, %v2227
        %v2232 = vld [vmem:[#allocation38] sm:$0xff]
        %v2233 = vld [vmem:[#allocation38 + $0x8] sm:$0xff]
        %v2234 = vld [vmem:[#allocation38 + $0x10] sm:$0xff]
        %v2235 = vld [vmem:[#allocation38 + $0x18] sm:$0xff]
        %v2236 = vpack.c.bf16 %v2224, %v2224
        %v2237 = vpack.c.bf16 %v2233, %v2232
        %v2238 = vpack.c.bf16 %v2235, %v2234
        %v2240 = vsel %vm1890, %v2236, 0
        %2242 = vmatpush.bf16.msra.mxu0 0
        %2243 = vmatpush.bf16.msra.mxu0 0
        %2244 = vmatpush.bf16.msra.mxu0 0
        %2245 = vmatpush.bf16.msra.mxu0 0
        %2246 = vmatpush.bf16.msra.mxu0 0
        %2247 = vmatpush.bf16.msra.mxu0 0
        %2248 = vmatpush.bf16.msra.mxu0 %v2238
        %2249 = vmatpush.bf16.msra.mxu0 %v2237
        %2250 = vmatmul.bf16.gmra.mxu0 %v2240
        %v2251 = vpop.f32.mrf.mxu0
        %v2252 = vadd.f32 0.0, %v2251
        %v2253 = vpop.f32.mrf.mxu0
        %2254 = vdwg.mxu0
        %v2256 = vsel %vm1890, %v2229, 0
        %2258 = vmatpush.bf16.msra.mxu0 0
        %2259 = vmatpush.bf16.msra.mxu0 0
        %2260 = vmatpush.bf16.msra.mxu0 0
        %2261 = vmatpush.bf16.msra.mxu0 0
        %2262 = vmatpush.bf16.msra.mxu0 0
        %2263 = vmatpush.bf16.msra.mxu0 0
        %2264 = vmatpush.bf16.msra.mxu0 %v2231
        %2265 = vmatpush.bf16.msra.mxu0 %v2230
        %2266 = vmatmul.bf16.gmra.mxu0 %v2256
        %v2267 = vpop.f32.mrf.mxu0
        %v2268 = vadd.f32 %v2252, %v2267
        %v2269 = vpop.f32.mrf.mxu0
        %2270 = vdwg.mxu0
        %v2271 = vld [vmem:[#allocation39] sm:$0x1]
        %v2272 = vadd.f32 %v2268, %v2271
        %v2273 = vmax.f32 %v2272, 0.0
        %v2274 = vld [vmem:[#allocation44] sm:$0x1]
        %v2275 = vsub.f32 %v1878, %v2274
        %v2276 = vld [vmem:[#allocation45] sm:$0x1]
        %v2277 = vadd.f32 %v2276, 1e-05
        %v2278 = vrsqrt.pop %v2277
        %v2279 = vmul.f32 %v2278, %v2277
        %v2280 = vmul.f32 %v2279, %v2278
        %v2281 = vmul.f32 0.5, %v2280
        %v2282 = vsub.f32 1.5, %v2281
        %v2283 = vmul.f32 %v2278, %v2282
        %vm2284 = vweird.f32 %v2277
        %vm2285 = vweird.f32 %v2278
        %vm2286 = vmor %vm2284, %vm2285
        %v2287 = vsel %vm2286, %v2278, %v2283
        %v2288 = vmul.f32 %v2275, %v2287
        %v2289 = vld [vmem:[#allocation41] sm:$0x1]
        %v2290 = vmul.f32 %v2288, %v2289
        %v2291 = vld [vmem:[#allocation42] sm:$0x1]
        %v2292 = vadd.f32 %v2290, %v2291
        %v2293 = vld [vmem:[#allocation47] sm:$0x3f]
        %v2294 = vpack.c.bf16 %v2292, %v2292
        %v2295 = vpack.c.bf16 %v2293, %v2293
        %v2296 = vld [vmem:[#allocation48] sm:$0x1]
        %vm2297 = vcmask 48128
        %v2299 = vsel %vm2297, %v2294, 0
        %vm2301 = vcmask 1042432
        %v2303 = vsel %vm2301, %v2295, 0
        %2305 = vmatpush.bf16.msra.mxu0 0
        %2306 = vmatpush.bf16.msra.mxu0 0
        %2307 = vmatpush.bf16.msra.mxu0 0
        %2308 = vmatpush.bf16.msra.mxu0 0
        %2309 = vmatpush.bf16.msra.mxu0 0
        %2310 = vmatpush.bf16.msra.mxu0 0
        %2311 = vmatpush.bf16.msra.mxu0 0
        %2312 = vmatpush.bf16.msra.mxu0 %v2303
        %2313 = vmatmul.bf16.gmra.mxu0 %v2299
        %v2314 = vpop.f32.mrf.mxu0
        %v2315 = vadd.f32 %v2296, %v2314
        %v2316 = vpop.f32.mrf.mxu0
        %2317 = vdwg.mxu0
        %v2318 = vmax.f32 %v2315, 0.0
        %v2319 = vld [vmem:[#allocation50] sm:$0xff]
        %v2320 = vld [vmem:[#allocation50 + $0x8] sm:$0xff]
        %v2321 = vld [vmem:[#allocation50 + $0x10] sm:$0xff]
        %v2322 = vld [vmem:[#allocation50 + $0x18] sm:$0xff]
        %v2323 = vpack.c.bf16 %v2180, %v2180
        %v2324 = vpack.c.bf16 %v2320, %v2319
        %v2325 = vpack.c.bf16 %v2322, %v2321
        %v2326 = vld [vmem:[#allocation51] sm:$0xff]
        %v2327 = vld [vmem:[#allocation51 + $0x8] sm:$0xff]
        %v2328 = vld [vmem:[#allocation51 + $0x10] sm:$0xff]
        %v2329 = vld [vmem:[#allocation51 + $0x18] sm:$0xff]
        %v2330 = vpack.c.bf16 %v2273, %v2273
        %v2331 = vpack.c.bf16 %v2327, %v2326
        %v2332 = vpack.c.bf16 %v2329, %v2328
        %v2334 = vsel %vm1890, %v2330, 0
        %2336 = vmatpush.bf16.msra.mxu0 0
        %2337 = vmatpush.bf16.msra.mxu0 0
        %2338 = vmatpush.bf16.msra.mxu0 0
        %2339 = vmatpush.bf16.msra.mxu0 0
        %2340 = vmatpush.bf16.msra.mxu0 0
        %2341 = vmatpush.bf16.msra.mxu0 0
        %2342 = vmatpush.bf16.msra.mxu0 %v2332
        %2343 = vmatpush.bf16.msra.mxu0 %v2331
        %2344 = vmatmul.bf16.gmra.mxu0 %v2334
        %v2345 = vpop.f32.mrf.mxu0
        %v2346 = vadd.f32 0.0, %v2345
        %v2347 = vpop.f32.mrf.mxu0
        %2348 = vdwg.mxu0
        %v2350 = vsel %vm1890, %v2323, 0
        %2352 = vmatpush.bf16.msra.mxu0 0
        %2353 = vmatpush.bf16.msra.mxu0 0
        %2354 = vmatpush.bf16.msra.mxu0 0
        %2355 = vmatpush.bf16.msra.mxu0 0
        %2356 = vmatpush.bf16.msra.mxu0 0
        %2357 = vmatpush.bf16.msra.mxu0 0
        %2358 = vmatpush.bf16.msra.mxu0 %v2325
        %2359 = vmatpush.bf16.msra.mxu0 %v2324
        %2360 = vmatmul.bf16.gmra.mxu0 %v2350
        %v2361 = vpop.f32.mrf.mxu0
        %v2362 = vadd.f32 %v2346, %v2361
        %v2363 = vpop.f32.mrf.mxu0
        %2364 = vdwg.mxu0
        %v2365 = vld [vmem:[#allocation53] sm:$0xff]
        %v2366 = vld [vmem:[#allocation53 + $0x8] sm:$0xff]
        %v2367 = vld [vmem:[#allocation53 + $0x10] sm:$0xff]
        %v2368 = vld [vmem:[#allocation53 + $0x18] sm:$0xff]
        %v2369 = vpack.c.bf16 %v2318, %v2318
        %v2370 = vpack.c.bf16 %v2366, %v2365
        %v2371 = vpack.c.bf16 %v2368, %v2367
        %v2373 = vsel %vm1890, %v2369, 0
        %2375 = vmatpush.bf16.msra.mxu0 0
        %2376 = vmatpush.bf16.msra.mxu0 0
        %2377 = vmatpush.bf16.msra.mxu0 0
        %2378 = vmatpush.bf16.msra.mxu0 0
        %2379 = vmatpush.bf16.msra.mxu0 0
        %2380 = vmatpush.bf16.msra.mxu0 0
        %2381 = vmatpush.bf16.msra.mxu0 %v2371
        %2382 = vmatpush.bf16.msra.mxu0 %v2370
        %2383 = vmatmul.bf16.gmra.mxu0 %v2373
        %v2384 = vpop.f32.mrf.mxu0
        %v2385 = vadd.f32 0.0, %v2384
        %v2386 = vpop.f32.mrf.mxu0
        %2387 = vdwg.mxu0
        %v2388 = vadd.f32 %v2362, %v2385
        %v2389 = vld [vmem:[#allocation54] sm:$0x1]
        %v2390 = vadd.f32 %v2388, %v2389
        %v2391 = vmax.f32 %v2390, 0.0
        %v2392 = vld [vmem:[%s73] sm:$0xff]
        %v2393 = vld [vmem:[%s73 + $0x8] sm:$0xff]
        %v2394 = vld [vmem:[%s73 + $0x10] sm:$0xff]
        %v2395 = vld [vmem:[%s73 + $0x18] sm:$0xff]
        %v2396 = vpack.c.bf16 %v2391, %v2391
        %v2397 = vpack.c.bf16 %v2393, %v2392
        %v2398 = vpack.c.bf16 %v2395, %v2394
        %v2399 = vld [vmem:[#allocation56] sm:$0x1]
        %v2401 = vsel %vm1890, %v2396, 0
        %2403 = vmatpush.bf16.msra.mxu0 0
        %2404 = vmatpush.bf16.msra.mxu0 0
        %2405 = vmatpush.bf16.msra.mxu0 0
        %2406 = vmatpush.bf16.msra.mxu0 0
        %2407 = vmatpush.bf16.msra.mxu0 0
        %2408 = vmatpush.bf16.msra.mxu0 0
        %2409 = vmatpush.bf16.msra.mxu0 %v2398
        %2410 = vmatpush.bf16.msra.mxu0 %v2397
        %2411 = vmatmul.bf16.gmra.mxu0 %v2401
        %v2412 = vpop.f32.mrf.mxu0
        %v2413 = vadd.f32 %v2399, %v2412
        %v2414 = vpop.f32.mrf.mxu0
        %2415 = vdwg.mxu0
        %v2416 = vmax.f32 %v2413, 0.0
        %s2417 = scalar_lea.vmem %s73, 32
        %v2418 = vld [vmem:[%s2417] sm:$0xff]
        %v2419 = vld [vmem:[%s2417 + $0x8] sm:$0xff]
        %v2420 = vld [vmem:[%s2417 + $0x10] sm:$0xff]
        %v2421 = vld [vmem:[%s2417 + $0x18] sm:$0xff]
        %v2422 = vpack.c.bf16 %v2416, %v2416
        %v2423 = vpack.c.bf16 %v2419, %v2418
        %v2424 = vpack.c.bf16 %v2421, %v2420
        %s2425 = scalar_lea.vmem [#allocation56], 1
        %v2426 = vld [vmem:[%s2425] sm:$0x1]
        %v2428 = vsel %vm1890, %v2422, 0
        %2430 = vmatpush.bf16.msra.mxu0 0
        %2431 = vmatpush.bf16.msra.mxu0 0
        %2432 = vmatpush.bf16.msra.mxu0 0
        %2433 = vmatpush.bf16.msra.mxu0 0
        %2434 = vmatpush.bf16.msra.mxu0 0
        %2435 = vmatpush.bf16.msra.mxu0 0
        %2436 = vmatpush.bf16.msra.mxu0 %v2424
        %2437 = vmatpush.bf16.msra.mxu0 %v2423
        %2438 = vmatmul.bf16.gmra.mxu0 %v2428
        %v2439 = vpop.f32.mrf.mxu0
        %v2440 = vadd.f32 %v2426, %v2439
        %v2441 = vpop.f32.mrf.mxu0
        %2442 = vdwg.mxu0
        %v2443 = vmax.f32 %v2440, 0.0
        %v2444 = vld [vmem:[%s77] sm:$0x1]
        %v2445 = vmul.f32 %v2443, %v2444
        %vm2446 = vcmask 253952
        %v2447 = vsel %vm2446, %v2445, 0.0
        %2448 = vadd.xlane.f32.xlu0 %v2447
        %v2449 = vpop.xlane.xlu0 %2448
        %v2450 = vld [vmem:[#allocation2] sm:$0x1]
        %v2451 = vadd.f32 %v2449, %v2450
        %2453 = vset.pattern.permute.xlu0 0
        %2454 = vperm.xlu0 %2453, %v2451
        %v2455 = vpop.permute.xlu0 %2454
        %2457 = vst [vmem:[%s1863] sm:$0x1] %v2455
        %s2458 = sand.u32 %s1004, 1
        %s2459 = scalar_lea.sflag [#allocation5], %s2458
        %s2460 = sand.u32 %s1004, 1
        %s2461 = scalar_lea.vmem [#allocation57], %s2460
        // Predicated region
        $region321: #{tpu_custom_call.1} parent=179 // pred_check
          %p2462 = pneg %p1014
        $region322: #{tpu_custom_call.1} parent=179 // pred_check_branch
          %2464 = sbr.rel (%p2462) target = $region324
        $region323: #{tpu_custom_call.1} parent=179 // pred_region
          %2466 = vsyncadd %s2459, 0
          %s2467 = scalar_lea.hbm %s81, %s121
          %s2469 = sshll.u32 %s2461, 4
          %s2470 = int_to_ptr.vmem [resolvable:$true] %s2469
          %s2471 = sshll.u32 %s2467, 4
          %s2472 = int_to_ptr.hbm [resolvable:$true] %s2471
          %2474 = dma.vmem_to_hbm [thread:$0]  %s2470, 16, %s2472, %s2459
        $region324: #{tpu_custom_call.1} parent=179 // pred_fallthru
          _
      $region180: #{tpu_custom_call.1} parent=5 // pred_fallthru
        _
      %p2475 = scmp.le.s32.totalorder 2, %s116
      // Predicated region
      $region325: #{tpu_custom_call.1} parent=5 // pred_check
        %p2476 = pneg %p2475
      $region326: #{tpu_custom_call.1} parent=5 // pred_check_branch
        %2478 = sbr.rel (%p2476) target = $region328
      $region327: #{tpu_custom_call.1} parent=5 // pred_region
        %s2479 = ssub.s32 %s116, 2
        // Predicated region
        $region329: #{tpu_custom_call.1} parent=327 // pred_check
          %p2480 = pneg %p1020
        $region330: #{tpu_custom_call.1} parent=327 // pred_check_branch
          %2482 = sbr.rel (%p2480) target = $region332
        $region331: #{tpu_custom_call.1} parent=327 // pred_region
          %s2483 = sand.u32 %s1005, 1
          %s2484 = scalar_lea.sflag [#allocation5], %s2483
          %s2485 = sand.u32 %s1005, 1
          %s2486 = scalar_lea.vmem [#allocation57], %s2485
          %2488 = dma.done %s2484, 16
        $region332: #{tpu_custom_call.1} parent=327 // pred_fallthru
          _
      $region328: #{tpu_custom_call.1} parent=5 // pred_fallthru
        _
    $region6: #{tpu_custom_call.1} parent=1 // loop_footer
      %s120 = sadd.s32 1, %s116
    $region7: #{tpu_custom_call.1} parent=1 // loop_footer_branch
      %115 = sbr.rel target = $region3
    $region8: #{tpu_custom_call.1} parent=1 // loop_exit
      _
    %2489 = vsyncpa [#allocation4], 1
    %s2490 = scalar_lea.sflag [#allocation4], 1
    %2491 = vsyncpa %s2490, 1
    %2492 = vsyncpa [#allocation7], 1
    %s2493 = scalar_lea.sflag [#allocation7], 1
    %2494 = vsyncpa %s2493, 1
    %2495 = vsyncpa [#allocation10], 1
    %s2496 = scalar_lea.sflag [#allocation10], 1
    %2497 = vsyncpa %s2496, 1
    %2498 = vsyncpa [#allocation13], 1
    %2499 = vsyncpa [#allocation16], 1
    %2500 = vsyncpa [#allocation19], 1
    %2501 = vsyncpa [#allocation22], 1
    %2502 = vsyncpa [#allocation25], 1
    %2503 = vsyncpa [#allocation28], 1
    %2504 = vsyncpa [#allocation31], 1
    %2505 = vsyncpa [#allocation34], 1
    %2506 = vsyncpa [#allocation37], 1
    %2507 = vsyncpa [#allocation40], 1
    %2508 = vsyncpa [#allocation43], 1
    %2509 = vsyncpa [#allocation46], 1
    %2510 = vsyncpa [#allocation49], 1
    %2511 = vsyncpa [#allocation52], 1
    %2512 = vsyncpa [#allocation55], 1
    %2513 = vsyncpa [#allocation5], 1
    %s2514 = scalar_lea.sflag [#allocation5], 1
    %2515 = vsyncpa %s2514, 1

</llo_original>
